<compile_context>
chip_gen: v6e
topology: v6e:2x2x1
jax: 0.10.0
libtpu: 0.0.40
codegen_flags: <defaults>
</compile_context>

<pallas_src>
import functools

import jax
import jax.numpy as jnp
from jax.experimental import pallas as pl
from jax.experimental.pallas import tpu as pltpu


def _round_up(x, m):
    return (x + m - 1) // m * m


def attention_kernel(x_ref, wqkvT_ref, bqkvT_ref, wp_ref, bp_ref, out_ref,
                     qkvT_scr, o_scr, *, num_heads, n_tokens):
    _, n_pad, C = x_ref.shape
    Dh = C // num_heads

    # ---- fused QKV projection: one (3C, C) @ (N, C)^T MXU matmul per image.
    # The softmax scale is already folded into the q rows of weight + bias.
    x_bf = x_ref[0].astype(jnp.bfloat16)                                # (N, C)
    qkvT = jax.lax.dot_general(
        wqkvT_ref[...], x_bf,
        dimension_numbers=(((1,), (1,)), ((), ())),                     # (3C, N)
        preferred_element_type=jnp.float32)
    qkvT_scr[...] = qkvT + bqkvT_ref[...]                               # bias in f32, once

    # Additive key mask for padded tokens (hoisted out of the head loop).
    if n_pad != n_tokens:
        key_ids = jax.lax.broadcasted_iota(jnp.int32, (n_pad, 1), 0)
        key_bias = jnp.where(key_ids < n_tokens, 0.0, -1e30).astype(jnp.float32)
    else:
        key_bias = None

    def process_head(h):
        r0 = pl.multiple_of(h * Dh, Dh)
        qT = qkvT_scr[pl.ds(r0, Dh), :].astype(jnp.bfloat16)            # (Dh, N)
        kT = qkvT_scr[pl.ds(C + r0, Dh), :].astype(jnp.bfloat16)        # (Dh, N)
        vT = qkvT_scr[pl.ds(2 * C + r0, Dh), :].astype(jnp.bfloat16)    # (Dh, N)

        # Key-major scores sT[k, q]: trans-LHS dot_general (no materialized q
        # transpose); f32 accumulation on the MXU.
        sT = jax.lax.dot_general(
            kT, qT, dimension_numbers=(((0,), (0,)), ((), ())),
            preferred_element_type=jnp.float32)                         # (Nk, Nq)
        if key_bias is not None:
            sT = sT + key_bias                                          # mask padded keys

        # softmax stats over keys (axis 0 == sublane axis -> cheap reduce)
        m = jnp.max(sT, axis=0, keepdims=True)                          # (1, Nq)
        p = jnp.exp(sT - m)                                             # f32
        l = jnp.sum(p, axis=0, keepdims=True)                           # (1, Nq)

        # Un-normalized PV (canonical MXU matmul), then deferred normalization
        # (Dh*N multiplies instead of N^2, off the exp->PV critical path).
        oT = jax.lax.dot_general(
            vT, p.astype(jnp.bfloat16),
            dimension_numbers=(((1,), (0,)), ((), ())),
            preferred_element_type=jnp.float32)                         # (Dh, Nq)
        o_scr[pl.ds(r0, Dh), :] = oT * pl.reciprocal(l, approx=True)

    # Heads issued back-to-back inside one grid step; groups of 2 let one head's
    # exp (EUP) overlap the next head's matmuls (MXU) without blowing up the
    # live set (one extra (N, N) score tile).
    group = 2 if num_heads % 2 == 0 else 1

    def group_body(g, carry):
        for j in range(group):                                          # tiny static unroll
            process_head(g * group + j)
        return carry

    jax.lax.fori_loop(0, num_heads // group, group_body, 0)

    # ---- output projection: (N, C) = o_scr^T @ Wp via trans-LHS dot_general
    # (no materialized (C, N) transpose), single full-size matmul per image.
    out = jax.lax.dot_general(
        o_scr[...].astype(jnp.bfloat16), wp_ref[...],
        dimension_numbers=(((0,), (0,)), ((), ())),
        preferred_element_type=jnp.float32) + bp_ref[...]
    out_ref[0] = out.astype(out_ref.dtype)


def prepare_attention_params(params, num_heads):
    """One-time parameter packing, hoisted out of the per-call path:
    fused (3C, C) QKV weight in bf16 with 1/sqrt(Dh) folded into the q rows."""
    C = params["wq"].shape[0]
    Dh = C // num_heads
    scale = Dh ** (-0.5)
    wqkvT = jnp.concatenate(
        [(params["wq"] * scale).T, params["wk"].T, params["wv"].T], axis=0)   # (3C, C)
    bqkvT = jnp.concatenate(
        [params["bq"] * scale, params["bk"], params["bv"]], axis=1).T         # (3C, 1)
    return {
        "wqkvT": wqkvT.astype(jnp.bfloat16),      # resident weights in bf16
        "bqkvT": bqkvT.astype(jnp.float32),       # biases stay f32
        "wp": params["wp"].astype(jnp.bfloat16),  # (C, C)
        "bp": params["bp"].astype(jnp.float32),   # (1, C)
    }


def attention(x, packed, num_heads):
    """q/k/v linears (bias=True) + scaled-dot-product softmax attention + proj."""
    B, N, C = x.shape
    assert C % num_heads == 0
    Dh = C // num_heads
    assert Dh % 8 == 0, "head_dim must be a multiple of 8 (sublane) for this kernel"

    # Pad tokens to a lane-dense multiple of 128 (unmasked stores, clean MXU
    # tiles); padded keys are masked in-kernel, padded queries sliced off below.
    n_pad = _round_up(N, 128)
    x_p = jnp.pad(x, ((0, 0), (0, n_pad - N), (0, 0))) if n_pad != N else x

    # Scoped-VMEM budget from the real footprint (worst-case double buffering),
    # clamped to 48 MiB so it stays inside v7x's 64 MiB physical VMEM.
    vmem_needed = (
        4 * n_pad * C * x.dtype.itemsize          # x-in + out blocks, double-buffered
        + 2 * 4 * C * C * 2 + 2 * 4 * C * 4       # bf16 weights + f32 biases
        + 4 * C * n_pad * 4                       # qkv + per-head-output f32 scratch
        + 4 * n_pad * n_pad * 4                   # live score/prob tiles (2 heads in flight)
        + 3 * C * n_pad * 4                       # f32 QKV result before scratch store
        + (8 << 20))                              # relayout / spill headroom
    vmem_limit = int(min(max(vmem_needed, 32 << 20), 48 << 20))

    kernel = functools.partial(attention_kernel, num_heads=num_heads, n_tokens=N)

    def build(single_buffer_weights):
        if single_buffer_weights:
            def wspec(shape):
                # constant index map -> no double buffering needed for weights
                return pl.BlockSpec(shape, lambda b: (0,) * len(shape),
                                    pipeline_mode=pl.Buffered(1))
        else:
            def wspec(shape):
                return pl.BlockSpec(shape, lambda b: (0,) * len(shape))
        return pl.pallas_call(
            kernel,
            out_shape=jax.ShapeDtypeStruct((B, n_pad, C), x.dtype),
            grid=(B,),
            in_specs=[
                pl.BlockSpec((1, n_pad, C), lambda b: (b, 0, 0)),   # x
                wspec((3 * C, C)),                                  # fused qkv weight
                wspec((3 * C, 1)),                                  # fused qkv bias
                wspec((C, C)),                                      # proj weight
                wspec((1, C)),                                      # proj bias
            ],
            out_specs=pl.BlockSpec((1, n_pad, C), lambda b: (b, 0, 0)),
            scratch_shapes=[
                pltpu.VMEM((3 * C, n_pad), jnp.float32),   # q/k/v, (features, tokens)
                pltpu.VMEM((C, n_pad), jnp.float32),       # per-head outputs (pre-proj)
            ],
            compiler_params=pltpu.CompilerParams(
                dimension_semantics=("parallel",),
                vmem_limit_bytes=vmem_limit,
            ),
        )

    args = (x_p, packed["wqkvT"], packed["bqkvT"], packed["wp"], packed["bp"])
    # Prefer single-buffered resident weights (halves weight VMEM, matters on
    # v7x); silently fall back to default double buffering if rejected.
    try:
        out = jax.block_until_ready(build(True)(*args))
    except Exception:
        out = build(False)(*args)

    return out[:, :N, :] if n_pad != N else out


def ref_attention(x, p, num_heads):
    """Pure-JAX reference mirroring the PyTorch Attention.forward (f32)."""
    B, N, C = x.shape
    Dh = C // num_heads
    scale = Dh ** (-0.5)

    def split_heads(t):
        return t.reshape(B, N, num_heads, Dh).transpose(0, 2, 1, 3)

    q = split_heads(x @ p["wq"] + p["bq"])
    k = split_heads(x @ p["wk"] + p["bk"])
    v = split_heads(x @ p["wv"] + p["bv"])
    s = (q @ jnp.swapaxes(k, -2, -1)) * scale
    a = jax.nn.softmax(s, axis=-1)
    o = (a @ v).transpose(0, 2, 1, 3).reshape(B, N, C)
    return o @ p["wp"] + p["bp"]


if __name__ == "__main__":
    B, N, C = 2, 8, 64
    num_heads = 4                      # head_dim = 16

    key = jax.random.PRNGKey(0)
    ks = jax.random.split(key, 9)

    def w(k, shape, s=0.1):
        return jax.random.normal(k, shape, jnp.float32) * s

    params = {
        "wq": w(ks[0], (C, C)), "bq": w(ks[1], (1, C)),
        "wk": w(ks[2], (C, C)), "bk": w(ks[3], (1, C)),
        "wv": w(ks[4], (C, C)), "bv": w(ks[5], (1, C)),
        "wp": w(ks[6], (C, C)), "bp": w(ks[7], (1, C)),
    }
    x = jax.random.normal(ks[8], (B, N, C), jnp.float32)

    packed = prepare_attention_params(params, num_heads)

    out = jax.block_until_ready(attention(x, packed, num_heads))
    ref = jax.block_until_ready(ref_attention(x, params, num_heads))

    assert out.shape == (B, N, C)
    err = float(jnp.max(jnp.abs(out - ref)))
    assert jnp.allclose(out, ref, atol=3e-2, rtol=3e-2), f"max abs err = {err}"
    print("KERNEL_OK")
</pallas_src>

<mosaic_0001>
module attributes {stable_mosaic.version = 11 : i64} {
  func.func @attention_kernel(%arg0: i32, %arg1: memref<1x128x64xf32, #tpu.memory_space<vmem>>, %arg2: memref<192x64xbf16, #tpu.memory_space<vmem>>, %arg3: memref<192x1xf32, #tpu.memory_space<vmem>>, %arg4: memref<64x64xbf16, #tpu.memory_space<vmem>>, %arg5: memref<1x64xf32, #tpu.memory_space<vmem>>, %arg6: memref<1x128x64xf32, #tpu.memory_space<vmem>>, %arg7: memref<192x128xf32, #tpu.memory_space<vmem>>, %arg8: memref<64x128xf32, #tpu.memory_space<vmem>>) attributes {dimension_semantics = [#tpu.dimension_semantics<parallel>], iteration_bounds = array<i64: 2>, scalar_prefetch = 0 : i64, scratch_operands = 2 : i64, tpu.core_type = #tpu.core_type<tc>, window_params = [{transform_indices = @transform_0, window_bounds = array<i64: 1, 128, 64>}, {pipeline_mode = #tpu.pipeline_mode<synchronous>, transform_indices = @transform_1, window_bounds = array<i64: 192, 64>}, {pipeline_mode = #tpu.pipeline_mode<synchronous>, transform_indices = @transform_2, window_bounds = array<i64: 192, 1>}, {pipeline_mode = #tpu.pipeline_mode<synchronous>, transform_indices = @transform_3, window_bounds = array<i64: 64, 64>}, {pipeline_mode = #tpu.pipeline_mode<synchronous>, transform_indices = @transform_4, window_bounds = array<i64: 1, 64>}, {transform_indices = @transform_5, window_bounds = array<i64: 1, 128, 64>}]} {
    %c0 = arith.constant 0 : index
    %c0_0 = arith.constant 0 : index
    %c0_1 = arith.constant 0 : index
    %0 = vector.load %arg1[%c0, %c0_0, %c0_1] : memref<1x128x64xf32, #tpu.memory_space<vmem>>, vector<1x128x64xf32>
    %1 = vector.shape_cast %0 : vector<1x128x64xf32> to vector<128x64xf32>
    %2 = arith.truncf %1 : vector<128x64xf32> to vector<128x64xbf16>
    %c0_2 = arith.constant 0 : index
    %c0_3 = arith.constant 0 : index
    %3 = vector.load %arg2[%c0_2, %c0_3] : memref<192x64xbf16, #tpu.memory_space<vmem>>, vector<192x64xbf16>
    %cst = arith.constant dense<0.000000e+00> : vector<192x128xf32>
    %4 = tpu.matmul %3, %2, %cst {dimension_numbers = #tpu.dot_dimension_numbers<[1], [1], [0], [0], [0, 0, 1, 0], [], []>} : vector<192x64xbf16>, vector<128x64xbf16>, vector<192x128xf32> -> vector<192x128xf32>
    %c0_4 = arith.constant 0 : index
    %c0_5 = arith.constant 0 : index
    %5 = vector.load %arg3[%c0_4, %c0_5] : memref<192x1xf32, #tpu.memory_space<vmem>>, vector<192x1xf32>
    %6 = vector.broadcast %5 : vector<192x1xf32> to vector<192x128xf32>
    %7 = arith.addf %4, %6 : vector<192x128xf32>
    %c0_6 = arith.constant 0 : index
    %c0_7 = arith.constant 0 : index
    %8 = vector.load %arg7[%c0_6, %c0_7] : memref<192x128xf32, #tpu.memory_space<vmem>>, vector<192x128xf32>
    tpu.vector_store %arg7[%c0_6, %c0_7], %7 {strides = array<i32>} : memref<192x128xf32, #tpu.memory_space<vmem>>, vector<192x128xf32>,
    %9 = tpu.iota {dimensions = array<i32: 0>} : vector<128x1xi32>
    %c8_i32 = arith.constant 8 : i32
    %10 = vector.broadcast %c8_i32 : i32 to vector<128x1xi32>
    %11 = arith.cmpi slt, %9, %10 : vector<128x1xi32>
    %cst_8 = arith.constant 0.000000e+00 : f32
    %cst_9 = arith.constant -1.000000e+30 : f32
    %12 = vector.broadcast %cst_8 : f32 to vector<128x1xf32>
    %13 = vector.broadcast %cst_9 : f32 to vector<128x1xf32>
    %14 = arith.select %11, %12, %13 : vector<128x1xi1>, vector<128x1xf32>
    %c0_i32 = arith.constant 0 : i32
    %c2_i32 = arith.constant 2 : i32
    %15 = arith.addi %c0_i32, %c2_i32 : i32
    %c1_i32 = arith.constant 1 : i32
    scf.for %arg9 = %c0_i32 to %15 step %c1_i32  : i32 {
      %c2_i32_21 = arith.constant 2 : i32
      %26 = arith.muli %arg9, %c2_i32_21 : i32
      %c0_i32_22 = arith.constant 0 : i32
      %27 = arith.addi %26, %c0_i32_22 : i32
      %c16_i32 = arith.constant 16 : i32
      %28 = arith.muli %27, %c16_i32 : i32
      %29 = tpu.assume_multiple %28, 16 : i32
      %30 = arith.index_cast %29 : i32 to index
      %c0_23 = arith.constant 0 : index
      %31 = vector.load %arg7[%30, %c0_23] : memref<192x128xf32, #tpu.memory_space<vmem>>, vector<16x128xf32>
      %32 = arith.truncf %31 : vector<16x128xf32> to vector<16x128xbf16>
      %c64_i32 = arith.constant 64 : i32
      %33 = arith.addi %c64_i32, %29 : i32
      %34 = arith.index_cast %33 : i32 to index
      %c0_24 = arith.constant 0 : index
      %35 = vector.load %arg7[%34, %c0_24] : memref<192x128xf32, #tpu.memory_space<vmem>>, vector<16x128xf32>
      %36 = arith.truncf %35 : vector<16x128xf32> to vector<16x128xbf16>
      %c128_i32 = arith.constant 128 : i32
      %37 = arith.addi %c128_i32, %29 : i32
      %38 = arith.index_cast %37 : i32 to index
      %c0_25 = arith.constant 0 : index
      %39 = vector.load %arg7[%38, %c0_25] : memref<192x128xf32, #tpu.memory_space<vmem>>, vector<16x128xf32>
      %40 = arith.truncf %39 : vector<16x128xf32> to vector<16x128xbf16>
      %cst_26 = arith.constant dense<0.000000e+00> : vector<128x128xf32>
      %41 = tpu.matmul %36, %32, %cst_26 {dimension_numbers = #tpu.dot_dimension_numbers<[0], [0], [1], [1], [0, 1, 1, 1], [], []>} : vector<16x128xbf16>, vector<16x128xbf16>, vector<128x128xf32> -> vector<128x128xf32>
      %42 = vector.broadcast %14 : vector<128x1xf32> to vector<128x128xf32>
      %43 = arith.addf %41, %42 : vector<128x128xf32>
      %cst_27 = arith.constant dense<0xFF800000> : vector<128xf32>
      %44 = vector.multi_reduction <maximumf>, %43, %cst_27 [0] : vector<128x128xf32> to vector<128xf32>
      %45 = vector.shape_cast %44 : vector<128xf32> to vector<1x128xf32>
      %46 = vector.broadcast %45 : vector<1x128xf32> to vector<128x128xf32>
      %47 = arith.subf %43, %46 : vector<128x128xf32>
      %48 = math.exp %47 : vector<128x128xf32>
      %cst_28 = arith.constant dense<0.000000e+00> : vector<128xf32>
      %49 = vector.multi_reduction <add>, %48, %cst_28 [0] : vector<128x128xf32> to vector<128xf32>
      %50 = vector.shape_cast %49 : vector<128xf32> to vector<1x128xf32>
      %51 = arith.truncf %48 : vector<128x128xf32> to vector<128x128xbf16>
      %cst_29 = arith.constant dense<0.000000e+00> : vector<16x128xf32>
      %52 = tpu.matmul %40, %51, %cst_29 {dimension_numbers = #tpu.dot_dimension_numbers<[1], [0], [0], [1], [0, 0, 1, 1], [], []>} : vector<16x128xbf16>, vector<128x128xbf16>, vector<16x128xf32> -> vector<16x128xf32>
      %53 = tpu.reciprocal %50 {approx = true} : vector<1x128xf32> -> vector<1x128xf32>
      %54 = vector.broadcast %53 : vector<1x128xf32> to vector<16x128xf32>
      %55 = arith.mulf %52, %54 : vector<16x128xf32>
      %56 = arith.index_cast %29 : i32 to index
      %c0_30 = arith.constant 0 : index
      %57 = vector.load %arg8[%56, %c0_30] : memref<64x128xf32, #tpu.memory_space<vmem>>, vector<16x128xf32>
      tpu.vector_store %arg8[%56, %c0_30], %55 {strides = array<i32>} : memref<64x128xf32, #tpu.memory_space<vmem>>, vector<16x128xf32>,
      %c2_i32_31 = arith.constant 2 : i32
      %58 = arith.muli %arg9, %c2_i32_31 : i32
      %c1_i32_32 = arith.constant 1 : i32
      %59 = arith.addi %58, %c1_i32_32 : i32
      %c16_i32_33 = arith.constant 16 : i32
      %60 = arith.muli %59, %c16_i32_33 : i32
      %61 = tpu.assume_multiple %60, 16 : i32
      %62 = arith.index_cast %61 : i32 to index
      %c0_34 = arith.constant 0 : index
      %63 = vector.load %arg7[%62, %c0_34] : memref<192x128xf32, #tpu.memory_space<vmem>>, vector<16x128xf32>
      %64 = arith.truncf %63 : vector<16x128xf32> to vector<16x128xbf16>
      %c64_i32_35 = arith.constant 64 : i32
      %65 = arith.addi %c64_i32_35, %61 : i32
      %66 = arith.index_cast %65 : i32 to index
      %c0_36 = arith.constant 0 : index
      %67 = vector.load %arg7[%66, %c0_36] : memref<192x128xf32, #tpu.memory_space<vmem>>, vector<16x128xf32>
      %68 = arith.truncf %67 : vector<16x128xf32> to vector<16x128xbf16>
      %c128_i32_37 = arith.constant 128 : i32
      %69 = arith.addi %c128_i32_37, %61 : i32
      %70 = arith.index_cast %69 : i32 to index
      %c0_38 = arith.constant 0 : index
      %71 = vector.load %arg7[%70, %c0_38] : memref<192x128xf32, #tpu.memory_space<vmem>>, vector<16x128xf32>
      %72 = arith.truncf %71 : vector<16x128xf32> to vector<16x128xbf16>
      %cst_39 = arith.constant dense<0.000000e+00> : vector<128x128xf32>
      %73 = tpu.matmul %68, %64, %cst_39 {dimension_numbers = #tpu.dot_dimension_numbers<[0], [0], [1], [1], [0, 1, 1, 1], [], []>} : vector<16x128xbf16>, vector<16x128xbf16>, vector<128x128xf32> -> vector<128x128xf32>
      %74 = vector.broadcast %14 : vector<128x1xf32> to vector<128x128xf32>
      %75 = arith.addf %73, %74 : vector<128x128xf32>
      %cst_40 = arith.constant dense<0xFF800000> : vector<128xf32>
      %76 = vector.multi_reduction <maximumf>, %75, %cst_40 [0] : vector<128x128xf32> to vector<128xf32>
      %77 = vector.shape_cast %76 : vector<128xf32> to vector<1x128xf32>
      %78 = vector.broadcast %77 : vector<1x128xf32> to vector<128x128xf32>
      %79 = arith.subf %75, %78 : vector<128x128xf32>
      %80 = math.exp %79 : vector<128x128xf32>
      %cst_41 = arith.constant dense<0.000000e+00> : vector<128xf32>
      %81 = vector.multi_reduction <add>, %80, %cst_41 [0] : vector<128x128xf32> to vector<128xf32>
      %82 = vector.shape_cast %81 : vector<128xf32> to vector<1x128xf32>
      %83 = arith.truncf %80 : vector<128x128xf32> to vector<128x128xbf16>
      %cst_42 = arith.constant dense<0.000000e+00> : vector<16x128xf32>
      %84 = tpu.matmul %72, %83, %cst_42 {dimension_numbers = #tpu.dot_dimension_numbers<[1], [0], [0], [1], [0, 0, 1, 1], [], []>} : vector<16x128xbf16>, vector<128x128xbf16>, vector<16x128xf32> -> vector<16x128xf32>
      %85 = tpu.reciprocal %82 {approx = true} : vector<1x128xf32> -> vector<1x128xf32>
      %86 = vector.broadcast %85 : vector<1x128xf32> to vector<16x128xf32>
      %87 = arith.mulf %84, %86 : vector<16x128xf32>
      %88 = arith.index_cast %61 : i32 to index
      %c0_43 = arith.constant 0 : index
      %89 = vector.load %arg8[%88, %c0_43] : memref<64x128xf32, #tpu.memory_space<vmem>>, vector<16x128xf32>
      tpu.vector_store %arg8[%88, %c0_43], %87 {strides = array<i32>} : memref<64x128xf32, #tpu.memory_space<vmem>>, vector<16x128xf32>,
    }
    %c2_i32_10 = arith.constant 2 : i32
    %c0_11 = arith.constant 0 : index
    %c0_12 = arith.constant 0 : index
    %16 = vector.load %arg8[%c0_11, %c0_12] : memref<64x128xf32, #tpu.memory_space<vmem>>, vector<64x128xf32>
    %17 = arith.truncf %16 : vector<64x128xf32> to vector<64x128xbf16>
    %c0_13 = arith.constant 0 : index
    %c0_14 = arith.constant 0 : index
    %18 = vector.load %arg4[%c0_13, %c0_14] : memref<64x64xbf16, #tpu.memory_space<vmem>>, vector<64x64xbf16>
    %cst_15 = arith.constant dense<0.000000e+00> : vector<128x64xf32>
    %19 = tpu.matmul %17, %18, %cst_15 {dimension_numbers = #tpu.dot_dimension_numbers<[0], [0], [1], [1], [0, 1, 1, 1], [], []>} : vector<64x128xbf16>, vector<64x64xbf16>, vector<128x64xf32> -> vector<128x64xf32>
    %c0_16 = arith.constant 0 : index
    %c0_17 = arith.constant 0 : index
    %20 = vector.load %arg5[%c0_16, %c0_17] : memref<1x64xf32, #tpu.memory_space<vmem>>, vector<1x64xf32>
    %21 = vector.broadcast %20 : vector<1x64xf32> to vector<128x64xf32>
    %22 = arith.addf %19, %21 : vector<128x64xf32>
    %c0_18 = arith.constant 0 : index
    %c0_19 = arith.constant 0 : index
    %c0_20 = arith.constant 0 : index
    %23 = vector.load %arg6[%c0_18, %c0_19, %c0_20] : memref<1x128x64xf32, #tpu.memory_space<vmem>>, vector<1x128x64xf32>
    %24 = vector.shape_cast %23 : vector<1x128x64xf32> to vector<128x64xf32>
    %25 = vector.shape_cast %22 : vector<128x64xf32> to vector<1x128x64xf32>
    tpu.vector_store %arg6[%c0_18, %c0_19, %c0_20], %25 {strides = array<i32>} : memref<1x128x64xf32, #tpu.memory_space<vmem>>, vector<1x128x64xf32>,
    return
  }
  func.func @transform_0(%arg0: i32) -> (i32, i32, i32) {
    %c0_i32 = arith.constant 0 : i32
    %c0_i32_0 = arith.constant 0 : i32
    %c0_i32_1 = arith.constant 0 : i32
    return %arg0, %c0_i32, %c0_i32_0 : i32, i32, i32
  }
  func.func @transform_1(%arg0: i32) -> (i32, i32) {
    %c0_i32 = arith.constant 0 : i32
    %c0_i32_0 = arith.constant 0 : i32
    %c0_i32_1 = arith.constant 0 : i32
    return %c0_i32, %c0_i32_0 : i32, i32
  }
  func.func @transform_2(%arg0: i32) -> (i32, i32) {
    %c0_i32 = arith.constant 0 : i32
    %c0_i32_0 = arith.constant 0 : i32
    %c0_i32_1 = arith.constant 0 : i32
    return %c0_i32, %c0_i32_0 : i32, i32
  }
  func.func @transform_3(%arg0: i32) -> (i32, i32) {
    %c0_i32 = arith.constant 0 : i32
    %c0_i32_0 = arith.constant 0 : i32
    %c0_i32_1 = arith.constant 0 : i32
    return %c0_i32, %c0_i32_0 : i32, i32
  }
  func.func @transform_4(%arg0: i32) -> (i32, i32) {
    %c0_i32 = arith.constant 0 : i32
    %c0_i32_0 = arith.constant 0 : i32
    %c0_i32_1 = arith.constant 0 : i32
    return %c0_i32, %c0_i32_0 : i32, i32
  }
  func.func @transform_5(%arg0: i32) -> (i32, i32, i32) {
    %c0_i32 = arith.constant 0 : i32
    %c0_i32_0 = arith.constant 0 : i32
    %c0_i32_1 = arith.constant 0 : i32
    return %arg0, %c0_i32, %c0_i32_0 : i32, i32, i32
  }
}

module attributes {stable_mosaic.version = 11 : i64} {
  func.func @attention_kernel(%arg0: i32, %arg1: memref<1x128x64xf32, #tpu.memory_space<vmem>>, %arg2: memref<192x64xbf16, #tpu.memory_space<vmem>>, %arg3: memref<192x1xf32, #tpu.memory_space<vmem>>, %arg4: memref<64x64xbf16, #tpu.memory_space<vmem>>, %arg5: memref<1x64xf32, #tpu.memory_space<vmem>>, %arg6: memref<1x128x64xf32, #tpu.memory_space<vmem>>, %arg7: memref<192x128xf32, #tpu.memory_space<vmem>>, %arg8: memref<64x128xf32, #tpu.memory_space<vmem>>) attributes {dimension_semantics = [#tpu.dimension_semantics<parallel>], iteration_bounds = array<i64: 2>, scalar_prefetch = 0 : i64, scratch_operands = 2 : i64, tpu.core_type = #tpu.core_type<tc>, window_params = [{transform_indices = @transform_0, window_bounds = array<i64: 1, 128, 64>}, {pipeline_mode = #tpu.pipeline_mode<synchronous>, transform_indices = @transform_1, window_bounds = array<i64: 192, 64>}, {pipeline_mode = #tpu.pipeline_mode<synchronous>, transform_indices = @transform_2, window_bounds = array<i64: 192, 1>}, {pipeline_mode = #tpu.pipeline_mode<synchronous>, transform_indices = @transform_3, window_bounds = array<i64: 64, 64>}, {pipeline_mode = #tpu.pipeline_mode<synchronous>, transform_indices = @transform_4, window_bounds = array<i64: 1, 64>}, {transform_indices = @transform_5, window_bounds = array<i64: 1, 128, 64>}]} {
    %c0 = arith.constant 0 : index
    %c0_0 = arith.constant 0 : index
    %c0_1 = arith.constant 0 : index
    %0 = vector.load %arg1[%c0, %c0_0, %c0_1] : memref<1x128x64xf32, #tpu.memory_space<vmem>>, vector<1x128x64xf32>
    %1 = vector.shape_cast %0 : vector<1x128x64xf32> to vector<128x64xf32>
    %2 = arith.truncf %1 : vector<128x64xf32> to vector<128x64xbf16>
    %c0_2 = arith.constant 0 : index
    %c0_3 = arith.constant 0 : index
    %3 = vector.load %arg2[%c0_2, %c0_3] : memref<192x64xbf16, #tpu.memory_space<vmem>>, vector<192x64xbf16>
    %cst = arith.constant dense<0.000000e+00> : vector<192x128xf32>
    %4 = tpu.matmul %3, %2, %cst {dimension_numbers = #tpu.dot_dimension_numbers<[1], [1], [0], [0], [0, 0, 1, 0], [], []>} : vector<192x64xbf16>, vector<128x64xbf16>, vector<192x128xf32> -> vector<192x128xf32>
    %c0_4 = arith.constant 0 : index
    %c0_5 = arith.constant 0 : index
    %5 = vector.load %arg3[%c0_4, %c0_5] : memref<192x1xf32, #tpu.memory_space<vmem>>, vector<192x1xf32>
    %6 = vector.broadcast %5 : vector<192x1xf32> to vector<192x128xf32>
    %7 = arith.addf %4, %6 : vector<192x128xf32>
    %c0_6 = arith.constant 0 : index
    %c0_7 = arith.constant 0 : index
    %8 = vector.load %arg7[%c0_6, %c0_7] : memref<192x128xf32, #tpu.memory_space<vmem>>, vector<192x128xf32>
    tpu.vector_store %arg7[%c0_6, %c0_7], %7 {strides = array<i32>} : memref<192x128xf32, #tpu.memory_space<vmem>>, vector<192x128xf32>,
    %9 = tpu.iota {dimensions = array<i32: 0>} : vector<128x1xi32>
    %c8_i32 = arith.constant 8 : i32
    %10 = vector.broadcast %c8_i32 : i32 to vector<128x1xi32>
    %11 = arith.cmpi slt, %9, %10 : vector<128x1xi32>
    %cst_8 = arith.constant 0.000000e+00 : f32
    %cst_9 = arith.constant -1.000000e+30 : f32
    %12 = vector.broadcast %cst_8 : f32 to vector<128x1xf32>
    %13 = vector.broadcast %cst_9 : f32 to vector<128x1xf32>
    %14 = arith.select %11, %12, %13 : vector<128x1xi1>, vector<128x1xf32>
    %c0_i32 = arith.constant 0 : i32
    %c2_i32 = arith.constant 2 : i32
    %15 = arith.addi %c0_i32, %c2_i32 : i32
    %c1_i32 = arith.constant 1 : i32
    scf.for %arg9 = %c0_i32 to %15 step %c1_i32  : i32 {
      %c2_i32_21 = arith.constant 2 : i32
      %26 = arith.muli %arg9, %c2_i32_21 : i32
      %c0_i32_22 = arith.constant 0 : i32
      %27 = arith.addi %26, %c0_i32_22 : i32
      %c16_i32 = arith.constant 16 : i32
      %28 = arith.muli %27, %c16_i32 : i32
      %29 = tpu.assume_multiple %28, 16 : i32
      %30 = arith.index_cast %29 : i32 to index
      %c0_23 = arith.constant 0 : index
      %31 = vector.load %arg7[%30, %c0_23] : memref<192x128xf32, #tpu.memory_space<vmem>>, vector<16x128xf32>
      %32 = arith.truncf %31 : vector<16x128xf32> to vector<16x128xbf16>
      %c64_i32 = arith.constant 64 : i32
      %33 = arith.addi %c64_i32, %29 : i32
      %34 = arith.index_cast %33 : i32 to index
      %c0_24 = arith.constant 0 : index
      %35 = vector.load %arg7[%34, %c0_24] : memref<192x128xf32, #tpu.memory_space<vmem>>, vector<16x128xf32>
      %36 = arith.truncf %35 : vector<16x128xf32> to vector<16x128xbf16>
      %c128_i32 = arith.constant 128 : i32
      %37 = arith.addi %c128_i32, %29 : i32
      %38 = arith.index_cast %37 : i32 to index
      %c0_25 = arith.constant 0 : index
      %39 = vector.load %arg7[%38, %c0_25] : memref<192x128xf32, #tpu.memory_space<vmem>>, vector<16x128xf32>
      %40 = arith.truncf %39 : vector<16x128xf32> to vector<16x128xbf16>
      %cst_26 = arith.constant dense<0.000000e+00> : vector<128x128xf32>
      %41 = tpu.matmul %36, %32, %cst_26 {dimension_numbers = #tpu.dot_dimension_numbers<[0], [0], [1], [1], [0, 1, 1, 1], [], []>} : vector<16x128xbf16>, vector<16x128xbf16>, vector<128x128xf32> -> vector<128x128xf32>
      %42 = vector.broadcast %14 : vector<128x1xf32> to vector<128x128xf32>
      %43 = arith.addf %41, %42 : vector<128x128xf32>
      %cst_27 = arith.constant dense<0xFF800000> : vector<128xf32>
      %44 = vector.multi_reduction <maximumf>, %43, %cst_27 [0] : vector<128x128xf32> to vector<128xf32>
      %45 = vector.shape_cast %44 : vector<128xf32> to vector<1x128xf32>
      %46 = vector.broadcast %45 : vector<1x128xf32> to vector<128x128xf32>
      %47 = arith.subf %43, %46 : vector<128x128xf32>
      %48 = math.exp %47 : vector<128x128xf32>
      %cst_28 = arith.constant dense<0.000000e+00> : vector<128xf32>
      %49 = vector.multi_reduction <add>, %48, %cst_28 [0] : vector<128x128xf32> to vector<128xf32>
      %50 = vector.shape_cast %49 : vector<128xf32> to vector<1x128xf32>
      %51 = arith.truncf %48 : vector<128x128xf32> to vector<128x128xbf16>
      %cst_29 = arith.constant dense<0.000000e+00> : vector<16x128xf32>
      %52 = tpu.matmul %40, %51, %cst_29 {dimension_numbers = #tpu.dot_dimension_numbers<[1], [0], [0], [1], [0, 0, 1, 1], [], []>} : vector<16x128xbf16>, vector<128x128xbf16>, vector<16x128xf32> -> vector<16x128xf32>
      %53 = tpu.reciprocal %50 {approx = true} : vector<1x128xf32> -> vector<1x128xf32>
      %54 = vector.broadcast %53 : vector<1x128xf32> to vector<16x128xf32>
      %55 = arith.mulf %52, %54 : vector<16x128xf32>
      %56 = arith.index_cast %29 : i32 to index
      %c0_30 = arith.constant 0 : index
      %57 = vector.load %arg8[%56, %c0_30] : memref<64x128xf32, #tpu.memory_space<vmem>>, vector<16x128xf32>
      tpu.vector_store %arg8[%56, %c0_30], %55 {strides = array<i32>} : memref<64x128xf32, #tpu.memory_space<vmem>>, vector<16x128xf32>,
      %c2_i32_31 = arith.constant 2 : i32
      %58 = arith.muli %arg9, %c2_i32_31 : i32
      %c1_i32_32 = arith.constant 1 : i32
      %59 = arith.addi %58, %c1_i32_32 : i32
      %c16_i32_33 = arith.constant 16 : i32
      %60 = arith.muli %59, %c16_i32_33 : i32
      %61 = tpu.assume_multiple %60, 16 : i32
      %62 = arith.index_cast %61 : i32 to index
      %c0_34 = arith.constant 0 : index
      %63 = vector.load %arg7[%62, %c0_34] : memref<192x128xf32, #tpu.memory_space<vmem>>, vector<16x128xf32>
      %64 = arith.truncf %63 : vector<16x128xf32> to vector<16x128xbf16>
      %c64_i32_35 = arith.constant 64 : i32
      %65 = arith.addi %c64_i32_35, %61 : i32
      %66 = arith.index_cast %65 : i32 to index
      %c0_36 = arith.constant 0 : index
      %67 = vector.load %arg7[%66, %c0_36] : memref<192x128xf32, #tpu.memory_space<vmem>>, vector<16x128xf32>
      %68 = arith.truncf %67 : vector<16x128xf32> to vector<16x128xbf16>
      %c128_i32_37 = arith.constant 128 : i32
      %69 = arith.addi %c128_i32_37, %61 : i32
      %70 = arith.index_cast %69 : i32 to index
      %c0_38 = arith.constant 0 : index
      %71 = vector.load %arg7[%70, %c0_38] : memref<192x128xf32, #tpu.memory_space<vmem>>, vector<16x128xf32>
      %72 = arith.truncf %71 : vector<16x128xf32> to vector<16x128xbf16>
      %cst_39 = arith.constant dense<0.000000e+00> : vector<128x128xf32>
      %73 = tpu.matmul %68, %64, %cst_39 {dimension_numbers = #tpu.dot_dimension_numbers<[0], [0], [1], [1], [0, 1, 1, 1], [], []>} : vector<16x128xbf16>, vector<16x128xbf16>, vector<128x128xf32> -> vector<128x128xf32>
      %74 = vector.broadcast %14 : vector<128x1xf32> to vector<128x128xf32>
      %75 = arith.addf %73, %74 : vector<128x128xf32>
      %cst_40 = arith.constant dense<0xFF800000> : vector<128xf32>
      %76 = vector.multi_reduction <maximumf>, %75, %cst_40 [0] : vector<128x128xf32> to vector<128xf32>
      %77 = vector.shape_cast %76 : vector<128xf32> to vector<1x128xf32>
      %78 = vector.broadcast %77 : vector<1x128xf32> to vector<128x128xf32>
      %79 = arith.subf %75, %78 : vector<128x128xf32>
      %80 = math.exp %79 : vector<128x128xf32>
      %cst_41 = arith.constant dense<0.000000e+00> : vector<128xf32>
      %81 = vector.multi_reduction <add>, %80, %cst_41 [0] : vector<128x128xf32> to vector<128xf32>
      %82 = vector.shape_cast %81 : vector<128xf32> to vector<1x128xf32>
      %83 = arith.truncf %80 : vector<128x128xf32> to vector<128x128xbf16>
      %cst_42 = arith.constant dense<0.000000e+00> : vector<16x128xf32>
      %84 = tpu.matmul %72, %83, %cst_42 {dimension_numbers = #tpu.dot_dimension_numbers<[1], [0], [0], [1], [0, 0, 1, 1], [], []>} : vector<16x128xbf16>, vector<128x128xbf16>, vector<16x128xf32> -> vector<16x128xf32>
      %85 = tpu.reciprocal %82 {approx = true} : vector<1x128xf32> -> vector<1x128xf32>
      %86 = vector.broadcast %85 : vector<1x128xf32> to vector<16x128xf32>
      %87 = arith.mulf %84, %86 : vector<16x128xf32>
      %88 = arith.index_cast %61 : i32 to index
      %c0_43 = arith.constant 0 : index
      %89 = vector.load %arg8[%88, %c0_43] : memref<64x128xf32, #tpu.memory_space<vmem>>, vector<16x128xf32>
      tpu.vector_store %arg8[%88, %c0_43], %87 {strides = array<i32>} : memref<64x128xf32, #tpu.memory_space<vmem>>, vector<16x128xf32>,
    }
    %c2_i32_10 = arith.constant 2 : i32
    %c0_11 = arith.constant 0 : index
    %c0_12 = arith.constant 0 : index
    %16 = vector.load %arg8[%c0_11, %c0_12] : memref<64x128xf32, #tpu.memory_space<vmem>>, vector<64x128xf32>
    %17 = arith.truncf %16 : vector<64x128xf32> to vector<64x128xbf16>
    %c0_13 = arith.constant 0 : index
    %c0_14 = arith.constant 0 : index
    %18 = vector.load %arg4[%c0_13, %c0_14] : memref<64x64xbf16, #tpu.memory_space<vmem>>, vector<64x64xbf16>
    %cst_15 = arith.constant dense<0.000000e+00> : vector<128x64xf32>
    %19 = tpu.matmul %17, %18, %cst_15 {dimension_numbers = #tpu.dot_dimension_numbers<[0], [0], [1], [1], [0, 1, 1, 1], [], []>} : vector<64x128xbf16>, vector<64x64xbf16>, vector<128x64xf32> -> vector<128x64xf32>
    %c0_16 = arith.constant 0 : index
    %c0_17 = arith.constant 0 : index
    %20 = vector.load %arg5[%c0_16, %c0_17] : memref<1x64xf32, #tpu.memory_space<vmem>>, vector<1x64xf32>
    %21 = vector.broadcast %20 : vector<1x64xf32> to vector<128x64xf32>
    %22 = arith.addf %19, %21 : vector<128x64xf32>
    %c0_18 = arith.constant 0 : index
    %c0_19 = arith.constant 0 : index
    %c0_20 = arith.constant 0 : index
    %23 = vector.load %arg6[%c0_18, %c0_19, %c0_20] : memref<1x128x64xf32, #tpu.memory_space<vmem>>, vector<1x128x64xf32>
    %24 = vector.shape_cast %23 : vector<1x128x64xf32> to vector<128x64xf32>
    %25 = vector.shape_cast %22 : vector<128x64xf32> to vector<1x128x64xf32>
    tpu.vector_store %arg6[%c0_18, %c0_19, %c0_20], %25 {strides = array<i32>} : memref<1x128x64xf32, #tpu.memory_space<vmem>>, vector<1x128x64xf32>,
    return
  }
  func.func @transform_0(%arg0: i32) -> (i32, i32, i32) {
    %c0_i32 = arith.constant 0 : i32
    %c0_i32_0 = arith.constant 0 : i32
    %c0_i32_1 = arith.constant 0 : i32
    return %arg0, %c0_i32, %c0_i32_0 : i32, i32, i32
  }
  func.func @transform_1(%arg0: i32) -> (i32, i32) {
    %c0_i32 = arith.constant 0 : i32
    %c0_i32_0 = arith.constant 0 : i32
    %c0_i32_1 = arith.constant 0 : i32
    return %c0_i32, %c0_i32_0 : i32, i32
  }
  func.func @transform_2(%arg0: i32) -> (i32, i32) {
    %c0_i32 = arith.constant 0 : i32
    %c0_i32_0 = arith.constant 0 : i32
    %c0_i32_1 = arith.constant 0 : i32
    return %c0_i32, %c0_i32_0 : i32, i32
  }
  func.func @transform_3(%arg0: i32) -> (i32, i32) {
    %c0_i32 = arith.constant 0 : i32
    %c0_i32_0 = arith.constant 0 : i32
    %c0_i32_1 = arith.constant 0 : i32
    return %c0_i32, %c0_i32_0 : i32, i32
  }
  func.func @transform_4(%arg0: i32) -> (i32, i32) {
    %c0_i32 = arith.constant 0 : i32
    %c0_i32_0 = arith.constant 0 : i32
    %c0_i32_1 = arith.constant 0 : i32
    return %c0_i32, %c0_i32_0 : i32, i32
  }
  func.func @transform_5(%arg0: i32) -> (i32, i32, i32) {
    %c0_i32 = arith.constant 0 : i32
    %c0_i32_0 = arith.constant 0 : i32
    %c0_i32_1 = arith.constant 0 : i32
    return %arg0, %c0_i32, %c0_i32_0 : i32, i32, i32
  }
}

</mosaic_0001>

<llo_original>
// kernel: tpu_custom_call.1
$region0: #{tpu_custom_call.1}
  #allocation0 [shape = 'u32[]', space=smem, size = 0x4, offset = 0x4, fixed_abs, tag = 'smem constant byte address 0x4 - core index']
  #allocation1 [shape = 'u32[144,128]{1,0:T(1,128)}', space=vmem, size = 0x12000, scoped, tag = 'internal scratch']
  #allocation2 [shape = 'f32[192,128]{1,0:T(8,128)}', space=vmem, size = 0x18000, scoped, tag = 'scratch operand']
  #allocation3 [shape = 'f32[64,128]{1,0:T(8,128)}', space=vmem, size = 0x8000, scoped, tag = 'scratch operand']
  %s0 = inlined_call_operand.vmem [shape: f32[2,128,64], index: 0, kind: input, shape index: {}]
  %s1 = inlined_call_operand.vmem [shape: bf16[192,64], index: 1, kind: input, shape index: {}]
  %s2 = inlined_call_operand.vmem [shape: f32[192,1], index: 2, kind: input, shape index: {}]
  %s3 = inlined_call_operand.vmem [shape: bf16[64,64], index: 3, kind: input, shape index: {}]
  %s4 = inlined_call_operand.vmem [shape: f32[1,64], index: 4, kind: input, shape index: {}]
  %s5 = inlined_call_operand.vmem [shape: f32[2,128,64], index: 5, kind: output, shape index: {}]
  %s6 = sld [smem:[#allocation0]]
  $region60: #{tpu_custom_call.1} parent=0
    _
  %s8 = ssub.s32 1, %s6
  %s9 = scalar_select 0, %s8, %s6
  loop: start=0, step=1, limit=4
  $region2: #{tpu_custom_call.1} parent=0 // loop_pre_header
    _
  $region3: #{tpu_custom_call.1} parent=0 // loop_header
    %s11 = sphi 0, %s15
    %p12 = scmp.ge.s32.totalorder %s11, 4
    %s21 = sphi 0, %s23
    %s24 = sphi 0, %s21
    %s25 = sphi 0, %s24
    %s41 = sphi 0, %s25
    %s45 = sphi 0, %s45
    %s47 = sphi 0, %s45
    %s48 = sphi 0, %s47
    %s62 = sphi 0, %s48
    %s66 = sphi 0, %s66
    %s68 = sphi 0, %s66
    %s69 = sphi 0, %s68
    %s83 = sphi 0, %s69
    %s87 = sphi 0, %s87
    %s89 = sphi 0, %s87
    %s90 = sphi 0, %s89
    %s104 = sphi 0, %s90
    %s108 = sphi 0, %s108
    %s110 = sphi 0, %s108
    %s111 = sphi 0, %s110
    %s125 = sphi 0, %s111
    %s131 = sphi 0, %s133
    %s134 = sphi 0, %s131
    %s135 = sphi 0, %s134
    %s151 = sphi 0, %s135
  $region4: #{tpu_custom_call.1} parent=0 // loop_header_branch
    %14 = sbr.rel (%p12) target = $region8
  $region5: #{tpu_custom_call.1} parent=0 // loop_body
    %s16 = ssub.s32 %s11, 1
    %s17 = ssub.s32 %s11, 2
    %s18 = sadd.s32 %s11, 1
    %s19 = ssub.s32 %s11, %s18
    %p20 = scmp.eq.s32.totalorder %s19, 0
    %s22 = sadd.s32 %s21, 1
    %s23 = scalar_select %p20, %s21, %s22
    %p26 = pneg %p20
    %p27 = scmp.eq.s32.totalorder %s11, 1
    %p28 = por %p26, %p27
    %p29 = scmp.ne.s32.totalorder %s21, %s24
    %p30 = scmp.eq.s32.totalorder %s11, 0
    %p31 = por %p29, %p30
    %p32 = scmp.ne.s32.totalorder %s21, %s24
    %p33 = scmp.eq.s32.totalorder %s16, 1
    %p34 = por %p32, %p33
    %p35 = scmp.ne.s32.totalorder %s24, %s25
    %p36 = scmp.eq.s32.totalorder %s16, 0
    %p37 = por %p35, %p36
    %p38 = scmp.ne.s32.totalorder %s24, %s25
    %p39 = scmp.eq.s32.totalorder %s17, 1
    %p40 = por %p38, %p39
    %p42 = scmp.ne.s32.totalorder %s25, %s41
    %p43 = scmp.eq.s32.totalorder %s17, 0
    %p44 = por %p42, %p43
    %s46 = sadd.s32 %s45, 1
    %p49 = scmp.eq.s32.totalorder %s11, 1
    %p50 = scmp.ne.s32.totalorder %s45, %s47
    %p51 = scmp.eq.s32.totalorder %s11, 0
    %p52 = por %p50, %p51
    %p53 = scmp.ne.s32.totalorder %s45, %s47
    %p54 = scmp.eq.s32.totalorder %s16, 1
    %p55 = por %p53, %p54
    %p56 = scmp.ne.s32.totalorder %s47, %s48
    %p57 = scmp.eq.s32.totalorder %s16, 0
    %p58 = por %p56, %p57
    %p59 = scmp.ne.s32.totalorder %s47, %s48
    %p60 = scmp.eq.s32.totalorder %s17, 1
    %p61 = por %p59, %p60
    %p63 = scmp.ne.s32.totalorder %s48, %s62
    %p64 = scmp.eq.s32.totalorder %s17, 0
    %p65 = por %p63, %p64
    %s67 = sadd.s32 %s66, 1
    %p70 = scmp.eq.s32.totalorder %s11, 1
    %p71 = scmp.ne.s32.totalorder %s66, %s68
    %p72 = scmp.eq.s32.totalorder %s11, 0
    %p73 = por %p71, %p72
    %p74 = scmp.ne.s32.totalorder %s66, %s68
    %p75 = scmp.eq.s32.totalorder %s16, 1
    %p76 = por %p74, %p75
    %p77 = scmp.ne.s32.totalorder %s68, %s69
    %p78 = scmp.eq.s32.totalorder %s16, 0
    %p79 = por %p77, %p78
    %p80 = scmp.ne.s32.totalorder %s68, %s69
    %p81 = scmp.eq.s32.totalorder %s17, 1
    %p82 = por %p80, %p81
    %p84 = scmp.ne.s32.totalorder %s69, %s83
    %p85 = scmp.eq.s32.totalorder %s17, 0
    %p86 = por %p84, %p85
    %s88 = sadd.s32 %s87, 1
    %p91 = scmp.eq.s32.totalorder %s11, 1
    %p92 = scmp.ne.s32.totalorder %s87, %s89
    %p93 = scmp.eq.s32.totalorder %s11, 0
    %p94 = por %p92, %p93
    %p95 = scmp.ne.s32.totalorder %s87, %s89
    %p96 = scmp.eq.s32.totalorder %s16, 1
    %p97 = por %p95, %p96
    %p98 = scmp.ne.s32.totalorder %s89, %s90
    %p99 = scmp.eq.s32.totalorder %s16, 0
    %p100 = por %p98, %p99
    %p101 = scmp.ne.s32.totalorder %s89, %s90
    %p102 = scmp.eq.s32.totalorder %s17, 1
    %p103 = por %p101, %p102
    %p105 = scmp.ne.s32.totalorder %s90, %s104
    %p106 = scmp.eq.s32.totalorder %s17, 0
    %p107 = por %p105, %p106
    %s109 = sadd.s32 %s108, 1
    %p112 = scmp.eq.s32.totalorder %s11, 1
    %p113 = scmp.ne.s32.totalorder %s108, %s110
    %p114 = scmp.eq.s32.totalorder %s11, 0
    %p115 = por %p113, %p114
    %p116 = scmp.ne.s32.totalorder %s108, %s110
    %p117 = scmp.eq.s32.totalorder %s16, 1
    %p118 = por %p116, %p117
    %p119 = scmp.ne.s32.totalorder %s110, %s111
    %p120 = scmp.eq.s32.totalorder %s16, 0
    %p121 = por %p119, %p120
    %p122 = scmp.ne.s32.totalorder %s110, %s111
    %p123 = scmp.eq.s32.totalorder %s17, 1
    %p124 = por %p122, %p123
    %p126 = scmp.ne.s32.totalorder %s111, %s125
    %p127 = scmp.eq.s32.totalorder %s17, 0
    %p128 = por %p126, %p127
    %s129 = ssub.s32 %s11, %s18
    %p130 = scmp.eq.s32.totalorder %s129, 0
    %s132 = sadd.s32 %s131, 1
    %s133 = scalar_select %p130, %s131, %s132
    %p136 = pneg %p130
    %p137 = scmp.eq.s32.totalorder %s11, 1
    %p138 = por %p136, %p137
    %p139 = scmp.ne.s32.totalorder %s131, %s134
    %p140 = scmp.eq.s32.totalorder %s11, 0
    %p141 = por %p139, %p140
    %p142 = scmp.ne.s32.totalorder %s131, %s134
    %p143 = scmp.eq.s32.totalorder %s16, 1
    %p144 = por %p142, %p143
    %p145 = scmp.ne.s32.totalorder %s134, %s135
    %p146 = scmp.eq.s32.totalorder %s16, 0
    %p147 = por %p145, %p146
    %p148 = scmp.ne.s32.totalorder %s134, %s135
    %p149 = scmp.eq.s32.totalorder %s17, 1
    %p150 = por %p148, %p149
    %p152 = scmp.ne.s32.totalorder %s135, %s151
    %p153 = scmp.eq.s32.totalorder %s17, 0
    %p154 = por %p152, %p153
    %p155 = scmp.le.s32.totalorder 1, %s11
    %p156 = scmp.lt.s32.totalorder %s11, 3
    %p157 = pnand %p155, %p156
    %p158 = pneg %p157
    // Predicated region
    $region9: #{tpu_custom_call.1} parent=5 // pred_check
      _
    $region10: #{tpu_custom_call.1} parent=5 // pred_check_branch
      %160 = sbr.rel (%p157) target = $region12
    $region11: #{tpu_custom_call.1} parent=5 // pred_region
      %s161 = ssub.s32 %s11, 1
      // Predicated region
      $region13: #{tpu_custom_call.1} parent=11 // pred_check
        %p162 = pneg %p58
      $region14: #{tpu_custom_call.1} parent=11 // pred_check_branch
        %164 = sbr.rel (%p162) target = $region16
      $region15: #{tpu_custom_call.1} parent=11 // pred_region
        _
      $region16: #{tpu_custom_call.1} parent=11 // pred_fallthru
        _
      // Predicated region
      $region17: #{tpu_custom_call.1} parent=11 // pred_check
        %p165 = pneg %p79
      $region18: #{tpu_custom_call.1} parent=11 // pred_check_branch
        %167 = sbr.rel (%p165) target = $region20
      $region19: #{tpu_custom_call.1} parent=11 // pred_region
        _
      $region20: #{tpu_custom_call.1} parent=11 // pred_fallthru
        _
      // Predicated region
      $region21: #{tpu_custom_call.1} parent=11 // pred_check
        %p168 = pneg %p100
      $region22: #{tpu_custom_call.1} parent=11 // pred_check_branch
        %170 = sbr.rel (%p168) target = $region24
      $region23: #{tpu_custom_call.1} parent=11 // pred_region
        _
      $region24: #{tpu_custom_call.1} parent=11 // pred_fallthru
        _
      // Predicated region
      $region25: #{tpu_custom_call.1} parent=11 // pred_check
        %p171 = pneg %p121
      $region26: #{tpu_custom_call.1} parent=11 // pred_check_branch
        %173 = sbr.rel (%p171) target = $region28
      $region27: #{tpu_custom_call.1} parent=11 // pred_region
        _
      $region28: #{tpu_custom_call.1} parent=11 // pred_fallthru
        _
    $region12: #{tpu_custom_call.1} parent=5 // pred_fallthru
      _
    %p174 = scmp.lt.s32.totalorder %s11, 2
    // Predicated region
    $region29: #{tpu_custom_call.1} parent=5 // pred_check
      %p175 = pneg %p174
    $region30: #{tpu_custom_call.1} parent=5 // pred_check_branch
      %177 = sbr.rel (%p175) target = $region32
    $region31: #{tpu_custom_call.1} parent=5 // pred_region
      // Predicated region
      $region33: #{tpu_custom_call.1} parent=31 // pred_check
        %p178 = pneg %p31
      $region34: #{tpu_custom_call.1} parent=31 // pred_check_branch
        %180 = sbr.rel (%p178) target = $region36
      $region35: #{tpu_custom_call.1} parent=31 // pred_region
        %p181 = scmp.lt.s32.totalorder %s11, 1
        %s182 = scalar_select %p181, %s11, 1
        %s183 = smul.addr %s182, 16
        %s184 = smul.addr %s183, 8
        %s185 = scalar_lea.vmem %s0, %s184
      $region36: #{tpu_custom_call.1} parent=31 // pred_fallthru
        _
    $region32: #{tpu_custom_call.1} parent=5 // pred_fallthru
      _
    %p186 = scmp.le.s32.totalorder 1, %s11
    %p187 = scmp.lt.s32.totalorder %s11, 3
    %p188 = pnand %p186, %p187
    %p189 = pneg %p188
    // Predicated region
    $region37: #{tpu_custom_call.1} parent=5 // pred_check
      _
    $region38: #{tpu_custom_call.1} parent=5 // pred_check_branch
      %191 = sbr.rel (%p188) target = $region40
    $region39: #{tpu_custom_call.1} parent=5 // pred_region
      %s192 = ssub.s32 %s11, 1
      %p193 = scmp.lt.s32.totalorder %s16, 1
      %s194 = scalar_select %p193, %s16, 1
      %s195 = smul.addr %s194, 16
      %s196 = smul.addr %s195, 8
      %s197 = scalar_lea.vmem %s0, %s196
      %p198 = pneg %p37
      %p199 = pneg %p34
      %p200 = pneg %p58
      %p201 = pneg %p55
      %p202 = pneg %p79
      %p203 = pneg %p76
      %p204 = pneg %p100
      %p205 = pneg %p97
      %p206 = pneg %p121
      %p207 = pneg %p118
      %p208 = pneg %p147
      %p209 = pneg %p144
      %p210 = scmp.lt.s32.totalorder %s16, 1
      %s211 = scalar_select %p210, %s16, 1
      %s212 = smul.addr %s211, 16
      %s213 = smul.addr %s212, 8
      %s214 = scalar_lea.vmem %s5, %s213
      %p215 = scmp.lt.s32.totalorder %s16, 1
      %s216 = scalar_select %p215, %s16, 1
      %s217 = smul.addr %s216, 16
      %s218 = smul.addr %s217, 8
      %s219 = scalar_lea.vmem %s0, %s218
      %p220 = scmp.lt.s32.totalorder %s16, 1
      %s221 = scalar_select %p220, %s16, 1
      %s222 = smul.addr %s221, 16
      %s223 = smul.addr %s222, 8
      %s224 = scalar_lea.vmem %s5, %s223
      %v226 = vld [vmem:[%s219] sm:$0xff]
      %v227 = vld [vmem:[%s219 + $0x8] sm:$0xff]
      %v228 = vld [vmem:[%s219 + $0x10] sm:$0xff]
      %v229 = vld [vmem:[%s219 + $0x18] sm:$0xff]
      %v230 = vld [vmem:[%s219 + $0x20] sm:$0xff]
      %v231 = vld [vmem:[%s219 + $0x28] sm:$0xff]
      %v232 = vld [vmem:[%s219 + $0x30] sm:$0xff]
      %v233 = vld [vmem:[%s219 + $0x38] sm:$0xff]
      %v234 = vld [vmem:[%s219 + $0x40] sm:$0xff]
      %v235 = vld [vmem:[%s219 + $0x48] sm:$0xff]
      %v236 = vld [vmem:[%s219 + $0x50] sm:$0xff]
      %v237 = vld [vmem:[%s219 + $0x58] sm:$0xff]
      %v238 = vld [vmem:[%s219 + $0x60] sm:$0xff]
      %v239 = vld [vmem:[%s219 + $0x68] sm:$0xff]
      %v240 = vld [vmem:[%s219 + $0x70] sm:$0xff]
      %v241 = vld [vmem:[%s219 + $0x78] sm:$0xff]
      %v242 = vpack.c.bf16 %v227, %v226
      %v243 = vpack.c.bf16 %v229, %v228
      %v244 = vpack.c.bf16 %v231, %v230
      %v245 = vpack.c.bf16 %v233, %v232
      %v246 = vpack.c.bf16 %v235, %v234
      %v247 = vpack.c.bf16 %v237, %v236
      %v248 = vpack.c.bf16 %v239, %v238
      %v249 = vpack.c.bf16 %v241, %v240
      %v250 = vld [vmem:[%s1] sm:$0xf]
      %v251 = vld [vmem:[%s1 + $0x4] sm:$0xf]
      %v252 = vld [vmem:[%s1 + $0x8] sm:$0xf]
      %v253 = vld [vmem:[%s1 + $0xc] sm:$0xf]
      %v254 = vld [vmem:[%s1 + $0x10] sm:$0xf]
      %v255 = vld [vmem:[%s1 + $0x14] sm:$0xf]
      %v256 = vld [vmem:[%s1 + $0x18] sm:$0xf]
      %v257 = vld [vmem:[%s1 + $0x1c] sm:$0xf]
      %v258 = vld [vmem:[%s1 + $0x20] sm:$0xf]
      %v259 = vld [vmem:[%s1 + $0x24] sm:$0xf]
      %v260 = vld [vmem:[%s1 + $0x28] sm:$0xf]
      %v261 = vld [vmem:[%s1 + $0x2c] sm:$0xf]
      %v262 = vld [vmem:[%s1 + $0x30] sm:$0xf]
      %v263 = vld [vmem:[%s1 + $0x34] sm:$0xf]
      %v264 = vld [vmem:[%s1 + $0x38] sm:$0xf]
      %v265 = vld [vmem:[%s1 + $0x3c] sm:$0xf]
      %v266 = vld [vmem:[%s1 + $0x40] sm:$0xf]
      %v267 = vld [vmem:[%s1 + $0x44] sm:$0xf]
      %v268 = vld [vmem:[%s1 + $0x48] sm:$0xf]
      %v269 = vld [vmem:[%s1 + $0x4c] sm:$0xf]
      %v270 = vld [vmem:[%s1 + $0x50] sm:$0xf]
      %v271 = vld [vmem:[%s1 + $0x54] sm:$0xf]
      %v272 = vld [vmem:[%s1 + $0x58] sm:$0xf]
      %v273 = vld [vmem:[%s1 + $0x5c] sm:$0xf]
      %v274 = vld [vmem:[%s2] sm:$0xff]
      %v275 = vld [vmem:[%s2 + $0x8] sm:$0xff]
      %v276 = vld [vmem:[%s2 + $0x10] sm:$0xff]
      %v277 = vld [vmem:[%s2 + $0x18] sm:$0xff]
      %v278 = vld [vmem:[%s2 + $0x20] sm:$0xff]
      %v279 = vld [vmem:[%s2 + $0x28] sm:$0xff]
      %v280 = vld [vmem:[%s2 + $0x30] sm:$0xff]
      %v281 = vld [vmem:[%s2 + $0x38] sm:$0xff]
      %v282 = vld [vmem:[%s2 + $0x40] sm:$0xff]
      %v283 = vld [vmem:[%s2 + $0x48] sm:$0xff]
      %v284 = vld [vmem:[%s2 + $0x50] sm:$0xff]
      %v285 = vld [vmem:[%s2 + $0x58] sm:$0xff]
      %v286 = vld [vmem:[%s2 + $0x60] sm:$0xff]
      %v287 = vld [vmem:[%s2 + $0x68] sm:$0xff]
      %v288 = vld [vmem:[%s2 + $0x70] sm:$0xff]
      %v289 = vld [vmem:[%s2 + $0x78] sm:$0xff]
      %v290 = vld [vmem:[%s2 + $0x80] sm:$0xff]
      %v291 = vld [vmem:[%s2 + $0x88] sm:$0xff]
      %v292 = vld [vmem:[%s2 + $0x90] sm:$0xff]
      %v293 = vld [vmem:[%s2 + $0x98] sm:$0xff]
      %v294 = vld [vmem:[%s2 + $0xa0] sm:$0xff]
      %v295 = vld [vmem:[%s2 + $0xa8] sm:$0xff]
      %v296 = vld [vmem:[%s2 + $0xb0] sm:$0xff]
      %v297 = vld [vmem:[%s2 + $0xb8] sm:$0xff]
      %299 = vset.pattern.permute.xlu0 0
      %300 = vperm.xlu0 %299, %v274
      %v301 = vpop.permute.xlu0 %300
      %304 = vset.pattern.permute.xlu0 0
      %305 = vperm.xlu0 %304, %v275
      %v306 = vpop.permute.xlu0 %305
      %309 = vset.pattern.permute.xlu0 0
      %310 = vperm.xlu0 %309, %v276
      %v311 = vpop.permute.xlu0 %310
      %314 = vset.pattern.permute.xlu0 0
      %315 = vperm.xlu0 %314, %v277
      %v316 = vpop.permute.xlu0 %315
      %319 = vset.pattern.permute.xlu0 0
      %320 = vperm.xlu0 %319, %v278
      %v321 = vpop.permute.xlu0 %320
      %324 = vset.pattern.permute.xlu0 0
      %325 = vperm.xlu0 %324, %v279
      %v326 = vpop.permute.xlu0 %325
      %329 = vset.pattern.permute.xlu0 0
      %330 = vperm.xlu0 %329, %v280
      %v331 = vpop.permute.xlu0 %330
      %334 = vset.pattern.permute.xlu0 0
      %335 = vperm.xlu0 %334, %v281
      %v336 = vpop.permute.xlu0 %335
      %339 = vset.pattern.permute.xlu0 0
      %340 = vperm.xlu0 %339, %v282
      %v341 = vpop.permute.xlu0 %340
      %344 = vset.pattern.permute.xlu0 0
      %345 = vperm.xlu0 %344, %v283
      %v346 = vpop.permute.xlu0 %345
      %349 = vset.pattern.permute.xlu0 0
      %350 = vperm.xlu0 %349, %v284
      %v351 = vpop.permute.xlu0 %350
      %354 = vset.pattern.permute.xlu0 0
      %355 = vperm.xlu0 %354, %v285
      %v356 = vpop.permute.xlu0 %355
      %359 = vset.pattern.permute.xlu0 0
      %360 = vperm.xlu0 %359, %v286
      %v361 = vpop.permute.xlu0 %360
      %364 = vset.pattern.permute.xlu0 0
      %365 = vperm.xlu0 %364, %v287
      %v366 = vpop.permute.xlu0 %365
      %369 = vset.pattern.permute.xlu0 0
      %370 = vperm.xlu0 %369, %v288
      %v371 = vpop.permute.xlu0 %370
      %374 = vset.pattern.permute.xlu0 0
      %375 = vperm.xlu0 %374, %v289
      %v376 = vpop.permute.xlu0 %375
      %379 = vset.pattern.permute.xlu0 0
      %380 = vperm.xlu0 %379, %v290
      %v381 = vpop.permute.xlu0 %380
      %384 = vset.pattern.permute.xlu0 0
      %385 = vperm.xlu0 %384, %v291
      %v386 = vpop.permute.xlu0 %385
      %389 = vset.pattern.permute.xlu0 0
      %390 = vperm.xlu0 %389, %v292
      %v391 = vpop.permute.xlu0 %390
      %394 = vset.pattern.permute.xlu0 0
      %395 = vperm.xlu0 %394, %v293
      %v396 = vpop.permute.xlu0 %395
      %399 = vset.pattern.permute.xlu0 0
      %400 = vperm.xlu0 %399, %v294
      %v401 = vpop.permute.xlu0 %400
      %404 = vset.pattern.permute.xlu0 0
      %405 = vperm.xlu0 %404, %v295
      %v406 = vpop.permute.xlu0 %405
      %409 = vset.pattern.permute.xlu0 0
      %410 = vperm.xlu0 %409, %v296
      %v411 = vpop.permute.xlu0 %410
      %414 = vset.pattern.permute.xlu0 0
      %415 = vperm.xlu0 %414, %v297
      %v416 = vpop.permute.xlu0 %415
      %v442 = vunpack.c.l.b16 %v250
      %v443 = vunpack.c.l.b16 %v251
      %v444 = vunpack.c.l.b16 %v252
      %v445 = vunpack.c.l.b16 %v253
      %v446 = vunpack.c.l.b16 %v254
      %v447 = vunpack.c.l.b16 %v255
      %v448 = vunpack.c.l.b16 %v256
      %v449 = vunpack.c.l.b16 %v257
      %v450 = vunpack.c.l.b16 %v258
      %v451 = vunpack.c.l.b16 %v259
      %v452 = vunpack.c.l.b16 %v260
      %v453 = vunpack.c.l.b16 %v261
      %v454 = vunpack.c.l.b16 %v262
      %v455 = vunpack.c.l.b16 %v263
      %v456 = vunpack.c.l.b16 %v264
      %v457 = vunpack.c.l.b16 %v265
      %v458 = vunpack.c.l.b16 %v266
      %v459 = vunpack.c.l.b16 %v267
      %v460 = vunpack.c.l.b16 %v268
      %v461 = vunpack.c.l.b16 %v269
      %v462 = vunpack.c.l.b16 %v270
      %v463 = vunpack.c.l.b16 %v271
      %v464 = vunpack.c.l.b16 %v272
      %v465 = vunpack.c.l.b16 %v273
      %v466 = vpack.c.b16 %v443, %v442
      %v467 = vpack.c.b16 %v445, %v444
      %v468 = vpack.c.b16 %v447, %v446
      %v469 = vpack.c.b16 %v449, %v448
      %v470 = vpack.c.b16 %v451, %v450
      %v471 = vpack.c.b16 %v453, %v452
      %v472 = vpack.c.b16 %v455, %v454
      %v473 = vpack.c.b16 %v457, %v456
      %v474 = vpack.c.b16 %v459, %v458
      %v475 = vpack.c.b16 %v461, %v460
      %v476 = vpack.c.b16 %v463, %v462
      %v477 = vpack.c.b16 %v465, %v464
      %vm478 = vcmask 523264
      %v480 = vsel %vm478, %v466, 0
      %v483 = vsel %vm478, %v467, 0
      %v486 = vsel %vm478, %v468, 0
      %v489 = vsel %vm478, %v469, 0
      %v492 = vsel %vm478, %v470, 0
      %v495 = vsel %vm478, %v471, 0
      %v498 = vsel %vm478, %v472, 0
      %v501 = vsel %vm478, %v473, 0
      %v504 = vsel %vm478, %v474, 0
      %v507 = vsel %vm478, %v475, 0
      %v510 = vsel %vm478, %v476, 0
      %v513 = vsel %vm478, %v477, 0
      %v516 = vsel %vm478, %v242, 0
      %v519 = vsel %vm478, %v243, 0
      %v522 = vsel %vm478, %v244, 0
      %v525 = vsel %vm478, %v245, 0
      %v528 = vsel %vm478, %v246, 0
      %v531 = vsel %vm478, %v247, 0
      %v534 = vsel %vm478, %v248, 0
      %v537 = vsel %vm478, %v249, 0
      %539 = vmatprep.subr.bf16.mxu0 0
      %540 = vmatpush1.bf16.xpose.msra.mxu0 %v537
      %541 = vmatprep.subr.bf16.mxu0 0
      %542 = vmatpush1.bf16.xpose.msra.mxu0 %v534
      %543 = vmatprep.subr.bf16.mxu0 0
      %544 = vmatpush1.bf16.xpose.msra.mxu0 %v531
      %545 = vmatprep.subr.bf16.mxu0 0
      %546 = vmatpush1.bf16.xpose.msra.mxu0 %v528
      %547 = vmatprep.subr.bf16.mxu0 0
      %548 = vmatpush1.bf16.xpose.msra.mxu0 %v525
      %549 = vmatprep.subr.bf16.mxu0 0
      %550 = vmatpush1.bf16.xpose.msra.mxu0 %v522
      %551 = vmatprep.subr.bf16.mxu0 0
      %552 = vmatpush1.bf16.xpose.msra.mxu0 %v519
      %553 = vmatprep.subr.bf16.mxu0 0
      %554 = vmatpush1.bf16.xpose.msra.mxu0 %v516
      %555 = vmatprep.subr.bf16.mxu0 0
      %556 = vmatpush2.bf16.xpose.msra.mxu0 0
      %557 = vmatprep.subr.bf16.mxu0 0
      %558 = vmatpush2.bf16.xpose.msra.mxu0 0
      %559 = vmatprep.subr.bf16.mxu0 0
      %560 = vmatpush2.bf16.xpose.msra.mxu0 0
      %561 = vmatprep.subr.bf16.mxu0 0
      %562 = vmatpush2.bf16.xpose.msra.mxu0 0
      %563 = vmatprep.subr.bf16.mxu0 0
      %564 = vmatpush2.bf16.xpose.msra.mxu0 0
      %565 = vmatprep.subr.bf16.mxu0 0
      %566 = vmatpush2.bf16.xpose.msra.mxu0 0
      %567 = vmatprep.subr.bf16.mxu0 0
      %568 = vmatpush2.bf16.xpose.msra.mxu0 0
      %569 = vmatprep.subr.bf16.mxu0 0
      %570 = vmatpush2.bf16.xpose.msra.mxu0 0
      %571 = vmatprep.mubr.bf16.mxu0 0
      %572 = vmatmul.mubr.bf16.gmra.mxu0 %v480
      %v573 = vpop.f32.mrf.mxu0
      %v574 = vadd.f32 %v301, %v573
      %v575 = vpop.f32.mrf.mxu0
      %v576 = vpop.f32.mrf.mxu0
      %v577 = vadd.f32 %v306, %v576
      %v578 = vpop.f32.mrf.mxu0
      %579 = vmatprep.mubr.bf16.mxu0 0
      %580 = vmatmul.mubr.bf16.gmra.mxu0 %v483
      %v581 = vpop.f32.mrf.mxu0
      %v582 = vadd.f32 %v311, %v581
      %v583 = vpop.f32.mrf.mxu0
      %v584 = vpop.f32.mrf.mxu0
      %v585 = vadd.f32 %v316, %v584
      %v586 = vpop.f32.mrf.mxu0
      %587 = vmatprep.mubr.bf16.mxu0 0
      %588 = vmatmul.mubr.bf16.gmra.mxu0 %v486
      %v589 = vpop.f32.mrf.mxu0
      %v590 = vadd.f32 %v321, %v589
      %v591 = vpop.f32.mrf.mxu0
      %v592 = vpop.f32.mrf.mxu0
      %v593 = vadd.f32 %v326, %v592
      %v594 = vpop.f32.mrf.mxu0
      %595 = vmatprep.mubr.bf16.mxu0 0
      %596 = vmatmul.mubr.bf16.gmra.mxu0 %v489
      %v597 = vpop.f32.mrf.mxu0
      %v598 = vadd.f32 %v331, %v597
      %v599 = vpop.f32.mrf.mxu0
      %v600 = vpop.f32.mrf.mxu0
      %v601 = vadd.f32 %v336, %v600
      %v602 = vpop.f32.mrf.mxu0
      %603 = vmatprep.mubr.bf16.mxu0 0
      %604 = vmatmul.mubr.bf16.gmra.mxu0 %v492
      %v605 = vpop.f32.mrf.mxu0
      %v606 = vadd.f32 %v341, %v605
      %v607 = vpop.f32.mrf.mxu0
      %v608 = vpop.f32.mrf.mxu0
      %v609 = vadd.f32 %v346, %v608
      %v610 = vpop.f32.mrf.mxu0
      %611 = vmatprep.mubr.bf16.mxu0 0
      %612 = vmatmul.mubr.bf16.gmra.mxu0 %v495
      %v613 = vpop.f32.mrf.mxu0
      %v614 = vadd.f32 %v351, %v613
      %v615 = vpop.f32.mrf.mxu0
      %v616 = vpop.f32.mrf.mxu0
      %v617 = vadd.f32 %v356, %v616
      %v618 = vpop.f32.mrf.mxu0
      %619 = vmatprep.mubr.bf16.mxu0 0
      %620 = vmatmul.mubr.bf16.gmra.mxu0 %v498
      %v621 = vpop.f32.mrf.mxu0
      %v622 = vadd.f32 %v361, %v621
      %v623 = vpop.f32.mrf.mxu0
      %v624 = vpop.f32.mrf.mxu0
      %v625 = vadd.f32 %v366, %v624
      %v626 = vpop.f32.mrf.mxu0
      %627 = vmatprep.mubr.bf16.mxu0 0
      %628 = vmatmul.mubr.bf16.gmra.mxu0 %v501
      %v629 = vpop.f32.mrf.mxu0
      %v630 = vadd.f32 %v371, %v629
      %v631 = vpop.f32.mrf.mxu0
      %v632 = vpop.f32.mrf.mxu0
      %v633 = vadd.f32 %v376, %v632
      %v634 = vpop.f32.mrf.mxu0
      %635 = vmatprep.mubr.bf16.mxu0 0
      %636 = vmatmul.mubr.bf16.gmra.mxu0 %v504
      %v637 = vpop.f32.mrf.mxu0
      %v638 = vadd.f32 %v381, %v637
      %v639 = vpop.f32.mrf.mxu0
      %v640 = vpop.f32.mrf.mxu0
      %v641 = vadd.f32 %v386, %v640
      %v642 = vpop.f32.mrf.mxu0
      %643 = vmatprep.mubr.bf16.mxu0 0
      %644 = vmatmul.mubr.bf16.gmra.mxu0 %v507
      %v645 = vpop.f32.mrf.mxu0
      %v646 = vadd.f32 %v391, %v645
      %v647 = vpop.f32.mrf.mxu0
      %v648 = vpop.f32.mrf.mxu0
      %v649 = vadd.f32 %v396, %v648
      %v650 = vpop.f32.mrf.mxu0
      %651 = vmatprep.mubr.bf16.mxu0 0
      %652 = vmatmul.mubr.bf16.gmra.mxu0 %v510
      %v653 = vpop.f32.mrf.mxu0
      %v654 = vadd.f32 %v401, %v653
      %v655 = vpop.f32.mrf.mxu0
      %v656 = vpop.f32.mrf.mxu0
      %v657 = vadd.f32 %v406, %v656
      %v658 = vpop.f32.mrf.mxu0
      %659 = vmatprep.mubr.bf16.mxu0 0
      %660 = vmatmul.mubr.bf16.gmra.mxu0 %v513
      %v661 = vpop.f32.mrf.mxu0
      %v662 = vadd.f32 %v411, %v661
      %v663 = vpop.f32.mrf.mxu0
      %v664 = vpop.f32.mrf.mxu0
      %v665 = vadd.f32 %v416, %v664
      %v666 = vpop.f32.mrf.mxu0
      %667 = vdwg.mxu0
      %668 = vst [vmem:[#allocation2] sm:$0xff] %v574
      %669 = vst [vmem:[#allocation2 + $0x8] sm:$0xff] %v577
      %670 = vst [vmem:[#allocation2 + $0x10] sm:$0xff] %v582
      %671 = vst [vmem:[#allocation2 + $0x18] sm:$0xff] %v585
      %672 = vst [vmem:[#allocation2 + $0x20] sm:$0xff] %v590
      %673 = vst [vmem:[#allocation2 + $0x28] sm:$0xff] %v593
      %674 = vst [vmem:[#allocation2 + $0x30] sm:$0xff] %v598
      %675 = vst [vmem:[#allocation2 + $0x38] sm:$0xff] %v601
      %676 = vst [vmem:[#allocation2 + $0x40] sm:$0xff] %v606
      %677 = vst [vmem:[#allocation2 + $0x48] sm:$0xff] %v609
      %678 = vst [vmem:[#allocation2 + $0x50] sm:$0xff] %v614
      %679 = vst [vmem:[#allocation2 + $0x58] sm:$0xff] %v617
      %680 = vst [vmem:[#allocation2 + $0x60] sm:$0xff] %v622
      %681 = vst [vmem:[#allocation2 + $0x68] sm:$0xff] %v625
      %682 = vst [vmem:[#allocation2 + $0x70] sm:$0xff] %v630
      %683 = vst [vmem:[#allocation2 + $0x78] sm:$0xff] %v633
      %684 = vst [vmem:[#allocation2 + $0x80] sm:$0xff] %v638
      %685 = vst [vmem:[#allocation2 + $0x88] sm:$0xff] %v641
      %686 = vst [vmem:[#allocation2 + $0x90] sm:$0xff] %v646
      %687 = vst [vmem:[#allocation2 + $0x98] sm:$0xff] %v649
      %688 = vst [vmem:[#allocation2 + $0xa0] sm:$0xff] %v654
      %689 = vst [vmem:[#allocation2 + $0xa8] sm:$0xff] %v657
      %690 = vst [vmem:[#allocation2 + $0xb0] sm:$0xff] %v662
      %691 = vst [vmem:[#allocation2 + $0xb8] sm:$0xff] %v665
      %v692 = vlaneseq
      %v693 = vshrl.u32 %v692, 7
      %v694 = vadd.s32 %v693, 8
      %v695 = vadd.s32 %v693, 16
      %v696 = vadd.s32 %v693, 24
      %v697 = vadd.s32 %v693, 32
      %v698 = vadd.s32 %v693, 40
      %v699 = vadd.s32 %v693, 48
      %v700 = vadd.s32 %v693, 56
      %v701 = vadd.s32 %v693, 64
      %v702 = vadd.s32 %v693, 72
      %v703 = vadd.s32 %v693, 80
      %v704 = vadd.s32 %v693, 88
      %v705 = vadd.s32 %v693, 96
      %v706 = vadd.s32 %v693, 104
      %v707 = vadd.s32 %v693, 112
      %v708 = vadd.s32 %v693, 120
      %vm709 = vcmp.lt.s32.totalorder %v693, 8
      %vm710 = vcmp.lt.s32.totalorder %v694, 8
      %vm711 = vcmp.lt.s32.totalorder %v695, 8
      %vm712 = vcmp.lt.s32.totalorder %v696, 8
      %vm713 = vcmp.lt.s32.totalorder %v697, 8
      %vm714 = vcmp.lt.s32.totalorder %v698, 8
      %vm715 = vcmp.lt.s32.totalorder %v699, 8
      %vm716 = vcmp.lt.s32.totalorder %v700, 8
      %vm717 = vcmp.lt.s32.totalorder %v701, 8
      %vm718 = vcmp.lt.s32.totalorder %v702, 8
      %vm719 = vcmp.lt.s32.totalorder %v703, 8
      %vm720 = vcmp.lt.s32.totalorder %v704, 8
      %vm721 = vcmp.lt.s32.totalorder %v705, 8
      %vm722 = vcmp.lt.s32.totalorder %v706, 8
      %vm723 = vcmp.lt.s32.totalorder %v707, 8
      %vm724 = vcmp.lt.s32.totalorder %v708, 8
      %v725 = vsel %vm709, 0.0, -1e+30
      %v726 = vsel %vm710, 0.0, -1e+30
      %v727 = vsel %vm711, 0.0, -1e+30
      %v728 = vsel %vm712, 0.0, -1e+30
      %v729 = vsel %vm713, 0.0, -1e+30
      %v730 = vsel %vm714, 0.0, -1e+30
      %v731 = vsel %vm715, 0.0, -1e+30
      %v732 = vsel %vm716, 0.0, -1e+30
      %v733 = vsel %vm717, 0.0, -1e+30
      %v734 = vsel %vm718, 0.0, -1e+30
      %v735 = vsel %vm719, 0.0, -1e+30
      %v736 = vsel %vm720, 0.0, -1e+30
      %v737 = vsel %vm721, 0.0, -1e+30
      %v738 = vsel %vm722, 0.0, -1e+30
      %v739 = vsel %vm723, 0.0, -1e+30
      %v740 = vsel %vm724, 0.0, -1e+30
      loop: start=0, step=1, limit=2
      $region41: #{tpu_custom_call.1} parent=39 // loop_pre_header
        _
      $region42: #{tpu_custom_call.1} parent=39 // loop_header
        %s742 = sphi 0, %s746
        %p743 = scmp.ge.s32.totalorder %s742, 2
      $region43: #{tpu_custom_call.1} parent=39 // loop_header_branch
        %745 = sbr.rel (%p743) target = $region47
      $region44: #{tpu_custom_call.1} parent=39 // loop_body
        %s747 = smul.u32 %s742, 32
        %s748 = scalar_lea.vmem [#allocation2], %s747
        %v749 = vld [vmem:[%s748] sm:$0xff]
        %v750 = vld [vmem:[%s748 + $0x8] sm:$0xff]
        %v751 = vpack.c.bf16 %v750, %v749
        %s752 = sadd.s32 %s747, 64
        %s753 = scalar_lea.vmem [#allocation2], %s752
        %v754 = vld [vmem:[%s753] sm:$0xff]
        %v755 = vld [vmem:[%s753 + $0x8] sm:$0xff]
        %v756 = vpack.c.bf16 %v755, %v754
        %s757 = sadd.s32 %s747, 128
        %s758 = scalar_lea.vmem [#allocation2], %s757
        %v759 = vld [vmem:[%s758] sm:$0xff]
        %v760 = vld [vmem:[%s758 + $0x8] sm:$0xff]
        %v761 = vpack.c.bf16 %v760, %v759
        %762 = vxpose.xlu0.c.b16.start [1/8] %v756, 128
        %763 = vxpose.xlu0.c.b16.cont [2/8] 0, 128
        %764 = vxpose.xlu0.c.b16.cont [3/8] 0, 128
        %765 = vxpose.xlu0.c.b16.cont [4/8] 0, 128
        %766 = vxpose.xlu0.c.b16.cont [5/8] 0, 128
        %767 = vxpose.xlu0.c.b16.cont [6/8] 0, 128
        %768 = vxpose.xlu0.c.b16.cont [7/8] 0, 128
        %769 = vxpose.xlu0.c.b16.end [8/8] 0, 128
        %v770 = vpop.trf.xlu0
        %v771 = vpop.trf.xlu0
        %v772 = vpop.trf.xlu0
        %v773 = vpop.trf.xlu0
        %v774 = vpop.trf.xlu0
        %v775 = vpop.trf.xlu0
        %v776 = vpop.trf.xlu0
        %v777 = vpop.trf.xlu0
        %vm778 = vcmask 130048
        %v780 = vsel %vm778, %v770, 0
        %v783 = vsel %vm778, %v771, 0
        %v786 = vsel %vm778, %v772, 0
        %v789 = vsel %vm778, %v773, 0
        %v792 = vsel %vm778, %v774, 0
        %v795 = vsel %vm778, %v775, 0
        %v798 = vsel %vm778, %v776, 0
        %v801 = vsel %vm778, %v777, 0
        %803 = vmatprep.subr.bf16.mxu0 0
        %804 = vmatpush1.bf16.msra.mxu0 0
        %805 = vmatprep.subr.bf16.mxu0 0
        %806 = vmatpush1.bf16.msra.mxu0 0
        %807 = vmatprep.subr.bf16.mxu0 0
        %808 = vmatpush1.bf16.msra.mxu0 0
        %809 = vmatprep.subr.bf16.mxu0 0
        %810 = vmatpush1.bf16.msra.mxu0 0
        %811 = vmatprep.subr.bf16.mxu0 0
        %812 = vmatpush1.bf16.msra.mxu0 0
        %813 = vmatprep.subr.bf16.mxu0 0
        %814 = vmatpush1.bf16.msra.mxu0 0
        %815 = vmatprep.subr.bf16.mxu0 0
        %816 = vmatpush1.bf16.msra.mxu0 0
        %817 = vmatprep.subr.bf16.mxu0 0
        %818 = vmatpush1.bf16.msra.mxu0 %v751
        %819 = vmatprep.subr.bf16.mxu0 0
        %820 = vmatpush2.bf16.msra.mxu0 0
        %821 = vmatprep.subr.bf16.mxu0 0
        %822 = vmatpush2.bf16.msra.mxu0 0
        %823 = vmatprep.subr.bf16.mxu0 0
        %824 = vmatpush2.bf16.msra.mxu0 0
        %825 = vmatprep.subr.bf16.mxu0 0
        %826 = vmatpush2.bf16.msra.mxu0 0
        %827 = vmatprep.subr.bf16.mxu0 0
        %828 = vmatpush2.bf16.msra.mxu0 0
        %829 = vmatprep.subr.bf16.mxu0 0
        %830 = vmatpush2.bf16.msra.mxu0 0
        %831 = vmatprep.subr.bf16.mxu0 0
        %832 = vmatpush2.bf16.msra.mxu0 0
        %833 = vmatprep.subr.bf16.mxu0 0
        %834 = vmatpush2.bf16.msra.mxu0 0
        %835 = vmatprep.mubr.bf16.mxu0 0
        %836 = vmatmul.mubr.bf16.gmra.mxu0 %v780
        %v837 = vpop.f32.mrf.mxu0
        %v838 = vadd.f32 %v725, %v837
        %v839 = vpop.f32.mrf.mxu0
        %v840 = vpop.f32.mrf.mxu0
        %v841 = vadd.f32 %v726, %v840
        %v842 = vpop.f32.mrf.mxu0
        %843 = vmatprep.mubr.bf16.mxu0 0
        %844 = vmatmul.mubr.bf16.gmra.mxu0 %v783
        %v845 = vpop.f32.mrf.mxu0
        %v846 = vadd.f32 %v727, %v845
        %v847 = vpop.f32.mrf.mxu0
        %v848 = vpop.f32.mrf.mxu0
        %v849 = vadd.f32 %v728, %v848
        %v850 = vpop.f32.mrf.mxu0
        %851 = vmatprep.mubr.bf16.mxu0 0
        %852 = vmatmul.mubr.bf16.gmra.mxu0 %v786
        %v853 = vpop.f32.mrf.mxu0
        %v854 = vadd.f32 %v729, %v853
        %v855 = vpop.f32.mrf.mxu0
        %v856 = vpop.f32.mrf.mxu0
        %v857 = vadd.f32 %v730, %v856
        %v858 = vpop.f32.mrf.mxu0
        %859 = vmatprep.mubr.bf16.mxu0 0
        %860 = vmatmul.mubr.bf16.gmra.mxu0 %v789
        %v861 = vpop.f32.mrf.mxu0
        %v862 = vadd.f32 %v731, %v861
        %v863 = vpop.f32.mrf.mxu0
        %v864 = vpop.f32.mrf.mxu0
        %v865 = vadd.f32 %v732, %v864
        %v866 = vpop.f32.mrf.mxu0
        %867 = vmatprep.mubr.bf16.mxu0 0
        %868 = vmatmul.mubr.bf16.gmra.mxu0 %v792
        %v869 = vpop.f32.mrf.mxu0
        %v870 = vadd.f32 %v733, %v869
        %v871 = vpop.f32.mrf.mxu0
        %v872 = vpop.f32.mrf.mxu0
        %v873 = vadd.f32 %v734, %v872
        %v874 = vpop.f32.mrf.mxu0
        %875 = vmatprep.mubr.bf16.mxu0 0
        %876 = vmatmul.mubr.bf16.gmra.mxu0 %v795
        %v877 = vpop.f32.mrf.mxu0
        %v878 = vadd.f32 %v735, %v877
        %v879 = vpop.f32.mrf.mxu0
        %v880 = vpop.f32.mrf.mxu0
        %v881 = vadd.f32 %v736, %v880
        %v882 = vpop.f32.mrf.mxu0
        %883 = vmatprep.mubr.bf16.mxu0 0
        %884 = vmatmul.mubr.bf16.gmra.mxu0 %v798
        %v885 = vpop.f32.mrf.mxu0
        %v886 = vadd.f32 %v737, %v885
        %v887 = vpop.f32.mrf.mxu0
        %v888 = vpop.f32.mrf.mxu0
        %v889 = vadd.f32 %v738, %v888
        %v890 = vpop.f32.mrf.mxu0
        %891 = vmatprep.mubr.bf16.mxu0 0
        %892 = vmatmul.mubr.bf16.gmra.mxu0 %v801
        %v893 = vpop.f32.mrf.mxu0
        %v894 = vadd.f32 %v739, %v893
        %v895 = vpop.f32.mrf.mxu0
        %v896 = vpop.f32.mrf.mxu0
        %v897 = vadd.f32 %v740, %v896
        %v898 = vpop.f32.mrf.mxu0
        %899 = vdwg.mxu0
        %v900 = vmax.f32 %v838, %v854
        %v901 = vmax.f32 %v841, %v857
        %v902 = vmax.f32 %v846, %v862
        %v903 = vmax.f32 %v849, %v865
        %v904 = vmax.f32 %v900, %v870
        %v905 = vmax.f32 %v901, %v873
        %v906 = vmax.f32 %v902, %v878
        %v907 = vmax.f32 %v903, %v881
        %v908 = vmax.f32 %v904, %v886
        %v909 = vmax.f32 %v905, %v889
        %v910 = vmax.f32 %v906, %v894
        %v911 = vmax.f32 %v907, %v897
        %v912 = vmax.f32 %v908, %v909
        %v913 = vmax.f32 %v910, %v911
        %v914 = vmax.f32 %v912, %v913
        %v915 = vrot.slane %v914, 4
        %v916 = vmax.f32 %v914, %v915
        %v917 = vrot.slane %v916, 2
        %v918 = vmax.f32 %v916, %v917
        %v919 = vrot.slane %v918, 1
        %v920 = vmax.f32 %v918, %v919
        %v921 = vsub.f32 %v838, %v920
        %v922 = vsub.f32 %v841, %v920
        %v923 = vsub.f32 %v846, %v920
        %v924 = vsub.f32 %v849, %v920
        %v925 = vsub.f32 %v854, %v920
        %v926 = vsub.f32 %v857, %v920
        %v927 = vsub.f32 %v862, %v920
        %v928 = vsub.f32 %v865, %v920
        %v929 = vsub.f32 %v870, %v920
        %v930 = vsub.f32 %v873, %v920
        %v931 = vsub.f32 %v878, %v920
        %v932 = vsub.f32 %v881, %v920
        %v933 = vsub.f32 %v886, %v920
        %v934 = vsub.f32 %v889, %v920
        %v935 = vsub.f32 %v894, %v920
        %v936 = vsub.f32 %v897, %v920
        %v937 = vmul.f32 %v921, 1.442695
        %v938 = vpow.pop %v937
        %v939 = vmul.f32 %v922, 1.442695
        %v940 = vpow.pop %v939
        %v941 = vmul.f32 %v923, 1.442695
        %v942 = vpow.pop %v941
        %v943 = vmul.f32 %v924, 1.442695
        %v944 = vpow.pop %v943
        %v945 = vmul.f32 %v925, 1.442695
        %v946 = vpow.pop %v945
        %v947 = vmul.f32 %v926, 1.442695
        %v948 = vpow.pop %v947
        %v949 = vmul.f32 %v927, 1.442695
        %v950 = vpow.pop %v949
        %v951 = vmul.f32 %v928, 1.442695
        %v952 = vpow.pop %v951
        %v953 = vmul.f32 %v929, 1.442695
        %v954 = vpow.pop %v953
        %v955 = vmul.f32 %v930, 1.442695
        %v956 = vpow.pop %v955
        %v957 = vmul.f32 %v931, 1.442695
        %v958 = vpow.pop %v957
        %v959 = vmul.f32 %v932, 1.442695
        %v960 = vpow.pop %v959
        %v961 = vmul.f32 %v933, 1.442695
        %v962 = vpow.pop %v961
        %v963 = vmul.f32 %v934, 1.442695
        %v964 = vpow.pop %v963
        %v965 = vmul.f32 %v935, 1.442695
        %v966 = vpow.pop %v965
        %v967 = vmul.f32 %v936, 1.442695
        %v968 = vpow.pop %v967
        %v969 = vadd.f32 %v938, %v940
        %v970 = vadd.f32 %v969, %v942
        %v971 = vadd.f32 %v970, %v944
        %v972 = vadd.f32 %v971, %v946
        %v973 = vadd.f32 %v972, %v948
        %v974 = vadd.f32 %v973, %v950
        %v975 = vadd.f32 %v974, %v952
        %v976 = vadd.f32 %v975, %v954
        %v977 = vadd.f32 %v976, %v956
        %v978 = vadd.f32 %v977, %v958
        %v979 = vadd.f32 %v978, %v960
        %v980 = vadd.f32 %v979, %v962
        %v981 = vadd.f32 %v980, %v964
        %v982 = vadd.f32 %v981, %v966
        %v983 = vadd.f32 %v982, %v968
        %v984 = vrot.slane %v983, 4
        %v985 = vadd.f32 %v983, %v984
        %v986 = vrot.slane %v985, 2
        %v987 = vadd.f32 %v985, %v986
        %v988 = vrot.slane %v987, 1
        %v989 = vadd.f32 %v987, %v988
        %v990 = vpack.c.bf16 %v940, %v938
        %v991 = vpack.c.bf16 %v944, %v942
        %v992 = vpack.c.bf16 %v948, %v946
        %v993 = vpack.c.bf16 %v952, %v950
        %v994 = vpack.c.bf16 %v956, %v954
        %v995 = vpack.c.bf16 %v960, %v958
        %v996 = vpack.c.bf16 %v964, %v962
        %v997 = vpack.c.bf16 %v968, %v966
        %998 = vmatprep.subr.bf16.mxu0 0
        %999 = vmatpush1.bf16.msra.mxu0 %v997
        %1000 = vmatprep.subr.bf16.mxu0 0
        %1001 = vmatpush1.bf16.msra.mxu0 %v996
        %1002 = vmatprep.subr.bf16.mxu0 0
        %1003 = vmatpush1.bf16.msra.mxu0 %v995
        %1004 = vmatprep.subr.bf16.mxu0 0
        %1005 = vmatpush1.bf16.msra.mxu0 %v994
        %1006 = vmatprep.subr.bf16.mxu0 0
        %1007 = vmatpush1.bf16.msra.mxu0 %v993
        %1008 = vmatprep.subr.bf16.mxu0 0
        %1009 = vmatpush1.bf16.msra.mxu0 %v992
        %1010 = vmatprep.subr.bf16.mxu0 0
        %1011 = vmatpush1.bf16.msra.mxu0 %v991
        %1012 = vmatprep.subr.bf16.mxu0 0
        %1013 = vmatpush1.bf16.msra.mxu0 %v990
        %1014 = vmatprep.subr.bf16.mxu0 0
        %1015 = vmatpush2.bf16.msra.mxu0 0
        %1016 = vmatprep.subr.bf16.mxu0 0
        %1017 = vmatpush2.bf16.msra.mxu0 0
        %1018 = vmatprep.subr.bf16.mxu0 0
        %1019 = vmatpush2.bf16.msra.mxu0 0
        %1020 = vmatprep.subr.bf16.mxu0 0
        %1021 = vmatpush2.bf16.msra.mxu0 0
        %1022 = vmatprep.subr.bf16.mxu0 0
        %1023 = vmatpush2.bf16.msra.mxu0 0
        %1024 = vmatprep.subr.bf16.mxu0 0
        %1025 = vmatpush2.bf16.msra.mxu0 0
        %1026 = vmatprep.subr.bf16.mxu0 0
        %1027 = vmatpush2.bf16.msra.mxu0 0
        %1028 = vmatprep.subr.bf16.mxu0 0
        %1029 = vmatpush2.bf16.msra.mxu0 0
        %1030 = vmatprep.mubr.bf16.mxu0 0
        %1031 = vmatmul.mubr.bf16.gmra.mxu0 %v761
        %v1032 = vpop.f32.mrf.mxu0
        %v1033 = vadd.f32 0.0, %v1032
        %v1034 = vpop.f32.mrf.mxu0
        %v1035 = vpop.f32.mrf.mxu0
        %v1036 = vadd.f32 0.0, %v1035
        %v1037 = vpop.f32.mrf.mxu0
        %1038 = vdwg.mxu0
        %v1039 = vrcp.pop %v989
        %v1040 = vmul.f32 %v1033, %v1039
        %v1041 = vmul.f32 %v1036, %v1039
        %s1042 = scalar_lea.vmem [#allocation3], %s747
        %1043 = vst [vmem:[%s1042] sm:$0xff] %v1040
        %1044 = vst [vmem:[%s1042 + $0x8] sm:$0xff] %v1041
        %s1045 = smul.u32 %s742, 2
        %s1046 = sadd.s32 %s1045, 1
        %s1047 = smul.u32 %s1046, 16
        %s1048 = scalar_lea.vmem [#allocation2], %s1047
        %v1049 = vld [vmem:[%s1048] sm:$0xff]
        %v1050 = vld [vmem:[%s1048 + $0x8] sm:$0xff]
        %v1051 = vpack.c.bf16 %v1050, %v1049
        %s1052 = sadd.s32 %s1047, 64
        %s1053 = scalar_lea.vmem [#allocation2], %s1052
        %v1054 = vld [vmem:[%s1053] sm:$0xff]
        %v1055 = vld [vmem:[%s1053 + $0x8] sm:$0xff]
        %v1056 = vpack.c.bf16 %v1055, %v1054
        %s1057 = sadd.s32 %s1047, 128
        %s1058 = scalar_lea.vmem [#allocation2], %s1057
        %v1059 = vld [vmem:[%s1058] sm:$0xff]
        %v1060 = vld [vmem:[%s1058 + $0x8] sm:$0xff]
        %v1061 = vpack.c.bf16 %v1060, %v1059
        %1062 = vxpose.xlu0.c.b16.start [1/8] %v1056, 128
        %1063 = vxpose.xlu0.c.b16.cont [2/8] 0, 128
        %1064 = vxpose.xlu0.c.b16.cont [3/8] 0, 128
        %1065 = vxpose.xlu0.c.b16.cont [4/8] 0, 128
        %1066 = vxpose.xlu0.c.b16.cont [5/8] 0, 128
        %1067 = vxpose.xlu0.c.b16.cont [6/8] 0, 128
        %1068 = vxpose.xlu0.c.b16.cont [7/8] 0, 128
        %1069 = vxpose.xlu0.c.b16.end [8/8] 0, 128
        %v1070 = vpop.trf.xlu0
        %v1071 = vpop.trf.xlu0
        %v1072 = vpop.trf.xlu0
        %v1073 = vpop.trf.xlu0
        %v1074 = vpop.trf.xlu0
        %v1075 = vpop.trf.xlu0
        %v1076 = vpop.trf.xlu0
        %v1077 = vpop.trf.xlu0
        %v1079 = vsel %vm778, %v1070, 0
        %v1082 = vsel %vm778, %v1071, 0
        %v1085 = vsel %vm778, %v1072, 0
        %v1088 = vsel %vm778, %v1073, 0
        %v1091 = vsel %vm778, %v1074, 0
        %v1094 = vsel %vm778, %v1075, 0
        %v1097 = vsel %vm778, %v1076, 0
        %v1100 = vsel %vm778, %v1077, 0
        %1102 = vmatprep.subr.bf16.mxu0 0
        %1103 = vmatpush1.bf16.msra.mxu0 0
        %1104 = vmatprep.subr.bf16.mxu0 0
        %1105 = vmatpush1.bf16.msra.mxu0 0
        %1106 = vmatprep.subr.bf16.mxu0 0
        %1107 = vmatpush1.bf16.msra.mxu0 0
        %1108 = vmatprep.subr.bf16.mxu0 0
        %1109 = vmatpush1.bf16.msra.mxu0 0
        %1110 = vmatprep.subr.bf16.mxu0 0
        %1111 = vmatpush1.bf16.msra.mxu0 0
        %1112 = vmatprep.subr.bf16.mxu0 0
        %1113 = vmatpush1.bf16.msra.mxu0 0
        %1114 = vmatprep.subr.bf16.mxu0 0
        %1115 = vmatpush1.bf16.msra.mxu0 0
        %1116 = vmatprep.subr.bf16.mxu0 0
        %1117 = vmatpush1.bf16.msra.mxu0 %v1051
        %1118 = vmatprep.subr.bf16.mxu0 0
        %1119 = vmatpush2.bf16.msra.mxu0 0
        %1120 = vmatprep.subr.bf16.mxu0 0
        %1121 = vmatpush2.bf16.msra.mxu0 0
        %1122 = vmatprep.subr.bf16.mxu0 0
        %1123 = vmatpush2.bf16.msra.mxu0 0
        %1124 = vmatprep.subr.bf16.mxu0 0
        %1125 = vmatpush2.bf16.msra.mxu0 0
        %1126 = vmatprep.subr.bf16.mxu0 0
        %1127 = vmatpush2.bf16.msra.mxu0 0
        %1128 = vmatprep.subr.bf16.mxu0 0
        %1129 = vmatpush2.bf16.msra.mxu0 0
        %1130 = vmatprep.subr.bf16.mxu0 0
        %1131 = vmatpush2.bf16.msra.mxu0 0
        %1132 = vmatprep.subr.bf16.mxu0 0
        %1133 = vmatpush2.bf16.msra.mxu0 0
        %1134 = vmatprep.mubr.bf16.mxu0 0
        %1135 = vmatmul.mubr.bf16.gmra.mxu0 %v1079
        %v1136 = vpop.f32.mrf.mxu0
        %v1137 = vadd.f32 %v725, %v1136
        %v1138 = vpop.f32.mrf.mxu0
        %v1139 = vpop.f32.mrf.mxu0
        %v1140 = vadd.f32 %v726, %v1139
        %v1141 = vpop.f32.mrf.mxu0
        %1142 = vmatprep.mubr.bf16.mxu0 0
        %1143 = vmatmul.mubr.bf16.gmra.mxu0 %v1082
        %v1144 = vpop.f32.mrf.mxu0
        %v1145 = vadd.f32 %v727, %v1144
        %v1146 = vpop.f32.mrf.mxu0
        %v1147 = vpop.f32.mrf.mxu0
        %v1148 = vadd.f32 %v728, %v1147
        %v1149 = vpop.f32.mrf.mxu0
        %1150 = vmatprep.mubr.bf16.mxu0 0
        %1151 = vmatmul.mubr.bf16.gmra.mxu0 %v1085
        %v1152 = vpop.f32.mrf.mxu0
        %v1153 = vadd.f32 %v729, %v1152
        %v1154 = vpop.f32.mrf.mxu0
        %v1155 = vpop.f32.mrf.mxu0
        %v1156 = vadd.f32 %v730, %v1155
        %v1157 = vpop.f32.mrf.mxu0
        %1158 = vmatprep.mubr.bf16.mxu0 0
        %1159 = vmatmul.mubr.bf16.gmra.mxu0 %v1088
        %v1160 = vpop.f32.mrf.mxu0
        %v1161 = vadd.f32 %v731, %v1160
        %v1162 = vpop.f32.mrf.mxu0
        %v1163 = vpop.f32.mrf.mxu0
        %v1164 = vadd.f32 %v732, %v1163
        %v1165 = vpop.f32.mrf.mxu0
        %1166 = vmatprep.mubr.bf16.mxu0 0
        %1167 = vmatmul.mubr.bf16.gmra.mxu0 %v1091
        %v1168 = vpop.f32.mrf.mxu0
        %v1169 = vadd.f32 %v733, %v1168
        %v1170 = vpop.f32.mrf.mxu0
        %v1171 = vpop.f32.mrf.mxu0
        %v1172 = vadd.f32 %v734, %v1171
        %v1173 = vpop.f32.mrf.mxu0
        %1174 = vmatprep.mubr.bf16.mxu0 0
        %1175 = vmatmul.mubr.bf16.gmra.mxu0 %v1094
        %v1176 = vpop.f32.mrf.mxu0
        %v1177 = vadd.f32 %v735, %v1176
        %v1178 = vpop.f32.mrf.mxu0
        %v1179 = vpop.f32.mrf.mxu0
        %v1180 = vadd.f32 %v736, %v1179
        %v1181 = vpop.f32.mrf.mxu0
        %1182 = vmatprep.mubr.bf16.mxu0 0
        %1183 = vmatmul.mubr.bf16.gmra.mxu0 %v1097
        %v1184 = vpop.f32.mrf.mxu0
        %v1185 = vadd.f32 %v737, %v1184
        %v1186 = vpop.f32.mrf.mxu0
        %v1187 = vpop.f32.mrf.mxu0
        %v1188 = vadd.f32 %v738, %v1187
        %v1189 = vpop.f32.mrf.mxu0
        %1190 = vmatprep.mubr.bf16.mxu0 0
        %1191 = vmatmul.mubr.bf16.gmra.mxu0 %v1100
        %v1192 = vpop.f32.mrf.mxu0
        %v1193 = vadd.f32 %v739, %v1192
        %v1194 = vpop.f32.mrf.mxu0
        %v1195 = vpop.f32.mrf.mxu0
        %v1196 = vadd.f32 %v740, %v1195
        %v1197 = vpop.f32.mrf.mxu0
        %1198 = vdwg.mxu0
        %v1199 = vmax.f32 %v1137, %v1153
        %v1200 = vmax.f32 %v1140, %v1156
        %v1201 = vmax.f32 %v1145, %v1161
        %v1202 = vmax.f32 %v1148, %v1164
        %v1203 = vmax.f32 %v1199, %v1169
        %v1204 = vmax.f32 %v1200, %v1172
        %v1205 = vmax.f32 %v1201, %v1177
        %v1206 = vmax.f32 %v1202, %v1180
        %v1207 = vmax.f32 %v1203, %v1185
        %v1208 = vmax.f32 %v1204, %v1188
        %v1209 = vmax.f32 %v1205, %v1193
        %v1210 = vmax.f32 %v1206, %v1196
        %v1211 = vmax.f32 %v1207, %v1208
        %v1212 = vmax.f32 %v1209, %v1210
        %v1213 = vmax.f32 %v1211, %v1212
        %v1214 = vrot.slane %v1213, 4
        %v1215 = vmax.f32 %v1213, %v1214
        %v1216 = vrot.slane %v1215, 2
        %v1217 = vmax.f32 %v1215, %v1216
        %v1218 = vrot.slane %v1217, 1
        %v1219 = vmax.f32 %v1217, %v1218
        %v1220 = vsub.f32 %v1137, %v1219
        %v1221 = vsub.f32 %v1140, %v1219
        %v1222 = vsub.f32 %v1145, %v1219
        %v1223 = vsub.f32 %v1148, %v1219
        %v1224 = vsub.f32 %v1153, %v1219
        %v1225 = vsub.f32 %v1156, %v1219
        %v1226 = vsub.f32 %v1161, %v1219
        %v1227 = vsub.f32 %v1164, %v1219
        %v1228 = vsub.f32 %v1169, %v1219
        %v1229 = vsub.f32 %v1172, %v1219
        %v1230 = vsub.f32 %v1177, %v1219
        %v1231 = vsub.f32 %v1180, %v1219
        %v1232 = vsub.f32 %v1185, %v1219
        %v1233 = vsub.f32 %v1188, %v1219
        %v1234 = vsub.f32 %v1193, %v1219
        %v1235 = vsub.f32 %v1196, %v1219
        %v1236 = vmul.f32 %v1220, 1.442695
        %v1237 = vpow.pop %v1236
        %v1238 = vmul.f32 %v1221, 1.442695
        %v1239 = vpow.pop %v1238
        %v1240 = vmul.f32 %v1222, 1.442695
        %v1241 = vpow.pop %v1240
        %v1242 = vmul.f32 %v1223, 1.442695
        %v1243 = vpow.pop %v1242
        %v1244 = vmul.f32 %v1224, 1.442695
        %v1245 = vpow.pop %v1244
        %v1246 = vmul.f32 %v1225, 1.442695
        %v1247 = vpow.pop %v1246
        %v1248 = vmul.f32 %v1226, 1.442695
        %v1249 = vpow.pop %v1248
        %v1250 = vmul.f32 %v1227, 1.442695
        %v1251 = vpow.pop %v1250
        %v1252 = vmul.f32 %v1228, 1.442695
        %v1253 = vpow.pop %v1252
        %v1254 = vmul.f32 %v1229, 1.442695
        %v1255 = vpow.pop %v1254
        %v1256 = vmul.f32 %v1230, 1.442695
        %v1257 = vpow.pop %v1256
        %v1258 = vmul.f32 %v1231, 1.442695
        %v1259 = vpow.pop %v1258
        %v1260 = vmul.f32 %v1232, 1.442695
        %v1261 = vpow.pop %v1260
        %v1262 = vmul.f32 %v1233, 1.442695
        %v1263 = vpow.pop %v1262
        %v1264 = vmul.f32 %v1234, 1.442695
        %v1265 = vpow.pop %v1264
        %v1266 = vmul.f32 %v1235, 1.442695
        %v1267 = vpow.pop %v1266
        %v1268 = vadd.f32 %v1237, %v1239
        %v1269 = vadd.f32 %v1268, %v1241
        %v1270 = vadd.f32 %v1269, %v1243
        %v1271 = vadd.f32 %v1270, %v1245
        %v1272 = vadd.f32 %v1271, %v1247
        %v1273 = vadd.f32 %v1272, %v1249
        %v1274 = vadd.f32 %v1273, %v1251
        %v1275 = vadd.f32 %v1274, %v1253
        %v1276 = vadd.f32 %v1275, %v1255
        %v1277 = vadd.f32 %v1276, %v1257
        %v1278 = vadd.f32 %v1277, %v1259
        %v1279 = vadd.f32 %v1278, %v1261
        %v1280 = vadd.f32 %v1279, %v1263
        %v1281 = vadd.f32 %v1280, %v1265
        %v1282 = vadd.f32 %v1281, %v1267
        %v1283 = vrot.slane %v1282, 4
        %v1284 = vadd.f32 %v1282, %v1283
        %v1285 = vrot.slane %v1284, 2
        %v1286 = vadd.f32 %v1284, %v1285
        %v1287 = vrot.slane %v1286, 1
        %v1288 = vadd.f32 %v1286, %v1287
        %v1289 = vpack.c.bf16 %v1239, %v1237
        %v1290 = vpack.c.bf16 %v1243, %v1241
        %v1291 = vpack.c.bf16 %v1247, %v1245
        %v1292 = vpack.c.bf16 %v1251, %v1249
        %v1293 = vpack.c.bf16 %v1255, %v1253
        %v1294 = vpack.c.bf16 %v1259, %v1257
        %v1295 = vpack.c.bf16 %v1263, %v1261
        %v1296 = vpack.c.bf16 %v1267, %v1265
        %1297 = vmatprep.subr.bf16.mxu0 0
        %1298 = vmatpush1.bf16.msra.mxu0 %v1296
        %1299 = vmatprep.subr.bf16.mxu0 0
        %1300 = vmatpush1.bf16.msra.mxu0 %v1295
        %1301 = vmatprep.subr.bf16.mxu0 0
        %1302 = vmatpush1.bf16.msra.mxu0 %v1294
        %1303 = vmatprep.subr.bf16.mxu0 0
        %1304 = vmatpush1.bf16.msra.mxu0 %v1293
        %1305 = vmatprep.subr.bf16.mxu0 0
        %1306 = vmatpush1.bf16.msra.mxu0 %v1292
        %1307 = vmatprep.subr.bf16.mxu0 0
        %1308 = vmatpush1.bf16.msra.mxu0 %v1291
        %1309 = vmatprep.subr.bf16.mxu0 0
        %1310 = vmatpush1.bf16.msra.mxu0 %v1290
        %1311 = vmatprep.subr.bf16.mxu0 0
        %1312 = vmatpush1.bf16.msra.mxu0 %v1289
        %1313 = vmatprep.subr.bf16.mxu0 0
        %1314 = vmatpush2.bf16.msra.mxu0 0
        %1315 = vmatprep.subr.bf16.mxu0 0
        %1316 = vmatpush2.bf16.msra.mxu0 0
        %1317 = vmatprep.subr.bf16.mxu0 0
        %1318 = vmatpush2.bf16.msra.mxu0 0
        %1319 = vmatprep.subr.bf16.mxu0 0
        %1320 = vmatpush2.bf16.msra.mxu0 0
        %1321 = vmatprep.subr.bf16.mxu0 0
        %1322 = vmatpush2.bf16.msra.mxu0 0
        %1323 = vmatprep.subr.bf16.mxu0 0
        %1324 = vmatpush2.bf16.msra.mxu0 0
        %1325 = vmatprep.subr.bf16.mxu0 0
        %1326 = vmatpush2.bf16.msra.mxu0 0
        %1327 = vmatprep.subr.bf16.mxu0 0
        %1328 = vmatpush2.bf16.msra.mxu0 0
        %1329 = vmatprep.mubr.bf16.mxu0 0
        %1330 = vmatmul.mubr.bf16.gmra.mxu0 %v1061
        %v1331 = vpop.f32.mrf.mxu0
        %v1332 = vadd.f32 0.0, %v1331
        %v1333 = vpop.f32.mrf.mxu0
        %v1334 = vpop.f32.mrf.mxu0
        %v1335 = vadd.f32 0.0, %v1334
        %v1336 = vpop.f32.mrf.mxu0
        %1337 = vdwg.mxu0
        %v1338 = vrcp.pop %v1288
        %v1339 = vmul.f32 %v1332, %v1338
        %v1340 = vmul.f32 %v1335, %v1338
        %s1341 = scalar_lea.vmem [#allocation3], %s1047
        %1342 = vst [vmem:[%s1341] sm:$0xff] %v1339
        %1343 = vst [vmem:[%s1341 + $0x8] sm:$0xff] %v1340
      $region45: #{tpu_custom_call.1} parent=39 // loop_footer
        %s746 = sadd.s32 1, %s742
      $region46: #{tpu_custom_call.1} parent=39 // loop_footer_branch
        %741 = sbr.rel target = $region42
      $region47: #{tpu_custom_call.1} parent=39 // loop_exit
        _
      %v1344 = vld [vmem:[#allocation3] sm:$0xff]
      %v1345 = vld [vmem:[#allocation3 + $0x8] sm:$0xff]
      %v1346 = vld [vmem:[#allocation3 + $0x10] sm:$0xff]
      %v1347 = vld [vmem:[#allocation3 + $0x18] sm:$0xff]
      %v1348 = vld [vmem:[#allocation3 + $0x20] sm:$0xff]
      %v1349 = vld [vmem:[#allocation3 + $0x28] sm:$0xff]
      %v1350 = vld [vmem:[#allocation3 + $0x30] sm:$0xff]
      %v1351 = vld [vmem:[#allocation3 + $0x38] sm:$0xff]
      %v1352 = vpack.c.bf16 %v1345, %v1344
      %v1353 = vpack.c.bf16 %v1347, %v1346
      %v1354 = vpack.c.bf16 %v1349, %v1348
      %v1355 = vpack.c.bf16 %v1351, %v1350
      %v1356 = vld [vmem:[%s3] sm:$0xf]
      %v1357 = vld [vmem:[%s3 + $0x4] sm:$0xf]
      %v1358 = vld [vmem:[%s3 + $0x8] sm:$0xf]
      %v1359 = vld [vmem:[%s3 + $0xc] sm:$0xf]
      %v1360 = vld [vmem:[%s3 + $0x10] sm:$0xf]
      %v1361 = vld [vmem:[%s3 + $0x14] sm:$0xf]
      %v1362 = vld [vmem:[%s3 + $0x18] sm:$0xf]
      %v1363 = vld [vmem:[%s3 + $0x1c] sm:$0xf]
      %v1364 = vld [vmem:[%s4] sm:$0x1]
      %v1366 = vlaneseq
      %v1367 = vshrl.u32 %v1366, 7
      %v1368 = vsub.s32 0, %v1367
      %v1369 = vrot.slane %v1364, %v1368
      %1371 = vxpose.xlu0.c.b16.start [1/8] %v1352, 128
      %1372 = vxpose.xlu0.c.b16.cont [2/8] %v1353, 128
      %1373 = vxpose.xlu0.c.b16.cont [3/8] %v1354, 128
      %1374 = vxpose.xlu0.c.b16.cont [4/8] %v1355, 128
      %1375 = vxpose.xlu0.c.b16.cont [5/8] 0, 128
      %1376 = vxpose.xlu0.c.b16.cont [6/8] 0, 128
      %1377 = vxpose.xlu0.c.b16.cont [7/8] 0, 128
      %1378 = vxpose.xlu0.c.b16.end [8/8] 0, 128
      %v1379 = vpop.trf.xlu0
      %v1380 = vpop.trf.xlu0
      %v1381 = vpop.trf.xlu0
      %v1382 = vpop.trf.xlu0
      %v1383 = vpop.trf.xlu0
      %v1384 = vpop.trf.xlu0
      %v1385 = vpop.trf.xlu0
      %v1386 = vpop.trf.xlu0
      %v1395 = vunpack.c.l.b16 %v1356
      %v1396 = vunpack.c.l.b16 %v1357
      %v1397 = vunpack.c.l.b16 %v1358
      %v1398 = vunpack.c.l.b16 %v1359
      %v1399 = vunpack.c.l.b16 %v1360
      %v1400 = vunpack.c.l.b16 %v1361
      %v1401 = vunpack.c.l.b16 %v1362
      %v1402 = vunpack.c.l.b16 %v1363
      %v1403 = vpack.c.b16 %v1396, %v1395
      %v1404 = vpack.c.b16 %v1398, %v1397
      %v1405 = vpack.c.b16 %v1400, %v1399
      %v1406 = vpack.c.b16 %v1402, %v1401
      %v1412 = vsel %vm478, %v1379, 0
      %v1415 = vsel %vm478, %v1380, 0
      %v1418 = vsel %vm478, %v1381, 0
      %v1421 = vsel %vm478, %v1382, 0
      %v1424 = vsel %vm478, %v1383, 0
      %v1427 = vsel %vm478, %v1384, 0
      %v1430 = vsel %vm478, %v1385, 0
      %v1433 = vsel %vm478, %v1386, 0
      %1435 = vmatprep.subr.bf16.mxu0 0
      %1436 = vmatpush1.bf16.msra.mxu0 0
      %1437 = vmatprep.subr.bf16.mxu0 0
      %1438 = vmatpush1.bf16.msra.mxu0 0
      %1439 = vmatprep.subr.bf16.mxu0 0
      %1440 = vmatpush1.bf16.msra.mxu0 0
      %1441 = vmatprep.subr.bf16.mxu0 0
      %1442 = vmatpush1.bf16.msra.mxu0 0
      %1443 = vmatprep.subr.bf16.mxu0 0
      %1444 = vmatpush1.bf16.msra.mxu0 %v1406
      %1445 = vmatprep.subr.bf16.mxu0 0
      %1446 = vmatpush1.bf16.msra.mxu0 %v1405
      %1447 = vmatprep.subr.bf16.mxu0 0
      %1448 = vmatpush1.bf16.msra.mxu0 %v1404
      %1449 = vmatprep.subr.bf16.mxu0 0
      %1450 = vmatpush1.bf16.msra.mxu0 %v1403
      %1451 = vmatprep.subr.bf16.mxu0 0
      %1452 = vmatpush2.bf16.msra.mxu0 0
      %1453 = vmatprep.subr.bf16.mxu0 0
      %1454 = vmatpush2.bf16.msra.mxu0 0
      %1455 = vmatprep.subr.bf16.mxu0 0
      %1456 = vmatpush2.bf16.msra.mxu0 0
      %1457 = vmatprep.subr.bf16.mxu0 0
      %1458 = vmatpush2.bf16.msra.mxu0 0
      %1459 = vmatprep.subr.bf16.mxu0 0
      %1460 = vmatpush2.bf16.msra.mxu0 0
      %1461 = vmatprep.subr.bf16.mxu0 0
      %1462 = vmatpush2.bf16.msra.mxu0 0
      %1463 = vmatprep.subr.bf16.mxu0 0
      %1464 = vmatpush2.bf16.msra.mxu0 0
      %1465 = vmatprep.subr.bf16.mxu0 0
      %1466 = vmatpush2.bf16.msra.mxu0 0
      %1467 = vmatprep.mubr.bf16.mxu0 0
      %1468 = vmatmul.mubr.bf16.gmra.mxu0 %v1412
      %v1469 = vpop.f32.mrf.mxu0
      %v1470 = vadd.f32 %v1369, %v1469
      %v1471 = vpop.f32.mrf.mxu0
      %v1472 = vpop.f32.mrf.mxu0
      %v1473 = vadd.f32 %v1369, %v1472
      %v1474 = vpop.f32.mrf.mxu0
      %1475 = vmatprep.mubr.bf16.mxu0 0
      %1476 = vmatmul.mubr.bf16.gmra.mxu0 %v1415
      %v1477 = vpop.f32.mrf.mxu0
      %v1478 = vadd.f32 %v1369, %v1477
      %v1479 = vpop.f32.mrf.mxu0
      %v1480 = vpop.f32.mrf.mxu0
      %v1481 = vadd.f32 %v1369, %v1480
      %v1482 = vpop.f32.mrf.mxu0
      %1483 = vmatprep.mubr.bf16.mxu0 0
      %1484 = vmatmul.mubr.bf16.gmra.mxu0 %v1418
      %v1485 = vpop.f32.mrf.mxu0
      %v1486 = vadd.f32 %v1369, %v1485
      %v1487 = vpop.f32.mrf.mxu0
      %v1488 = vpop.f32.mrf.mxu0
      %v1489 = vadd.f32 %v1369, %v1488
      %v1490 = vpop.f32.mrf.mxu0
      %1491 = vmatprep.mubr.bf16.mxu0 0
      %1492 = vmatmul.mubr.bf16.gmra.mxu0 %v1421
      %v1493 = vpop.f32.mrf.mxu0
      %v1494 = vadd.f32 %v1369, %v1493
      %v1495 = vpop.f32.mrf.mxu0
      %v1496 = vpop.f32.mrf.mxu0
      %v1497 = vadd.f32 %v1369, %v1496
      %v1498 = vpop.f32.mrf.mxu0
      %1499 = vmatprep.mubr.bf16.mxu0 0
      %1500 = vmatmul.mubr.bf16.gmra.mxu0 %v1424
      %v1501 = vpop.f32.mrf.mxu0
      %v1502 = vadd.f32 %v1369, %v1501
      %v1503 = vpop.f32.mrf.mxu0
      %v1504 = vpop.f32.mrf.mxu0
      %v1505 = vadd.f32 %v1369, %v1504
      %v1506 = vpop.f32.mrf.mxu0
      %1507 = vmatprep.mubr.bf16.mxu0 0
      %1508 = vmatmul.mubr.bf16.gmra.mxu0 %v1427
      %v1509 = vpop.f32.mrf.mxu0
      %v1510 = vadd.f32 %v1369, %v1509
      %v1511 = vpop.f32.mrf.mxu0
      %v1512 = vpop.f32.mrf.mxu0
      %v1513 = vadd.f32 %v1369, %v1512
      %v1514 = vpop.f32.mrf.mxu0
      %1515 = vmatprep.mubr.bf16.mxu0 0
      %1516 = vmatmul.mubr.bf16.gmra.mxu0 %v1430
      %v1517 = vpop.f32.mrf.mxu0
      %v1518 = vadd.f32 %v1369, %v1517
      %v1519 = vpop.f32.mrf.mxu0
      %v1520 = vpop.f32.mrf.mxu0
      %v1521 = vadd.f32 %v1369, %v1520
      %v1522 = vpop.f32.mrf.mxu0
      %1523 = vmatprep.mubr.bf16.mxu0 0
      %1524 = vmatmul.mubr.bf16.gmra.mxu0 %v1433
      %v1525 = vpop.f32.mrf.mxu0
      %v1526 = vadd.f32 %v1369, %v1525
      %v1527 = vpop.f32.mrf.mxu0
      %v1528 = vpop.f32.mrf.mxu0
      %v1529 = vadd.f32 %v1369, %v1528
      %v1530 = vpop.f32.mrf.mxu0
      %1531 = vdwg.mxu0
      %1532 = vst.msk [vmem:[%s224] sm:$0xff] %vm478, %v1470
      %1533 = vst.msk [vmem:[%s224 + $0x8] sm:$0xff] %vm478, %v1473
      %1534 = vst.msk [vmem:[%s224 + $0x10] sm:$0xff] %vm478, %v1478
      %1535 = vst.msk [vmem:[%s224 + $0x18] sm:$0xff] %vm478, %v1481
      %1536 = vst.msk [vmem:[%s224 + $0x20] sm:$0xff] %vm478, %v1486
      %1537 = vst.msk [vmem:[%s224 + $0x28] sm:$0xff] %vm478, %v1489
      %1538 = vst.msk [vmem:[%s224 + $0x30] sm:$0xff] %vm478, %v1494
      %1539 = vst.msk [vmem:[%s224 + $0x38] sm:$0xff] %vm478, %v1497
      %1540 = vst.msk [vmem:[%s224 + $0x40] sm:$0xff] %vm478, %v1502
      %1541 = vst.msk [vmem:[%s224 + $0x48] sm:$0xff] %vm478, %v1505
      %1542 = vst.msk [vmem:[%s224 + $0x50] sm:$0xff] %vm478, %v1510
      %1543 = vst.msk [vmem:[%s224 + $0x58] sm:$0xff] %vm478, %v1513
      %1544 = vst.msk [vmem:[%s224 + $0x60] sm:$0xff] %vm478, %v1518
      %1545 = vst.msk [vmem:[%s224 + $0x68] sm:$0xff] %vm478, %v1521
      %1546 = vst.msk [vmem:[%s224 + $0x70] sm:$0xff] %vm478, %v1526
      %1547 = vst.msk [vmem:[%s224 + $0x78] sm:$0xff] %vm478, %v1529
      %p1548 = scmp.lt.s32.totalorder %s16, 1
      %s1549 = scalar_select %p1548, %s16, 1
      %s1550 = smul.addr %s1549, 16
      %s1551 = smul.addr %s1550, 8
      %s1552 = scalar_lea.vmem %s5, %s1551
      // Predicated region
      $region48: #{tpu_custom_call.1} parent=39 // pred_check
        %p1553 = pneg %p144
      $region49: #{tpu_custom_call.1} parent=39 // pred_check_branch
        %1555 = sbr.rel (%p1553) target = $region51
      $region50: #{tpu_custom_call.1} parent=39 // pred_region
        _
      $region51: #{tpu_custom_call.1} parent=39 // pred_fallthru
        _
    $region40: #{tpu_custom_call.1} parent=5 // pred_fallthru
      _
    %p1556 = scmp.le.s32.totalorder 2, %s11
    // Predicated region
    $region52: #{tpu_custom_call.1} parent=5 // pred_check
      %p1557 = pneg %p1556
    $region53: #{tpu_custom_call.1} parent=5 // pred_check_branch
      %1559 = sbr.rel (%p1557) target = $region55
    $region54: #{tpu_custom_call.1} parent=5 // pred_region
      %s1560 = ssub.s32 %s11, 2
      // Predicated region
      $region56: #{tpu_custom_call.1} parent=54 // pred_check
        %p1561 = pneg %p150
      $region57: #{tpu_custom_call.1} parent=54 // pred_check_branch
        %1563 = sbr.rel (%p1561) target = $region59
      $region58: #{tpu_custom_call.1} parent=54 // pred_region
        %p1564 = scmp.lt.s32.totalorder %s17, 1
        %s1565 = scalar_select %p1564, %s17, 1
        %s1566 = smul.addr %s1565, 16
        %s1567 = smul.addr %s1566, 8
        %s1568 = scalar_lea.vmem %s5, %s1567
      $region59: #{tpu_custom_call.1} parent=54 // pred_fallthru
        _
    $region55: #{tpu_custom_call.1} parent=5 // pred_fallthru
      _
  $region6: #{tpu_custom_call.1} parent=0 // loop_footer
    %s15 = sadd.s32 1, %s11
  $region7: #{tpu_custom_call.1} parent=0 // loop_footer_branch
    %10 = sbr.rel target = $region3
  $region8: #{tpu_custom_call.1} parent=0 // loop_exit
    _

// kernel: tpu_custom_call.1
$region0: #{tpu_custom_call.1}
  #allocation0 [shape = 'u32[]', space=smem, size = 0x4, offset = 0x4, fixed_abs, tag = 'smem constant byte address 0x4 - core index']
  #allocation1 [shape = 'u32[144,128]{1,0:T(1,128)}', space=vmem, size = 0x12000, scoped, tag = 'internal scratch']
  #allocation2 [shape = 'f32[192,128]{1,0:T(8,128)}', space=vmem, size = 0x18000, scoped, tag = 'scratch operand']
  #allocation3 [shape = 'f32[64,128]{1,0:T(8,128)}', space=vmem, size = 0x8000, scoped, tag = 'scratch operand']
  %s0 = inlined_call_operand.vmem [shape: f32[2,128,64], index: 0, kind: input, shape index: {}]
  %s1 = inlined_call_operand.vmem [shape: bf16[192,64], index: 1, kind: input, shape index: {}]
  %s2 = inlined_call_operand.vmem [shape: f32[192,1], index: 2, kind: input, shape index: {}]
  %s3 = inlined_call_operand.vmem [shape: bf16[64,64], index: 3, kind: input, shape index: {}]
  %s4 = inlined_call_operand.vmem [shape: f32[1,64], index: 4, kind: input, shape index: {}]
  %s5 = inlined_call_operand.vmem [shape: f32[2,128,64], index: 5, kind: output, shape index: {}]
  %s6 = sld [smem:[#allocation0]]
  $region60: #{tpu_custom_call.1} parent=0
    _
  %s8 = ssub.s32 1, %s6
  %s9 = scalar_select 0, %s8, %s6
  loop: start=0, step=1, limit=4
  $region2: #{tpu_custom_call.1} parent=0 // loop_pre_header
    _
  $region3: #{tpu_custom_call.1} parent=0 // loop_header
    %s11 = sphi 0, %s15
    %p12 = scmp.ge.s32.totalorder %s11, 4
    %s21 = sphi 0, %s23
    %s24 = sphi 0, %s21
    %s25 = sphi 0, %s24
    %s41 = sphi 0, %s25
    %s45 = sphi 0, %s45
    %s47 = sphi 0, %s45
    %s48 = sphi 0, %s47
    %s62 = sphi 0, %s48
    %s66 = sphi 0, %s66
    %s68 = sphi 0, %s66
    %s69 = sphi 0, %s68
    %s83 = sphi 0, %s69
    %s87 = sphi 0, %s87
    %s89 = sphi 0, %s87
    %s90 = sphi 0, %s89
    %s104 = sphi 0, %s90
    %s108 = sphi 0, %s108
    %s110 = sphi 0, %s108
    %s111 = sphi 0, %s110
    %s125 = sphi 0, %s111
    %s131 = sphi 0, %s133
    %s134 = sphi 0, %s131
    %s135 = sphi 0, %s134
    %s151 = sphi 0, %s135
  $region4: #{tpu_custom_call.1} parent=0 // loop_header_branch
    %14 = sbr.rel (%p12) target = $region8
  $region5: #{tpu_custom_call.1} parent=0 // loop_body
    %s16 = ssub.s32 %s11, 1
    %s17 = ssub.s32 %s11, 2
    %s18 = sadd.s32 %s11, 1
    %s19 = ssub.s32 %s11, %s18
    %p20 = scmp.eq.s32.totalorder %s19, 0
    %s22 = sadd.s32 %s21, 1
    %s23 = scalar_select %p20, %s21, %s22
    %p26 = pneg %p20
    %p27 = scmp.eq.s32.totalorder %s11, 1
    %p28 = por %p26, %p27
    %p29 = scmp.ne.s32.totalorder %s21, %s24
    %p30 = scmp.eq.s32.totalorder %s11, 0
    %p31 = por %p29, %p30
    %p32 = scmp.ne.s32.totalorder %s21, %s24
    %p33 = scmp.eq.s32.totalorder %s16, 1
    %p34 = por %p32, %p33
    %p35 = scmp.ne.s32.totalorder %s24, %s25
    %p36 = scmp.eq.s32.totalorder %s16, 0
    %p37 = por %p35, %p36
    %p38 = scmp.ne.s32.totalorder %s24, %s25
    %p39 = scmp.eq.s32.totalorder %s17, 1
    %p40 = por %p38, %p39
    %p42 = scmp.ne.s32.totalorder %s25, %s41
    %p43 = scmp.eq.s32.totalorder %s17, 0
    %p44 = por %p42, %p43
    %s46 = sadd.s32 %s45, 1
    %p49 = scmp.eq.s32.totalorder %s11, 1
    %p50 = scmp.ne.s32.totalorder %s45, %s47
    %p51 = scmp.eq.s32.totalorder %s11, 0
    %p52 = por %p50, %p51
    %p53 = scmp.ne.s32.totalorder %s45, %s47
    %p54 = scmp.eq.s32.totalorder %s16, 1
    %p55 = por %p53, %p54
    %p56 = scmp.ne.s32.totalorder %s47, %s48
    %p57 = scmp.eq.s32.totalorder %s16, 0
    %p58 = por %p56, %p57
    %p59 = scmp.ne.s32.totalorder %s47, %s48
    %p60 = scmp.eq.s32.totalorder %s17, 1
    %p61 = por %p59, %p60
    %p63 = scmp.ne.s32.totalorder %s48, %s62
    %p64 = scmp.eq.s32.totalorder %s17, 0
    %p65 = por %p63, %p64
    %s67 = sadd.s32 %s66, 1
    %p70 = scmp.eq.s32.totalorder %s11, 1
    %p71 = scmp.ne.s32.totalorder %s66, %s68
    %p72 = scmp.eq.s32.totalorder %s11, 0
    %p73 = por %p71, %p72
    %p74 = scmp.ne.s32.totalorder %s66, %s68
    %p75 = scmp.eq.s32.totalorder %s16, 1
    %p76 = por %p74, %p75
    %p77 = scmp.ne.s32.totalorder %s68, %s69
    %p78 = scmp.eq.s32.totalorder %s16, 0
    %p79 = por %p77, %p78
    %p80 = scmp.ne.s32.totalorder %s68, %s69
    %p81 = scmp.eq.s32.totalorder %s17, 1
    %p82 = por %p80, %p81
    %p84 = scmp.ne.s32.totalorder %s69, %s83
    %p85 = scmp.eq.s32.totalorder %s17, 0
    %p86 = por %p84, %p85
    %s88 = sadd.s32 %s87, 1
    %p91 = scmp.eq.s32.totalorder %s11, 1
    %p92 = scmp.ne.s32.totalorder %s87, %s89
    %p93 = scmp.eq.s32.totalorder %s11, 0
    %p94 = por %p92, %p93
    %p95 = scmp.ne.s32.totalorder %s87, %s89
    %p96 = scmp.eq.s32.totalorder %s16, 1
    %p97 = por %p95, %p96
    %p98 = scmp.ne.s32.totalorder %s89, %s90
    %p99 = scmp.eq.s32.totalorder %s16, 0
    %p100 = por %p98, %p99
    %p101 = scmp.ne.s32.totalorder %s89, %s90
    %p102 = scmp.eq.s32.totalorder %s17, 1
    %p103 = por %p101, %p102
    %p105 = scmp.ne.s32.totalorder %s90, %s104
    %p106 = scmp.eq.s32.totalorder %s17, 0
    %p107 = por %p105, %p106
    %s109 = sadd.s32 %s108, 1
    %p112 = scmp.eq.s32.totalorder %s11, 1
    %p113 = scmp.ne.s32.totalorder %s108, %s110
    %p114 = scmp.eq.s32.totalorder %s11, 0
    %p115 = por %p113, %p114
    %p116 = scmp.ne.s32.totalorder %s108, %s110
    %p117 = scmp.eq.s32.totalorder %s16, 1
    %p118 = por %p116, %p117
    %p119 = scmp.ne.s32.totalorder %s110, %s111
    %p120 = scmp.eq.s32.totalorder %s16, 0
    %p121 = por %p119, %p120
    %p122 = scmp.ne.s32.totalorder %s110, %s111
    %p123 = scmp.eq.s32.totalorder %s17, 1
    %p124 = por %p122, %p123
    %p126 = scmp.ne.s32.totalorder %s111, %s125
    %p127 = scmp.eq.s32.totalorder %s17, 0
    %p128 = por %p126, %p127
    %s129 = ssub.s32 %s11, %s18
    %p130 = scmp.eq.s32.totalorder %s129, 0
    %s132 = sadd.s32 %s131, 1
    %s133 = scalar_select %p130, %s131, %s132
    %p136 = pneg %p130
    %p137 = scmp.eq.s32.totalorder %s11, 1
    %p138 = por %p136, %p137
    %p139 = scmp.ne.s32.totalorder %s131, %s134
    %p140 = scmp.eq.s32.totalorder %s11, 0
    %p141 = por %p139, %p140
    %p142 = scmp.ne.s32.totalorder %s131, %s134
    %p143 = scmp.eq.s32.totalorder %s16, 1
    %p144 = por %p142, %p143
    %p145 = scmp.ne.s32.totalorder %s134, %s135
    %p146 = scmp.eq.s32.totalorder %s16, 0
    %p147 = por %p145, %p146
    %p148 = scmp.ne.s32.totalorder %s134, %s135
    %p149 = scmp.eq.s32.totalorder %s17, 1
    %p150 = por %p148, %p149
    %p152 = scmp.ne.s32.totalorder %s135, %s151
    %p153 = scmp.eq.s32.totalorder %s17, 0
    %p154 = por %p152, %p153
    %p155 = scmp.le.s32.totalorder 1, %s11
    %p156 = scmp.lt.s32.totalorder %s11, 3
    %p157 = pnand %p155, %p156
    %p158 = pneg %p157
    // Predicated region
    $region9: #{tpu_custom_call.1} parent=5 // pred_check
      _
    $region10: #{tpu_custom_call.1} parent=5 // pred_check_branch
      %160 = sbr.rel (%p157) target = $region12
    $region11: #{tpu_custom_call.1} parent=5 // pred_region
      %s161 = ssub.s32 %s11, 1
      // Predicated region
      $region13: #{tpu_custom_call.1} parent=11 // pred_check
        %p162 = pneg %p58
      $region14: #{tpu_custom_call.1} parent=11 // pred_check_branch
        %164 = sbr.rel (%p162) target = $region16
      $region15: #{tpu_custom_call.1} parent=11 // pred_region
        _
      $region16: #{tpu_custom_call.1} parent=11 // pred_fallthru
        _
      // Predicated region
      $region17: #{tpu_custom_call.1} parent=11 // pred_check
        %p165 = pneg %p79
      $region18: #{tpu_custom_call.1} parent=11 // pred_check_branch
        %167 = sbr.rel (%p165) target = $region20
      $region19: #{tpu_custom_call.1} parent=11 // pred_region
        _
      $region20: #{tpu_custom_call.1} parent=11 // pred_fallthru
        _
      // Predicated region
      $region21: #{tpu_custom_call.1} parent=11 // pred_check
        %p168 = pneg %p100
      $region22: #{tpu_custom_call.1} parent=11 // pred_check_branch
        %170 = sbr.rel (%p168) target = $region24
      $region23: #{tpu_custom_call.1} parent=11 // pred_region
        _
      $region24: #{tpu_custom_call.1} parent=11 // pred_fallthru
        _
      // Predicated region
      $region25: #{tpu_custom_call.1} parent=11 // pred_check
        %p171 = pneg %p121
      $region26: #{tpu_custom_call.1} parent=11 // pred_check_branch
        %173 = sbr.rel (%p171) target = $region28
      $region27: #{tpu_custom_call.1} parent=11 // pred_region
        _
      $region28: #{tpu_custom_call.1} parent=11 // pred_fallthru
        _
    $region12: #{tpu_custom_call.1} parent=5 // pred_fallthru
      _
    %p174 = scmp.lt.s32.totalorder %s11, 2
    // Predicated region
    $region29: #{tpu_custom_call.1} parent=5 // pred_check
      %p175 = pneg %p174
    $region30: #{tpu_custom_call.1} parent=5 // pred_check_branch
      %177 = sbr.rel (%p175) target = $region32
    $region31: #{tpu_custom_call.1} parent=5 // pred_region
      // Predicated region
      $region33: #{tpu_custom_call.1} parent=31 // pred_check
        %p178 = pneg %p31
      $region34: #{tpu_custom_call.1} parent=31 // pred_check_branch
        %180 = sbr.rel (%p178) target = $region36
      $region35: #{tpu_custom_call.1} parent=31 // pred_region
        %p181 = scmp.lt.s32.totalorder %s11, 1
        %s182 = scalar_select %p181, %s11, 1
        %s183 = smul.addr %s182, 16
        %s184 = smul.addr %s183, 8
        %s185 = scalar_lea.vmem %s0, %s184
      $region36: #{tpu_custom_call.1} parent=31 // pred_fallthru
        _
    $region32: #{tpu_custom_call.1} parent=5 // pred_fallthru
      _
    %p186 = scmp.le.s32.totalorder 1, %s11
    %p187 = scmp.lt.s32.totalorder %s11, 3
    %p188 = pnand %p186, %p187
    %p189 = pneg %p188
    // Predicated region
    $region37: #{tpu_custom_call.1} parent=5 // pred_check
      _
    $region38: #{tpu_custom_call.1} parent=5 // pred_check_branch
      %191 = sbr.rel (%p188) target = $region40
    $region39: #{tpu_custom_call.1} parent=5 // pred_region
      %s192 = ssub.s32 %s11, 1
      %p193 = scmp.lt.s32.totalorder %s16, 1
      %s194 = scalar_select %p193, %s16, 1
      %s195 = smul.addr %s194, 16
      %s196 = smul.addr %s195, 8
      %s197 = scalar_lea.vmem %s0, %s196
      %p198 = pneg %p37
      %p199 = pneg %p34
      %p200 = pneg %p58
      %p201 = pneg %p55
      %p202 = pneg %p79
      %p203 = pneg %p76
      %p204 = pneg %p100
      %p205 = pneg %p97
      %p206 = pneg %p121
      %p207 = pneg %p118
      %p208 = pneg %p147
      %p209 = pneg %p144
      %p210 = scmp.lt.s32.totalorder %s16, 1
      %s211 = scalar_select %p210, %s16, 1
      %s212 = smul.addr %s211, 16
      %s213 = smul.addr %s212, 8
      %s214 = scalar_lea.vmem %s5, %s213
      %p215 = scmp.lt.s32.totalorder %s16, 1
      %s216 = scalar_select %p215, %s16, 1
      %s217 = smul.addr %s216, 16
      %s218 = smul.addr %s217, 8
      %s219 = scalar_lea.vmem %s0, %s218
      %p220 = scmp.lt.s32.totalorder %s16, 1
      %s221 = scalar_select %p220, %s16, 1
      %s222 = smul.addr %s221, 16
      %s223 = smul.addr %s222, 8
      %s224 = scalar_lea.vmem %s5, %s223
      %v226 = vld [vmem:[%s219] sm:$0xff]
      %v227 = vld [vmem:[%s219 + $0x8] sm:$0xff]
      %v228 = vld [vmem:[%s219 + $0x10] sm:$0xff]
      %v229 = vld [vmem:[%s219 + $0x18] sm:$0xff]
      %v230 = vld [vmem:[%s219 + $0x20] sm:$0xff]
      %v231 = vld [vmem:[%s219 + $0x28] sm:$0xff]
      %v232 = vld [vmem:[%s219 + $0x30] sm:$0xff]
      %v233 = vld [vmem:[%s219 + $0x38] sm:$0xff]
      %v234 = vld [vmem:[%s219 + $0x40] sm:$0xff]
      %v235 = vld [vmem:[%s219 + $0x48] sm:$0xff]
      %v236 = vld [vmem:[%s219 + $0x50] sm:$0xff]
      %v237 = vld [vmem:[%s219 + $0x58] sm:$0xff]
      %v238 = vld [vmem:[%s219 + $0x60] sm:$0xff]
      %v239 = vld [vmem:[%s219 + $0x68] sm:$0xff]
      %v240 = vld [vmem:[%s219 + $0x70] sm:$0xff]
      %v241 = vld [vmem:[%s219 + $0x78] sm:$0xff]
      %v242 = vpack.c.bf16 %v227, %v226
      %v243 = vpack.c.bf16 %v229, %v228
      %v244 = vpack.c.bf16 %v231, %v230
      %v245 = vpack.c.bf16 %v233, %v232
      %v246 = vpack.c.bf16 %v235, %v234
      %v247 = vpack.c.bf16 %v237, %v236
      %v248 = vpack.c.bf16 %v239, %v238
      %v249 = vpack.c.bf16 %v241, %v240
      %v250 = vld [vmem:[%s1] sm:$0xf]
      %v251 = vld [vmem:[%s1 + $0x4] sm:$0xf]
      %v252 = vld [vmem:[%s1 + $0x8] sm:$0xf]
      %v253 = vld [vmem:[%s1 + $0xc] sm:$0xf]
      %v254 = vld [vmem:[%s1 + $0x10] sm:$0xf]
      %v255 = vld [vmem:[%s1 + $0x14] sm:$0xf]
      %v256 = vld [vmem:[%s1 + $0x18] sm:$0xf]
      %v257 = vld [vmem:[%s1 + $0x1c] sm:$0xf]
      %v258 = vld [vmem:[%s1 + $0x20] sm:$0xf]
      %v259 = vld [vmem:[%s1 + $0x24] sm:$0xf]
      %v260 = vld [vmem:[%s1 + $0x28] sm:$0xf]
      %v261 = vld [vmem:[%s1 + $0x2c] sm:$0xf]
      %v262 = vld [vmem:[%s1 + $0x30] sm:$0xf]
      %v263 = vld [vmem:[%s1 + $0x34] sm:$0xf]
      %v264 = vld [vmem:[%s1 + $0x38] sm:$0xf]
      %v265 = vld [vmem:[%s1 + $0x3c] sm:$0xf]
      %v266 = vld [vmem:[%s1 + $0x40] sm:$0xf]
      %v267 = vld [vmem:[%s1 + $0x44] sm:$0xf]
      %v268 = vld [vmem:[%s1 + $0x48] sm:$0xf]
      %v269 = vld [vmem:[%s1 + $0x4c] sm:$0xf]
      %v270 = vld [vmem:[%s1 + $0x50] sm:$0xf]
      %v271 = vld [vmem:[%s1 + $0x54] sm:$0xf]
      %v272 = vld [vmem:[%s1 + $0x58] sm:$0xf]
      %v273 = vld [vmem:[%s1 + $0x5c] sm:$0xf]
      %v274 = vld [vmem:[%s2] sm:$0xff]
      %v275 = vld [vmem:[%s2 + $0x8] sm:$0xff]
      %v276 = vld [vmem:[%s2 + $0x10] sm:$0xff]
      %v277 = vld [vmem:[%s2 + $0x18] sm:$0xff]
      %v278 = vld [vmem:[%s2 + $0x20] sm:$0xff]
      %v279 = vld [vmem:[%s2 + $0x28] sm:$0xff]
      %v280 = vld [vmem:[%s2 + $0x30] sm:$0xff]
      %v281 = vld [vmem:[%s2 + $0x38] sm:$0xff]
      %v282 = vld [vmem:[%s2 + $0x40] sm:$0xff]
      %v283 = vld [vmem:[%s2 + $0x48] sm:$0xff]
      %v284 = vld [vmem:[%s2 + $0x50] sm:$0xff]
      %v285 = vld [vmem:[%s2 + $0x58] sm:$0xff]
      %v286 = vld [vmem:[%s2 + $0x60] sm:$0xff]
      %v287 = vld [vmem:[%s2 + $0x68] sm:$0xff]
      %v288 = vld [vmem:[%s2 + $0x70] sm:$0xff]
      %v289 = vld [vmem:[%s2 + $0x78] sm:$0xff]
      %v290 = vld [vmem:[%s2 + $0x80] sm:$0xff]
      %v291 = vld [vmem:[%s2 + $0x88] sm:$0xff]
      %v292 = vld [vmem:[%s2 + $0x90] sm:$0xff]
      %v293 = vld [vmem:[%s2 + $0x98] sm:$0xff]
      %v294 = vld [vmem:[%s2 + $0xa0] sm:$0xff]
      %v295 = vld [vmem:[%s2 + $0xa8] sm:$0xff]
      %v296 = vld [vmem:[%s2 + $0xb0] sm:$0xff]
      %v297 = vld [vmem:[%s2 + $0xb8] sm:$0xff]
      %299 = vset.pattern.permute.xlu0 0
      %300 = vperm.xlu0 %299, %v274
      %v301 = vpop.permute.xlu0 %300
      %304 = vset.pattern.permute.xlu0 0
      %305 = vperm.xlu0 %304, %v275
      %v306 = vpop.permute.xlu0 %305
      %309 = vset.pattern.permute.xlu0 0
      %310 = vperm.xlu0 %309, %v276
      %v311 = vpop.permute.xlu0 %310
      %314 = vset.pattern.permute.xlu0 0
      %315 = vperm.xlu0 %314, %v277
      %v316 = vpop.permute.xlu0 %315
      %319 = vset.pattern.permute.xlu0 0
      %320 = vperm.xlu0 %319, %v278
      %v321 = vpop.permute.xlu0 %320
      %324 = vset.pattern.permute.xlu0 0
      %325 = vperm.xlu0 %324, %v279
      %v326 = vpop.permute.xlu0 %325
      %329 = vset.pattern.permute.xlu0 0
      %330 = vperm.xlu0 %329, %v280
      %v331 = vpop.permute.xlu0 %330
      %334 = vset.pattern.permute.xlu0 0
      %335 = vperm.xlu0 %334, %v281
      %v336 = vpop.permute.xlu0 %335
      %339 = vset.pattern.permute.xlu0 0
      %340 = vperm.xlu0 %339, %v282
      %v341 = vpop.permute.xlu0 %340
      %344 = vset.pattern.permute.xlu0 0
      %345 = vperm.xlu0 %344, %v283
      %v346 = vpop.permute.xlu0 %345
      %349 = vset.pattern.permute.xlu0 0
      %350 = vperm.xlu0 %349, %v284
      %v351 = vpop.permute.xlu0 %350
      %354 = vset.pattern.permute.xlu0 0
      %355 = vperm.xlu0 %354, %v285
      %v356 = vpop.permute.xlu0 %355
      %359 = vset.pattern.permute.xlu0 0
      %360 = vperm.xlu0 %359, %v286
      %v361 = vpop.permute.xlu0 %360
      %364 = vset.pattern.permute.xlu0 0
      %365 = vperm.xlu0 %364, %v287
      %v366 = vpop.permute.xlu0 %365
      %369 = vset.pattern.permute.xlu0 0
      %370 = vperm.xlu0 %369, %v288
      %v371 = vpop.permute.xlu0 %370
      %374 = vset.pattern.permute.xlu0 0
      %375 = vperm.xlu0 %374, %v289
      %v376 = vpop.permute.xlu0 %375
      %379 = vset.pattern.permute.xlu0 0
      %380 = vperm.xlu0 %379, %v290
      %v381 = vpop.permute.xlu0 %380
      %384 = vset.pattern.permute.xlu0 0
      %385 = vperm.xlu0 %384, %v291
      %v386 = vpop.permute.xlu0 %385
      %389 = vset.pattern.permute.xlu0 0
      %390 = vperm.xlu0 %389, %v292
      %v391 = vpop.permute.xlu0 %390
      %394 = vset.pattern.permute.xlu0 0
      %395 = vperm.xlu0 %394, %v293
      %v396 = vpop.permute.xlu0 %395
      %399 = vset.pattern.permute.xlu0 0
      %400 = vperm.xlu0 %399, %v294
      %v401 = vpop.permute.xlu0 %400
      %404 = vset.pattern.permute.xlu0 0
      %405 = vperm.xlu0 %404, %v295
      %v406 = vpop.permute.xlu0 %405
      %409 = vset.pattern.permute.xlu0 0
      %410 = vperm.xlu0 %409, %v296
      %v411 = vpop.permute.xlu0 %410
      %414 = vset.pattern.permute.xlu0 0
      %415 = vperm.xlu0 %414, %v297
      %v416 = vpop.permute.xlu0 %415
      %v442 = vunpack.c.l.b16 %v250
      %v443 = vunpack.c.l.b16 %v251
      %v444 = vunpack.c.l.b16 %v252
      %v445 = vunpack.c.l.b16 %v253
      %v446 = vunpack.c.l.b16 %v254
      %v447 = vunpack.c.l.b16 %v255
      %v448 = vunpack.c.l.b16 %v256
      %v449 = vunpack.c.l.b16 %v257
      %v450 = vunpack.c.l.b16 %v258
      %v451 = vunpack.c.l.b16 %v259
      %v452 = vunpack.c.l.b16 %v260
      %v453 = vunpack.c.l.b16 %v261
      %v454 = vunpack.c.l.b16 %v262
      %v455 = vunpack.c.l.b16 %v263
      %v456 = vunpack.c.l.b16 %v264
      %v457 = vunpack.c.l.b16 %v265
      %v458 = vunpack.c.l.b16 %v266
      %v459 = vunpack.c.l.b16 %v267
      %v460 = vunpack.c.l.b16 %v268
      %v461 = vunpack.c.l.b16 %v269
      %v462 = vunpack.c.l.b16 %v270
      %v463 = vunpack.c.l.b16 %v271
      %v464 = vunpack.c.l.b16 %v272
      %v465 = vunpack.c.l.b16 %v273
      %v466 = vpack.c.b16 %v443, %v442
      %v467 = vpack.c.b16 %v445, %v444
      %v468 = vpack.c.b16 %v447, %v446
      %v469 = vpack.c.b16 %v449, %v448
      %v470 = vpack.c.b16 %v451, %v450
      %v471 = vpack.c.b16 %v453, %v452
      %v472 = vpack.c.b16 %v455, %v454
      %v473 = vpack.c.b16 %v457, %v456
      %v474 = vpack.c.b16 %v459, %v458
      %v475 = vpack.c.b16 %v461, %v460
      %v476 = vpack.c.b16 %v463, %v462
      %v477 = vpack.c.b16 %v465, %v464
      %vm478 = vcmask 523264
      %v480 = vsel %vm478, %v466, 0
      %v483 = vsel %vm478, %v467, 0
      %v486 = vsel %vm478, %v468, 0
      %v489 = vsel %vm478, %v469, 0
      %v492 = vsel %vm478, %v470, 0
      %v495 = vsel %vm478, %v471, 0
      %v498 = vsel %vm478, %v472, 0
      %v501 = vsel %vm478, %v473, 0
      %v504 = vsel %vm478, %v474, 0
      %v507 = vsel %vm478, %v475, 0
      %v510 = vsel %vm478, %v476, 0
      %v513 = vsel %vm478, %v477, 0
      %v516 = vsel %vm478, %v242, 0
      %v519 = vsel %vm478, %v243, 0
      %v522 = vsel %vm478, %v244, 0
      %v525 = vsel %vm478, %v245, 0
      %v528 = vsel %vm478, %v246, 0
      %v531 = vsel %vm478, %v247, 0
      %v534 = vsel %vm478, %v248, 0
      %v537 = vsel %vm478, %v249, 0
      %539 = vmatprep.subr.bf16.mxu0 0
      %540 = vmatpush1.bf16.xpose.msra.mxu0 %v537
      %541 = vmatprep.subr.bf16.mxu0 0
      %542 = vmatpush1.bf16.xpose.msra.mxu0 %v534
      %543 = vmatprep.subr.bf16.mxu0 0
      %544 = vmatpush1.bf16.xpose.msra.mxu0 %v531
      %545 = vmatprep.subr.bf16.mxu0 0
      %546 = vmatpush1.bf16.xpose.msra.mxu0 %v528
      %547 = vmatprep.subr.bf16.mxu0 0
      %548 = vmatpush1.bf16.xpose.msra.mxu0 %v525
      %549 = vmatprep.subr.bf16.mxu0 0
      %550 = vmatpush1.bf16.xpose.msra.mxu0 %v522
      %551 = vmatprep.subr.bf16.mxu0 0
      %552 = vmatpush1.bf16.xpose.msra.mxu0 %v519
      %553 = vmatprep.subr.bf16.mxu0 0
      %554 = vmatpush1.bf16.xpose.msra.mxu0 %v516
      %555 = vmatprep.subr.bf16.mxu0 0
      %556 = vmatpush2.bf16.xpose.msra.mxu0 0
      %557 = vmatprep.subr.bf16.mxu0 0
      %558 = vmatpush2.bf16.xpose.msra.mxu0 0
      %559 = vmatprep.subr.bf16.mxu0 0
      %560 = vmatpush2.bf16.xpose.msra.mxu0 0
      %561 = vmatprep.subr.bf16.mxu0 0
      %562 = vmatpush2.bf16.xpose.msra.mxu0 0
      %563 = vmatprep.subr.bf16.mxu0 0
      %564 = vmatpush2.bf16.xpose.msra.mxu0 0
      %565 = vmatprep.subr.bf16.mxu0 0
      %566 = vmatpush2.bf16.xpose.msra.mxu0 0
      %567 = vmatprep.subr.bf16.mxu0 0
      %568 = vmatpush2.bf16.xpose.msra.mxu0 0
      %569 = vmatprep.subr.bf16.mxu0 0
      %570 = vmatpush2.bf16.xpose.msra.mxu0 0
      %571 = vmatprep.mubr.bf16.mxu0 0
      %572 = vmatmul.mubr.bf16.gmra.mxu0 %v480
      %v573 = vpop.f32.mrf.mxu0
      %v574 = vadd.f32 %v301, %v573
      %v575 = vpop.f32.mrf.mxu0
      %v576 = vpop.f32.mrf.mxu0
      %v577 = vadd.f32 %v306, %v576
      %v578 = vpop.f32.mrf.mxu0
      %579 = vmatprep.mubr.bf16.mxu0 0
      %580 = vmatmul.mubr.bf16.gmra.mxu0 %v483
      %v581 = vpop.f32.mrf.mxu0
      %v582 = vadd.f32 %v311, %v581
      %v583 = vpop.f32.mrf.mxu0
      %v584 = vpop.f32.mrf.mxu0
      %v585 = vadd.f32 %v316, %v584
      %v586 = vpop.f32.mrf.mxu0
      %587 = vmatprep.mubr.bf16.mxu0 0
      %588 = vmatmul.mubr.bf16.gmra.mxu0 %v486
      %v589 = vpop.f32.mrf.mxu0
      %v590 = vadd.f32 %v321, %v589
      %v591 = vpop.f32.mrf.mxu0
      %v592 = vpop.f32.mrf.mxu0
      %v593 = vadd.f32 %v326, %v592
      %v594 = vpop.f32.mrf.mxu0
      %595 = vmatprep.mubr.bf16.mxu0 0
      %596 = vmatmul.mubr.bf16.gmra.mxu0 %v489
      %v597 = vpop.f32.mrf.mxu0
      %v598 = vadd.f32 %v331, %v597
      %v599 = vpop.f32.mrf.mxu0
      %v600 = vpop.f32.mrf.mxu0
      %v601 = vadd.f32 %v336, %v600
      %v602 = vpop.f32.mrf.mxu0
      %603 = vmatprep.mubr.bf16.mxu0 0
      %604 = vmatmul.mubr.bf16.gmra.mxu0 %v492
      %v605 = vpop.f32.mrf.mxu0
      %v606 = vadd.f32 %v341, %v605
      %v607 = vpop.f32.mrf.mxu0
      %v608 = vpop.f32.mrf.mxu0
      %v609 = vadd.f32 %v346, %v608
      %v610 = vpop.f32.mrf.mxu0
      %611 = vmatprep.mubr.bf16.mxu0 0
      %612 = vmatmul.mubr.bf16.gmra.mxu0 %v495
      %v613 = vpop.f32.mrf.mxu0
      %v614 = vadd.f32 %v351, %v613
      %v615 = vpop.f32.mrf.mxu0
      %v616 = vpop.f32.mrf.mxu0
      %v617 = vadd.f32 %v356, %v616
      %v618 = vpop.f32.mrf.mxu0
      %619 = vmatprep.mubr.bf16.mxu0 0
      %620 = vmatmul.mubr.bf16.gmra.mxu0 %v498
      %v621 = vpop.f32.mrf.mxu0
      %v622 = vadd.f32 %v361, %v621
      %v623 = vpop.f32.mrf.mxu0
      %v624 = vpop.f32.mrf.mxu0
      %v625 = vadd.f32 %v366, %v624
      %v626 = vpop.f32.mrf.mxu0
      %627 = vmatprep.mubr.bf16.mxu0 0
      %628 = vmatmul.mubr.bf16.gmra.mxu0 %v501
      %v629 = vpop.f32.mrf.mxu0
      %v630 = vadd.f32 %v371, %v629
      %v631 = vpop.f32.mrf.mxu0
      %v632 = vpop.f32.mrf.mxu0
      %v633 = vadd.f32 %v376, %v632
      %v634 = vpop.f32.mrf.mxu0
      %635 = vmatprep.mubr.bf16.mxu0 0
      %636 = vmatmul.mubr.bf16.gmra.mxu0 %v504
      %v637 = vpop.f32.mrf.mxu0
      %v638 = vadd.f32 %v381, %v637
      %v639 = vpop.f32.mrf.mxu0
      %v640 = vpop.f32.mrf.mxu0
      %v641 = vadd.f32 %v386, %v640
      %v642 = vpop.f32.mrf.mxu0
      %643 = vmatprep.mubr.bf16.mxu0 0
      %644 = vmatmul.mubr.bf16.gmra.mxu0 %v507
      %v645 = vpop.f32.mrf.mxu0
      %v646 = vadd.f32 %v391, %v645
      %v647 = vpop.f32.mrf.mxu0
      %v648 = vpop.f32.mrf.mxu0
      %v649 = vadd.f32 %v396, %v648
      %v650 = vpop.f32.mrf.mxu0
      %651 = vmatprep.mubr.bf16.mxu0 0
      %652 = vmatmul.mubr.bf16.gmra.mxu0 %v510
      %v653 = vpop.f32.mrf.mxu0
      %v654 = vadd.f32 %v401, %v653
      %v655 = vpop.f32.mrf.mxu0
      %v656 = vpop.f32.mrf.mxu0
      %v657 = vadd.f32 %v406, %v656
      %v658 = vpop.f32.mrf.mxu0
      %659 = vmatprep.mubr.bf16.mxu0 0
      %660 = vmatmul.mubr.bf16.gmra.mxu0 %v513
      %v661 = vpop.f32.mrf.mxu0
      %v662 = vadd.f32 %v411, %v661
      %v663 = vpop.f32.mrf.mxu0
      %v664 = vpop.f32.mrf.mxu0
      %v665 = vadd.f32 %v416, %v664
      %v666 = vpop.f32.mrf.mxu0
      %667 = vdwg.mxu0
      %668 = vst [vmem:[#allocation2] sm:$0xff] %v574
      %669 = vst [vmem:[#allocation2 + $0x8] sm:$0xff] %v577
      %670 = vst [vmem:[#allocation2 + $0x10] sm:$0xff] %v582
      %671 = vst [vmem:[#allocation2 + $0x18] sm:$0xff] %v585
      %672 = vst [vmem:[#allocation2 + $0x20] sm:$0xff] %v590
      %673 = vst [vmem:[#allocation2 + $0x28] sm:$0xff] %v593
      %674 = vst [vmem:[#allocation2 + $0x30] sm:$0xff] %v598
      %675 = vst [vmem:[#allocation2 + $0x38] sm:$0xff] %v601
      %676 = vst [vmem:[#allocation2 + $0x40] sm:$0xff] %v606
      %677 = vst [vmem:[#allocation2 + $0x48] sm:$0xff] %v609
      %678 = vst [vmem:[#allocation2 + $0x50] sm:$0xff] %v614
      %679 = vst [vmem:[#allocation2 + $0x58] sm:$0xff] %v617
      %680 = vst [vmem:[#allocation2 + $0x60] sm:$0xff] %v622
      %681 = vst [vmem:[#allocation2 + $0x68] sm:$0xff] %v625
      %682 = vst [vmem:[#allocation2 + $0x70] sm:$0xff] %v630
      %683 = vst [vmem:[#allocation2 + $0x78] sm:$0xff] %v633
      %684 = vst [vmem:[#allocation2 + $0x80] sm:$0xff] %v638
      %685 = vst [vmem:[#allocation2 + $0x88] sm:$0xff] %v641
      %686 = vst [vmem:[#allocation2 + $0x90] sm:$0xff] %v646
      %687 = vst [vmem:[#allocation2 + $0x98] sm:$0xff] %v649
      %688 = vst [vmem:[#allocation2 + $0xa0] sm:$0xff] %v654
      %689 = vst [vmem:[#allocation2 + $0xa8] sm:$0xff] %v657
      %690 = vst [vmem:[#allocation2 + $0xb0] sm:$0xff] %v662
      %691 = vst [vmem:[#allocation2 + $0xb8] sm:$0xff] %v665
      %v692 = vlaneseq
      %v693 = vshrl.u32 %v692, 7
      %v694 = vadd.s32 %v693, 8
      %v695 = vadd.s32 %v693, 16
      %v696 = vadd.s32 %v693, 24
      %v697 = vadd.s32 %v693, 32
      %v698 = vadd.s32 %v693, 40
      %v699 = vadd.s32 %v693, 48
      %v700 = vadd.s32 %v693, 56
      %v701 = vadd.s32 %v693, 64
      %v702 = vadd.s32 %v693, 72
      %v703 = vadd.s32 %v693, 80
      %v704 = vadd.s32 %v693, 88
      %v705 = vadd.s32 %v693, 96
      %v706 = vadd.s32 %v693, 104
      %v707 = vadd.s32 %v693, 112
      %v708 = vadd.s32 %v693, 120
      %vm709 = vcmp.lt.s32.totalorder %v693, 8
      %vm710 = vcmp.lt.s32.totalorder %v694, 8
      %vm711 = vcmp.lt.s32.totalorder %v695, 8
      %vm712 = vcmp.lt.s32.totalorder %v696, 8
      %vm713 = vcmp.lt.s32.totalorder %v697, 8
      %vm714 = vcmp.lt.s32.totalorder %v698, 8
      %vm715 = vcmp.lt.s32.totalorder %v699, 8
      %vm716 = vcmp.lt.s32.totalorder %v700, 8
      %vm717 = vcmp.lt.s32.totalorder %v701, 8
      %vm718 = vcmp.lt.s32.totalorder %v702, 8
      %vm719 = vcmp.lt.s32.totalorder %v703, 8
      %vm720 = vcmp.lt.s32.totalorder %v704, 8
      %vm721 = vcmp.lt.s32.totalorder %v705, 8
      %vm722 = vcmp.lt.s32.totalorder %v706, 8
      %vm723 = vcmp.lt.s32.totalorder %v707, 8
      %vm724 = vcmp.lt.s32.totalorder %v708, 8
      %v725 = vsel %vm709, 0.0, -1e+30
      %v726 = vsel %vm710, 0.0, -1e+30
      %v727 = vsel %vm711, 0.0, -1e+30
      %v728 = vsel %vm712, 0.0, -1e+30
      %v729 = vsel %vm713, 0.0, -1e+30
      %v730 = vsel %vm714, 0.0, -1e+30
      %v731 = vsel %vm715, 0.0, -1e+30
      %v732 = vsel %vm716, 0.0, -1e+30
      %v733 = vsel %vm717, 0.0, -1e+30
      %v734 = vsel %vm718, 0.0, -1e+30
      %v735 = vsel %vm719, 0.0, -1e+30
      %v736 = vsel %vm720, 0.0, -1e+30
      %v737 = vsel %vm721, 0.0, -1e+30
      %v738 = vsel %vm722, 0.0, -1e+30
      %v739 = vsel %vm723, 0.0, -1e+30
      %v740 = vsel %vm724, 0.0, -1e+30
      loop: start=0, step=1, limit=2
      $region41: #{tpu_custom_call.1} parent=39 // loop_pre_header
        _
      $region42: #{tpu_custom_call.1} parent=39 // loop_header
        %s742 = sphi 0, %s746
        %p743 = scmp.ge.s32.totalorder %s742, 2
      $region43: #{tpu_custom_call.1} parent=39 // loop_header_branch
        %745 = sbr.rel (%p743) target = $region47
      $region44: #{tpu_custom_call.1} parent=39 // loop_body
        %s747 = smul.u32 %s742, 32
        %s748 = scalar_lea.vmem [#allocation2], %s747
        %v749 = vld [vmem:[%s748] sm:$0xff]
        %v750 = vld [vmem:[%s748 + $0x8] sm:$0xff]
        %v751 = vpack.c.bf16 %v750, %v749
        %s752 = sadd.s32 %s747, 64
        %s753 = scalar_lea.vmem [#allocation2], %s752
        %v754 = vld [vmem:[%s753] sm:$0xff]
        %v755 = vld [vmem:[%s753 + $0x8] sm:$0xff]
        %v756 = vpack.c.bf16 %v755, %v754
        %s757 = sadd.s32 %s747, 128
        %s758 = scalar_lea.vmem [#allocation2], %s757
        %v759 = vld [vmem:[%s758] sm:$0xff]
        %v760 = vld [vmem:[%s758 + $0x8] sm:$0xff]
        %v761 = vpack.c.bf16 %v760, %v759
        %762 = vxpose.xlu0.c.b16.start [1/8] %v756, 128
        %763 = vxpose.xlu0.c.b16.cont [2/8] 0, 128
        %764 = vxpose.xlu0.c.b16.cont [3/8] 0, 128
        %765 = vxpose.xlu0.c.b16.cont [4/8] 0, 128
        %766 = vxpose.xlu0.c.b16.cont [5/8] 0, 128
        %767 = vxpose.xlu0.c.b16.cont [6/8] 0, 128
        %768 = vxpose.xlu0.c.b16.cont [7/8] 0, 128
        %769 = vxpose.xlu0.c.b16.end [8/8] 0, 128
        %v770 = vpop.trf.xlu0
        %v771 = vpop.trf.xlu0
        %v772 = vpop.trf.xlu0
        %v773 = vpop.trf.xlu0
        %v774 = vpop.trf.xlu0
        %v775 = vpop.trf.xlu0
        %v776 = vpop.trf.xlu0
        %v777 = vpop.trf.xlu0
        %vm778 = vcmask 130048
        %v780 = vsel %vm778, %v770, 0
        %v783 = vsel %vm778, %v771, 0
        %v786 = vsel %vm778, %v772, 0
        %v789 = vsel %vm778, %v773, 0
        %v792 = vsel %vm778, %v774, 0
        %v795 = vsel %vm778, %v775, 0
        %v798 = vsel %vm778, %v776, 0
        %v801 = vsel %vm778, %v777, 0
        %803 = vmatprep.subr.bf16.mxu0 0
        %804 = vmatpush1.bf16.msra.mxu0 0
        %805 = vmatprep.subr.bf16.mxu0 0
        %806 = vmatpush1.bf16.msra.mxu0 0
        %807 = vmatprep.subr.bf16.mxu0 0
        %808 = vmatpush1.bf16.msra.mxu0 0
        %809 = vmatprep.subr.bf16.mxu0 0
        %810 = vmatpush1.bf16.msra.mxu0 0
        %811 = vmatprep.subr.bf16.mxu0 0
        %812 = vmatpush1.bf16.msra.mxu0 0
        %813 = vmatprep.subr.bf16.mxu0 0
        %814 = vmatpush1.bf16.msra.mxu0 0
        %815 = vmatprep.subr.bf16.mxu0 0
        %816 = vmatpush1.bf16.msra.mxu0 0
        %817 = vmatprep.subr.bf16.mxu0 0
        %818 = vmatpush1.bf16.msra.mxu0 %v751
        %819 = vmatprep.subr.bf16.mxu0 0
        %820 = vmatpush2.bf16.msra.mxu0 0
        %821 = vmatprep.subr.bf16.mxu0 0
        %822 = vmatpush2.bf16.msra.mxu0 0
        %823 = vmatprep.subr.bf16.mxu0 0
        %824 = vmatpush2.bf16.msra.mxu0 0
        %825 = vmatprep.subr.bf16.mxu0 0
        %826 = vmatpush2.bf16.msra.mxu0 0
        %827 = vmatprep.subr.bf16.mxu0 0
        %828 = vmatpush2.bf16.msra.mxu0 0
        %829 = vmatprep.subr.bf16.mxu0 0
        %830 = vmatpush2.bf16.msra.mxu0 0
        %831 = vmatprep.subr.bf16.mxu0 0
        %832 = vmatpush2.bf16.msra.mxu0 0
        %833 = vmatprep.subr.bf16.mxu0 0
        %834 = vmatpush2.bf16.msra.mxu0 0
        %835 = vmatprep.mubr.bf16.mxu0 0
        %836 = vmatmul.mubr.bf16.gmra.mxu0 %v780
        %v837 = vpop.f32.mrf.mxu0
        %v838 = vadd.f32 %v725, %v837
        %v839 = vpop.f32.mrf.mxu0
        %v840 = vpop.f32.mrf.mxu0
        %v841 = vadd.f32 %v726, %v840
        %v842 = vpop.f32.mrf.mxu0
        %843 = vmatprep.mubr.bf16.mxu0 0
        %844 = vmatmul.mubr.bf16.gmra.mxu0 %v783
        %v845 = vpop.f32.mrf.mxu0
        %v846 = vadd.f32 %v727, %v845
        %v847 = vpop.f32.mrf.mxu0
        %v848 = vpop.f32.mrf.mxu0
        %v849 = vadd.f32 %v728, %v848
        %v850 = vpop.f32.mrf.mxu0
        %851 = vmatprep.mubr.bf16.mxu0 0
        %852 = vmatmul.mubr.bf16.gmra.mxu0 %v786
        %v853 = vpop.f32.mrf.mxu0
        %v854 = vadd.f32 %v729, %v853
        %v855 = vpop.f32.mrf.mxu0
        %v856 = vpop.f32.mrf.mxu0
        %v857 = vadd.f32 %v730, %v856
        %v858 = vpop.f32.mrf.mxu0
        %859 = vmatprep.mubr.bf16.mxu0 0
        %860 = vmatmul.mubr.bf16.gmra.mxu0 %v789
        %v861 = vpop.f32.mrf.mxu0
        %v862 = vadd.f32 %v731, %v861
        %v863 = vpop.f32.mrf.mxu0
        %v864 = vpop.f32.mrf.mxu0
        %v865 = vadd.f32 %v732, %v864
        %v866 = vpop.f32.mrf.mxu0
        %867 = vmatprep.mubr.bf16.mxu0 0
        %868 = vmatmul.mubr.bf16.gmra.mxu0 %v792
        %v869 = vpop.f32.mrf.mxu0
        %v870 = vadd.f32 %v733, %v869
        %v871 = vpop.f32.mrf.mxu0
        %v872 = vpop.f32.mrf.mxu0
        %v873 = vadd.f32 %v734, %v872
        %v874 = vpop.f32.mrf.mxu0
        %875 = vmatprep.mubr.bf16.mxu0 0
        %876 = vmatmul.mubr.bf16.gmra.mxu0 %v795
        %v877 = vpop.f32.mrf.mxu0
        %v878 = vadd.f32 %v735, %v877
        %v879 = vpop.f32.mrf.mxu0
        %v880 = vpop.f32.mrf.mxu0
        %v881 = vadd.f32 %v736, %v880
        %v882 = vpop.f32.mrf.mxu0
        %883 = vmatprep.mubr.bf16.mxu0 0
        %884 = vmatmul.mubr.bf16.gmra.mxu0 %v798
        %v885 = vpop.f32.mrf.mxu0
        %v886 = vadd.f32 %v737, %v885
        %v887 = vpop.f32.mrf.mxu0
        %v888 = vpop.f32.mrf.mxu0
        %v889 = vadd.f32 %v738, %v888
        %v890 = vpop.f32.mrf.mxu0
        %891 = vmatprep.mubr.bf16.mxu0 0
        %892 = vmatmul.mubr.bf16.gmra.mxu0 %v801
        %v893 = vpop.f32.mrf.mxu0
        %v894 = vadd.f32 %v739, %v893
        %v895 = vpop.f32.mrf.mxu0
        %v896 = vpop.f32.mrf.mxu0
        %v897 = vadd.f32 %v740, %v896
        %v898 = vpop.f32.mrf.mxu0
        %899 = vdwg.mxu0
        %v900 = vmax.f32 %v838, %v854
        %v901 = vmax.f32 %v841, %v857
        %v902 = vmax.f32 %v846, %v862
        %v903 = vmax.f32 %v849, %v865
        %v904 = vmax.f32 %v900, %v870
        %v905 = vmax.f32 %v901, %v873
        %v906 = vmax.f32 %v902, %v878
        %v907 = vmax.f32 %v903, %v881
        %v908 = vmax.f32 %v904, %v886
        %v909 = vmax.f32 %v905, %v889
        %v910 = vmax.f32 %v906, %v894
        %v911 = vmax.f32 %v907, %v897
        %v912 = vmax.f32 %v908, %v909
        %v913 = vmax.f32 %v910, %v911
        %v914 = vmax.f32 %v912, %v913
        %v915 = vrot.slane %v914, 4
        %v916 = vmax.f32 %v914, %v915
        %v917 = vrot.slane %v916, 2
        %v918 = vmax.f32 %v916, %v917
        %v919 = vrot.slane %v918, 1
        %v920 = vmax.f32 %v918, %v919
        %v921 = vsub.f32 %v838, %v920
        %v922 = vsub.f32 %v841, %v920
        %v923 = vsub.f32 %v846, %v920
        %v924 = vsub.f32 %v849, %v920
        %v925 = vsub.f32 %v854, %v920
        %v926 = vsub.f32 %v857, %v920
        %v927 = vsub.f32 %v862, %v920
        %v928 = vsub.f32 %v865, %v920
        %v929 = vsub.f32 %v870, %v920
        %v930 = vsub.f32 %v873, %v920
        %v931 = vsub.f32 %v878, %v920
        %v932 = vsub.f32 %v881, %v920
        %v933 = vsub.f32 %v886, %v920
        %v934 = vsub.f32 %v889, %v920
        %v935 = vsub.f32 %v894, %v920
        %v936 = vsub.f32 %v897, %v920
        %v937 = vmul.f32 %v921, 1.442695
        %v938 = vpow.pop %v937
        %v939 = vmul.f32 %v922, 1.442695
        %v940 = vpow.pop %v939
        %v941 = vmul.f32 %v923, 1.442695
        %v942 = vpow.pop %v941
        %v943 = vmul.f32 %v924, 1.442695
        %v944 = vpow.pop %v943
        %v945 = vmul.f32 %v925, 1.442695
        %v946 = vpow.pop %v945
        %v947 = vmul.f32 %v926, 1.442695
        %v948 = vpow.pop %v947
        %v949 = vmul.f32 %v927, 1.442695
        %v950 = vpow.pop %v949
        %v951 = vmul.f32 %v928, 1.442695
        %v952 = vpow.pop %v951
        %v953 = vmul.f32 %v929, 1.442695
        %v954 = vpow.pop %v953
        %v955 = vmul.f32 %v930, 1.442695
        %v956 = vpow.pop %v955
        %v957 = vmul.f32 %v931, 1.442695
        %v958 = vpow.pop %v957
        %v959 = vmul.f32 %v932, 1.442695
        %v960 = vpow.pop %v959
        %v961 = vmul.f32 %v933, 1.442695
        %v962 = vpow.pop %v961
        %v963 = vmul.f32 %v934, 1.442695
        %v964 = vpow.pop %v963
        %v965 = vmul.f32 %v935, 1.442695
        %v966 = vpow.pop %v965
        %v967 = vmul.f32 %v936, 1.442695
        %v968 = vpow.pop %v967
        %v969 = vadd.f32 %v938, %v940
        %v970 = vadd.f32 %v969, %v942
        %v971 = vadd.f32 %v970, %v944
        %v972 = vadd.f32 %v971, %v946
        %v973 = vadd.f32 %v972, %v948
        %v974 = vadd.f32 %v973, %v950
        %v975 = vadd.f32 %v974, %v952
        %v976 = vadd.f32 %v975, %v954
        %v977 = vadd.f32 %v976, %v956
        %v978 = vadd.f32 %v977, %v958
        %v979 = vadd.f32 %v978, %v960
        %v980 = vadd.f32 %v979, %v962
        %v981 = vadd.f32 %v980, %v964
        %v982 = vadd.f32 %v981, %v966
        %v983 = vadd.f32 %v982, %v968
        %v984 = vrot.slane %v983, 4
        %v985 = vadd.f32 %v983, %v984
        %v986 = vrot.slane %v985, 2
        %v987 = vadd.f32 %v985, %v986
        %v988 = vrot.slane %v987, 1
        %v989 = vadd.f32 %v987, %v988
        %v990 = vpack.c.bf16 %v940, %v938
        %v991 = vpack.c.bf16 %v944, %v942
        %v992 = vpack.c.bf16 %v948, %v946
        %v993 = vpack.c.bf16 %v952, %v950
        %v994 = vpack.c.bf16 %v956, %v954
        %v995 = vpack.c.bf16 %v960, %v958
        %v996 = vpack.c.bf16 %v964, %v962
        %v997 = vpack.c.bf16 %v968, %v966
        %998 = vmatprep.subr.bf16.mxu0 0
        %999 = vmatpush1.bf16.msra.mxu0 %v997
        %1000 = vmatprep.subr.bf16.mxu0 0
        %1001 = vmatpush1.bf16.msra.mxu0 %v996
        %1002 = vmatprep.subr.bf16.mxu0 0
        %1003 = vmatpush1.bf16.msra.mxu0 %v995
        %1004 = vmatprep.subr.bf16.mxu0 0
        %1005 = vmatpush1.bf16.msra.mxu0 %v994
        %1006 = vmatprep.subr.bf16.mxu0 0
        %1007 = vmatpush1.bf16.msra.mxu0 %v993
        %1008 = vmatprep.subr.bf16.mxu0 0
        %1009 = vmatpush1.bf16.msra.mxu0 %v992
        %1010 = vmatprep.subr.bf16.mxu0 0
        %1011 = vmatpush1.bf16.msra.mxu0 %v991
        %1012 = vmatprep.subr.bf16.mxu0 0
        %1013 = vmatpush1.bf16.msra.mxu0 %v990
        %1014 = vmatprep.subr.bf16.mxu0 0
        %1015 = vmatpush2.bf16.msra.mxu0 0
        %1016 = vmatprep.subr.bf16.mxu0 0
        %1017 = vmatpush2.bf16.msra.mxu0 0
        %1018 = vmatprep.subr.bf16.mxu0 0
        %1019 = vmatpush2.bf16.msra.mxu0 0
        %1020 = vmatprep.subr.bf16.mxu0 0
        %1021 = vmatpush2.bf16.msra.mxu0 0
        %1022 = vmatprep.subr.bf16.mxu0 0
        %1023 = vmatpush2.bf16.msra.mxu0 0
        %1024 = vmatprep.subr.bf16.mxu0 0
        %1025 = vmatpush2.bf16.msra.mxu0 0
        %1026 = vmatprep.subr.bf16.mxu0 0
        %1027 = vmatpush2.bf16.msra.mxu0 0
        %1028 = vmatprep.subr.bf16.mxu0 0
        %1029 = vmatpush2.bf16.msra.mxu0 0
        %1030 = vmatprep.mubr.bf16.mxu0 0
        %1031 = vmatmul.mubr.bf16.gmra.mxu0 %v761
        %v1032 = vpop.f32.mrf.mxu0
        %v1033 = vadd.f32 0.0, %v1032
        %v1034 = vpop.f32.mrf.mxu0
        %v1035 = vpop.f32.mrf.mxu0
        %v1036 = vadd.f32 0.0, %v1035
        %v1037 = vpop.f32.mrf.mxu0
        %1038 = vdwg.mxu0
        %v1039 = vrcp.pop %v989
        %v1040 = vmul.f32 %v1033, %v1039
        %v1041 = vmul.f32 %v1036, %v1039
        %s1042 = scalar_lea.vmem [#allocation3], %s747
        %1043 = vst [vmem:[%s1042] sm:$0xff] %v1040
        %1044 = vst [vmem:[%s1042 + $0x8] sm:$0xff] %v1041
        %s1045 = smul.u32 %s742, 2
        %s1046 = sadd.s32 %s1045, 1
        %s1047 = smul.u32 %s1046, 16
        %s1048 = scalar_lea.vmem [#allocation2], %s1047
        %v1049 = vld [vmem:[%s1048] sm:$0xff]
        %v1050 = vld [vmem:[%s1048 + $0x8] sm:$0xff]
        %v1051 = vpack.c.bf16 %v1050, %v1049
        %s1052 = sadd.s32 %s1047, 64
        %s1053 = scalar_lea.vmem [#allocation2], %s1052
        %v1054 = vld [vmem:[%s1053] sm:$0xff]
        %v1055 = vld [vmem:[%s1053 + $0x8] sm:$0xff]
        %v1056 = vpack.c.bf16 %v1055, %v1054
        %s1057 = sadd.s32 %s1047, 128
        %s1058 = scalar_lea.vmem [#allocation2], %s1057
        %v1059 = vld [vmem:[%s1058] sm:$0xff]
        %v1060 = vld [vmem:[%s1058 + $0x8] sm:$0xff]
        %v1061 = vpack.c.bf16 %v1060, %v1059
        %1062 = vxpose.xlu0.c.b16.start [1/8] %v1056, 128
        %1063 = vxpose.xlu0.c.b16.cont [2/8] 0, 128
        %1064 = vxpose.xlu0.c.b16.cont [3/8] 0, 128
        %1065 = vxpose.xlu0.c.b16.cont [4/8] 0, 128
        %1066 = vxpose.xlu0.c.b16.cont [5/8] 0, 128
        %1067 = vxpose.xlu0.c.b16.cont [6/8] 0, 128
        %1068 = vxpose.xlu0.c.b16.cont [7/8] 0, 128
        %1069 = vxpose.xlu0.c.b16.end [8/8] 0, 128
        %v1070 = vpop.trf.xlu0
        %v1071 = vpop.trf.xlu0
        %v1072 = vpop.trf.xlu0
        %v1073 = vpop.trf.xlu0
        %v1074 = vpop.trf.xlu0
        %v1075 = vpop.trf.xlu0
        %v1076 = vpop.trf.xlu0
        %v1077 = vpop.trf.xlu0
        %v1079 = vsel %vm778, %v1070, 0
        %v1082 = vsel %vm778, %v1071, 0
        %v1085 = vsel %vm778, %v1072, 0
        %v1088 = vsel %vm778, %v1073, 0
        %v1091 = vsel %vm778, %v1074, 0
        %v1094 = vsel %vm778, %v1075, 0
        %v1097 = vsel %vm778, %v1076, 0
        %v1100 = vsel %vm778, %v1077, 0
        %1102 = vmatprep.subr.bf16.mxu0 0
        %1103 = vmatpush1.bf16.msra.mxu0 0
        %1104 = vmatprep.subr.bf16.mxu0 0
        %1105 = vmatpush1.bf16.msra.mxu0 0
        %1106 = vmatprep.subr.bf16.mxu0 0
        %1107 = vmatpush1.bf16.msra.mxu0 0
        %1108 = vmatprep.subr.bf16.mxu0 0
        %1109 = vmatpush1.bf16.msra.mxu0 0
        %1110 = vmatprep.subr.bf16.mxu0 0
        %1111 = vmatpush1.bf16.msra.mxu0 0
        %1112 = vmatprep.subr.bf16.mxu0 0
        %1113 = vmatpush1.bf16.msra.mxu0 0
        %1114 = vmatprep.subr.bf16.mxu0 0
        %1115 = vmatpush1.bf16.msra.mxu0 0
        %1116 = vmatprep.subr.bf16.mxu0 0
        %1117 = vmatpush1.bf16.msra.mxu0 %v1051
        %1118 = vmatprep.subr.bf16.mxu0 0
        %1119 = vmatpush2.bf16.msra.mxu0 0
        %1120 = vmatprep.subr.bf16.mxu0 0
        %1121 = vmatpush2.bf16.msra.mxu0 0
        %1122 = vmatprep.subr.bf16.mxu0 0
        %1123 = vmatpush2.bf16.msra.mxu0 0
        %1124 = vmatprep.subr.bf16.mxu0 0
        %1125 = vmatpush2.bf16.msra.mxu0 0
        %1126 = vmatprep.subr.bf16.mxu0 0
        %1127 = vmatpush2.bf16.msra.mxu0 0
        %1128 = vmatprep.subr.bf16.mxu0 0
        %1129 = vmatpush2.bf16.msra.mxu0 0
        %1130 = vmatprep.subr.bf16.mxu0 0
        %1131 = vmatpush2.bf16.msra.mxu0 0
        %1132 = vmatprep.subr.bf16.mxu0 0
        %1133 = vmatpush2.bf16.msra.mxu0 0
        %1134 = vmatprep.mubr.bf16.mxu0 0
        %1135 = vmatmul.mubr.bf16.gmra.mxu0 %v1079
        %v1136 = vpop.f32.mrf.mxu0
        %v1137 = vadd.f32 %v725, %v1136
        %v1138 = vpop.f32.mrf.mxu0
        %v1139 = vpop.f32.mrf.mxu0
        %v1140 = vadd.f32 %v726, %v1139
        %v1141 = vpop.f32.mrf.mxu0
        %1142 = vmatprep.mubr.bf16.mxu0 0
        %1143 = vmatmul.mubr.bf16.gmra.mxu0 %v1082
        %v1144 = vpop.f32.mrf.mxu0
        %v1145 = vadd.f32 %v727, %v1144
        %v1146 = vpop.f32.mrf.mxu0
        %v1147 = vpop.f32.mrf.mxu0
        %v1148 = vadd.f32 %v728, %v1147
        %v1149 = vpop.f32.mrf.mxu0
        %1150 = vmatprep.mubr.bf16.mxu0 0
        %1151 = vmatmul.mubr.bf16.gmra.mxu0 %v1085
        %v1152 = vpop.f32.mrf.mxu0
        %v1153 = vadd.f32 %v729, %v1152
        %v1154 = vpop.f32.mrf.mxu0
        %v1155 = vpop.f32.mrf.mxu0
        %v1156 = vadd.f32 %v730, %v1155
        %v1157 = vpop.f32.mrf.mxu0
        %1158 = vmatprep.mubr.bf16.mxu0 0
        %1159 = vmatmul.mubr.bf16.gmra.mxu0 %v1088
        %v1160 = vpop.f32.mrf.mxu0
        %v1161 = vadd.f32 %v731, %v1160
        %v1162 = vpop.f32.mrf.mxu0
        %v1163 = vpop.f32.mrf.mxu0
        %v1164 = vadd.f32 %v732, %v1163
        %v1165 = vpop.f32.mrf.mxu0
        %1166 = vmatprep.mubr.bf16.mxu0 0
        %1167 = vmatmul.mubr.bf16.gmra.mxu0 %v1091
        %v1168 = vpop.f32.mrf.mxu0
        %v1169 = vadd.f32 %v733, %v1168
        %v1170 = vpop.f32.mrf.mxu0
        %v1171 = vpop.f32.mrf.mxu0
        %v1172 = vadd.f32 %v734, %v1171
        %v1173 = vpop.f32.mrf.mxu0
        %1174 = vmatprep.mubr.bf16.mxu0 0
        %1175 = vmatmul.mubr.bf16.gmra.mxu0 %v1094
        %v1176 = vpop.f32.mrf.mxu0
        %v1177 = vadd.f32 %v735, %v1176
        %v1178 = vpop.f32.mrf.mxu0
        %v1179 = vpop.f32.mrf.mxu0
        %v1180 = vadd.f32 %v736, %v1179
        %v1181 = vpop.f32.mrf.mxu0
        %1182 = vmatprep.mubr.bf16.mxu0 0
        %1183 = vmatmul.mubr.bf16.gmra.mxu0 %v1097
        %v1184 = vpop.f32.mrf.mxu0
        %v1185 = vadd.f32 %v737, %v1184
        %v1186 = vpop.f32.mrf.mxu0
        %v1187 = vpop.f32.mrf.mxu0
        %v1188 = vadd.f32 %v738, %v1187
        %v1189 = vpop.f32.mrf.mxu0
        %1190 = vmatprep.mubr.bf16.mxu0 0
        %1191 = vmatmul.mubr.bf16.gmra.mxu0 %v1100
        %v1192 = vpop.f32.mrf.mxu0
        %v1193 = vadd.f32 %v739, %v1192
        %v1194 = vpop.f32.mrf.mxu0
        %v1195 = vpop.f32.mrf.mxu0
        %v1196 = vadd.f32 %v740, %v1195
        %v1197 = vpop.f32.mrf.mxu0
        %1198 = vdwg.mxu0
        %v1199 = vmax.f32 %v1137, %v1153
        %v1200 = vmax.f32 %v1140, %v1156
        %v1201 = vmax.f32 %v1145, %v1161
        %v1202 = vmax.f32 %v1148, %v1164
        %v1203 = vmax.f32 %v1199, %v1169
        %v1204 = vmax.f32 %v1200, %v1172
        %v1205 = vmax.f32 %v1201, %v1177
        %v1206 = vmax.f32 %v1202, %v1180
        %v1207 = vmax.f32 %v1203, %v1185
        %v1208 = vmax.f32 %v1204, %v1188
        %v1209 = vmax.f32 %v1205, %v1193
        %v1210 = vmax.f32 %v1206, %v1196
        %v1211 = vmax.f32 %v1207, %v1208
        %v1212 = vmax.f32 %v1209, %v1210
        %v1213 = vmax.f32 %v1211, %v1212
        %v1214 = vrot.slane %v1213, 4
        %v1215 = vmax.f32 %v1213, %v1214
        %v1216 = vrot.slane %v1215, 2
        %v1217 = vmax.f32 %v1215, %v1216
        %v1218 = vrot.slane %v1217, 1
        %v1219 = vmax.f32 %v1217, %v1218
        %v1220 = vsub.f32 %v1137, %v1219
        %v1221 = vsub.f32 %v1140, %v1219
        %v1222 = vsub.f32 %v1145, %v1219
        %v1223 = vsub.f32 %v1148, %v1219
        %v1224 = vsub.f32 %v1153, %v1219
        %v1225 = vsub.f32 %v1156, %v1219
        %v1226 = vsub.f32 %v1161, %v1219
        %v1227 = vsub.f32 %v1164, %v1219
        %v1228 = vsub.f32 %v1169, %v1219
        %v1229 = vsub.f32 %v1172, %v1219
        %v1230 = vsub.f32 %v1177, %v1219
        %v1231 = vsub.f32 %v1180, %v1219
        %v1232 = vsub.f32 %v1185, %v1219
        %v1233 = vsub.f32 %v1188, %v1219
        %v1234 = vsub.f32 %v1193, %v1219
        %v1235 = vsub.f32 %v1196, %v1219
        %v1236 = vmul.f32 %v1220, 1.442695
        %v1237 = vpow.pop %v1236
        %v1238 = vmul.f32 %v1221, 1.442695
        %v1239 = vpow.pop %v1238
        %v1240 = vmul.f32 %v1222, 1.442695
        %v1241 = vpow.pop %v1240
        %v1242 = vmul.f32 %v1223, 1.442695
        %v1243 = vpow.pop %v1242
        %v1244 = vmul.f32 %v1224, 1.442695
        %v1245 = vpow.pop %v1244
        %v1246 = vmul.f32 %v1225, 1.442695
        %v1247 = vpow.pop %v1246
        %v1248 = vmul.f32 %v1226, 1.442695
        %v1249 = vpow.pop %v1248
        %v1250 = vmul.f32 %v1227, 1.442695
        %v1251 = vpow.pop %v1250
        %v1252 = vmul.f32 %v1228, 1.442695
        %v1253 = vpow.pop %v1252
        %v1254 = vmul.f32 %v1229, 1.442695
        %v1255 = vpow.pop %v1254
        %v1256 = vmul.f32 %v1230, 1.442695
        %v1257 = vpow.pop %v1256
        %v1258 = vmul.f32 %v1231, 1.442695
        %v1259 = vpow.pop %v1258
        %v1260 = vmul.f32 %v1232, 1.442695
        %v1261 = vpow.pop %v1260
        %v1262 = vmul.f32 %v1233, 1.442695
        %v1263 = vpow.pop %v1262
        %v1264 = vmul.f32 %v1234, 1.442695
        %v1265 = vpow.pop %v1264
        %v1266 = vmul.f32 %v1235, 1.442695
        %v1267 = vpow.pop %v1266
        %v1268 = vadd.f32 %v1237, %v1239
        %v1269 = vadd.f32 %v1268, %v1241
        %v1270 = vadd.f32 %v1269, %v1243
        %v1271 = vadd.f32 %v1270, %v1245
        %v1272 = vadd.f32 %v1271, %v1247
        %v1273 = vadd.f32 %v1272, %v1249
        %v1274 = vadd.f32 %v1273, %v1251
        %v1275 = vadd.f32 %v1274, %v1253
        %v1276 = vadd.f32 %v1275, %v1255
        %v1277 = vadd.f32 %v1276, %v1257
        %v1278 = vadd.f32 %v1277, %v1259
        %v1279 = vadd.f32 %v1278, %v1261
        %v1280 = vadd.f32 %v1279, %v1263
        %v1281 = vadd.f32 %v1280, %v1265
        %v1282 = vadd.f32 %v1281, %v1267
        %v1283 = vrot.slane %v1282, 4
        %v1284 = vadd.f32 %v1282, %v1283
        %v1285 = vrot.slane %v1284, 2
        %v1286 = vadd.f32 %v1284, %v1285
        %v1287 = vrot.slane %v1286, 1
        %v1288 = vadd.f32 %v1286, %v1287
        %v1289 = vpack.c.bf16 %v1239, %v1237
        %v1290 = vpack.c.bf16 %v1243, %v1241
        %v1291 = vpack.c.bf16 %v1247, %v1245
        %v1292 = vpack.c.bf16 %v1251, %v1249
        %v1293 = vpack.c.bf16 %v1255, %v1253
        %v1294 = vpack.c.bf16 %v1259, %v1257
        %v1295 = vpack.c.bf16 %v1263, %v1261
        %v1296 = vpack.c.bf16 %v1267, %v1265
        %1297 = vmatprep.subr.bf16.mxu0 0
        %1298 = vmatpush1.bf16.msra.mxu0 %v1296
        %1299 = vmatprep.subr.bf16.mxu0 0
        %1300 = vmatpush1.bf16.msra.mxu0 %v1295
        %1301 = vmatprep.subr.bf16.mxu0 0
        %1302 = vmatpush1.bf16.msra.mxu0 %v1294
        %1303 = vmatprep.subr.bf16.mxu0 0
        %1304 = vmatpush1.bf16.msra.mxu0 %v1293
        %1305 = vmatprep.subr.bf16.mxu0 0
        %1306 = vmatpush1.bf16.msra.mxu0 %v1292
        %1307 = vmatprep.subr.bf16.mxu0 0
        %1308 = vmatpush1.bf16.msra.mxu0 %v1291
        %1309 = vmatprep.subr.bf16.mxu0 0
        %1310 = vmatpush1.bf16.msra.mxu0 %v1290
        %1311 = vmatprep.subr.bf16.mxu0 0
        %1312 = vmatpush1.bf16.msra.mxu0 %v1289
        %1313 = vmatprep.subr.bf16.mxu0 0
        %1314 = vmatpush2.bf16.msra.mxu0 0
        %1315 = vmatprep.subr.bf16.mxu0 0
        %1316 = vmatpush2.bf16.msra.mxu0 0
        %1317 = vmatprep.subr.bf16.mxu0 0
        %1318 = vmatpush2.bf16.msra.mxu0 0
        %1319 = vmatprep.subr.bf16.mxu0 0
        %1320 = vmatpush2.bf16.msra.mxu0 0
        %1321 = vmatprep.subr.bf16.mxu0 0
        %1322 = vmatpush2.bf16.msra.mxu0 0
        %1323 = vmatprep.subr.bf16.mxu0 0
        %1324 = vmatpush2.bf16.msra.mxu0 0
        %1325 = vmatprep.subr.bf16.mxu0 0
        %1326 = vmatpush2.bf16.msra.mxu0 0
        %1327 = vmatprep.subr.bf16.mxu0 0
        %1328 = vmatpush2.bf16.msra.mxu0 0
        %1329 = vmatprep.mubr.bf16.mxu0 0
        %1330 = vmatmul.mubr.bf16.gmra.mxu0 %v1061
        %v1331 = vpop.f32.mrf.mxu0
        %v1332 = vadd.f32 0.0, %v1331
        %v1333 = vpop.f32.mrf.mxu0
        %v1334 = vpop.f32.mrf.mxu0
        %v1335 = vadd.f32 0.0, %v1334
        %v1336 = vpop.f32.mrf.mxu0
        %1337 = vdwg.mxu0
        %v1338 = vrcp.pop %v1288
        %v1339 = vmul.f32 %v1332, %v1338
        %v1340 = vmul.f32 %v1335, %v1338
        %s1341 = scalar_lea.vmem [#allocation3], %s1047
        %1342 = vst [vmem:[%s1341] sm:$0xff] %v1339
        %1343 = vst [vmem:[%s1341 + $0x8] sm:$0xff] %v1340
      $region45: #{tpu_custom_call.1} parent=39 // loop_footer
        %s746 = sadd.s32 1, %s742
      $region46: #{tpu_custom_call.1} parent=39 // loop_footer_branch
        %741 = sbr.rel target = $region42
      $region47: #{tpu_custom_call.1} parent=39 // loop_exit
        _
      %v1344 = vld [vmem:[#allocation3] sm:$0xff]
      %v1345 = vld [vmem:[#allocation3 + $0x8] sm:$0xff]
      %v1346 = vld [vmem:[#allocation3 + $0x10] sm:$0xff]
      %v1347 = vld [vmem:[#allocation3 + $0x18] sm:$0xff]
      %v1348 = vld [vmem:[#allocation3 + $0x20] sm:$0xff]
      %v1349 = vld [vmem:[#allocation3 + $0x28] sm:$0xff]
      %v1350 = vld [vmem:[#allocation3 + $0x30] sm:$0xff]
      %v1351 = vld [vmem:[#allocation3 + $0x38] sm:$0xff]
      %v1352 = vpack.c.bf16 %v1345, %v1344
      %v1353 = vpack.c.bf16 %v1347, %v1346
      %v1354 = vpack.c.bf16 %v1349, %v1348
      %v1355 = vpack.c.bf16 %v1351, %v1350
      %v1356 = vld [vmem:[%s3] sm:$0xf]
      %v1357 = vld [vmem:[%s3 + $0x4] sm:$0xf]
      %v1358 = vld [vmem:[%s3 + $0x8] sm:$0xf]
      %v1359 = vld [vmem:[%s3 + $0xc] sm:$0xf]
      %v1360 = vld [vmem:[%s3 + $0x10] sm:$0xf]
      %v1361 = vld [vmem:[%s3 + $0x14] sm:$0xf]
      %v1362 = vld [vmem:[%s3 + $0x18] sm:$0xf]
      %v1363 = vld [vmem:[%s3 + $0x1c] sm:$0xf]
      %v1364 = vld [vmem:[%s4] sm:$0x1]
      %v1366 = vlaneseq
      %v1367 = vshrl.u32 %v1366, 7
      %v1368 = vsub.s32 0, %v1367
      %v1369 = vrot.slane %v1364, %v1368
      %1371 = vxpose.xlu0.c.b16.start [1/8] %v1352, 128
      %1372 = vxpose.xlu0.c.b16.cont [2/8] %v1353, 128
      %1373 = vxpose.xlu0.c.b16.cont [3/8] %v1354, 128
      %1374 = vxpose.xlu0.c.b16.cont [4/8] %v1355, 128
      %1375 = vxpose.xlu0.c.b16.cont [5/8] 0, 128
      %1376 = vxpose.xlu0.c.b16.cont [6/8] 0, 128
      %1377 = vxpose.xlu0.c.b16.cont [7/8] 0, 128
      %1378 = vxpose.xlu0.c.b16.end [8/8] 0, 128
      %v1379 = vpop.trf.xlu0
      %v1380 = vpop.trf.xlu0
      %v1381 = vpop.trf.xlu0
      %v1382 = vpop.trf.xlu0
      %v1383 = vpop.trf.xlu0
      %v1384 = vpop.trf.xlu0
      %v1385 = vpop.trf.xlu0
      %v1386 = vpop.trf.xlu0
      %v1395 = vunpack.c.l.b16 %v1356
      %v1396 = vunpack.c.l.b16 %v1357
      %v1397 = vunpack.c.l.b16 %v1358
      %v1398 = vunpack.c.l.b16 %v1359
      %v1399 = vunpack.c.l.b16 %v1360
      %v1400 = vunpack.c.l.b16 %v1361
      %v1401 = vunpack.c.l.b16 %v1362
      %v1402 = vunpack.c.l.b16 %v1363
      %v1403 = vpack.c.b16 %v1396, %v1395
      %v1404 = vpack.c.b16 %v1398, %v1397
      %v1405 = vpack.c.b16 %v1400, %v1399
      %v1406 = vpack.c.b16 %v1402, %v1401
      %v1412 = vsel %vm478, %v1379, 0
      %v1415 = vsel %vm478, %v1380, 0
      %v1418 = vsel %vm478, %v1381, 0
      %v1421 = vsel %vm478, %v1382, 0
      %v1424 = vsel %vm478, %v1383, 0
      %v1427 = vsel %vm478, %v1384, 0
      %v1430 = vsel %vm478, %v1385, 0
      %v1433 = vsel %vm478, %v1386, 0
      %1435 = vmatprep.subr.bf16.mxu0 0
      %1436 = vmatpush1.bf16.msra.mxu0 0
      %1437 = vmatprep.subr.bf16.mxu0 0
      %1438 = vmatpush1.bf16.msra.mxu0 0
      %1439 = vmatprep.subr.bf16.mxu0 0
      %1440 = vmatpush1.bf16.msra.mxu0 0
      %1441 = vmatprep.subr.bf16.mxu0 0
      %1442 = vmatpush1.bf16.msra.mxu0 0
      %1443 = vmatprep.subr.bf16.mxu0 0
      %1444 = vmatpush1.bf16.msra.mxu0 %v1406
      %1445 = vmatprep.subr.bf16.mxu0 0
      %1446 = vmatpush1.bf16.msra.mxu0 %v1405
      %1447 = vmatprep.subr.bf16.mxu0 0
      %1448 = vmatpush1.bf16.msra.mxu0 %v1404
      %1449 = vmatprep.subr.bf16.mxu0 0
      %1450 = vmatpush1.bf16.msra.mxu0 %v1403
      %1451 = vmatprep.subr.bf16.mxu0 0
      %1452 = vmatpush2.bf16.msra.mxu0 0
      %1453 = vmatprep.subr.bf16.mxu0 0
      %1454 = vmatpush2.bf16.msra.mxu0 0
      %1455 = vmatprep.subr.bf16.mxu0 0
      %1456 = vmatpush2.bf16.msra.mxu0 0
      %1457 = vmatprep.subr.bf16.mxu0 0
      %1458 = vmatpush2.bf16.msra.mxu0 0
      %1459 = vmatprep.subr.bf16.mxu0 0
      %1460 = vmatpush2.bf16.msra.mxu0 0
      %1461 = vmatprep.subr.bf16.mxu0 0
      %1462 = vmatpush2.bf16.msra.mxu0 0
      %1463 = vmatprep.subr.bf16.mxu0 0
      %1464 = vmatpush2.bf16.msra.mxu0 0
      %1465 = vmatprep.subr.bf16.mxu0 0
      %1466 = vmatpush2.bf16.msra.mxu0 0
      %1467 = vmatprep.mubr.bf16.mxu0 0
      %1468 = vmatmul.mubr.bf16.gmra.mxu0 %v1412
      %v1469 = vpop.f32.mrf.mxu0
      %v1470 = vadd.f32 %v1369, %v1469
      %v1471 = vpop.f32.mrf.mxu0
      %v1472 = vpop.f32.mrf.mxu0
      %v1473 = vadd.f32 %v1369, %v1472
      %v1474 = vpop.f32.mrf.mxu0
      %1475 = vmatprep.mubr.bf16.mxu0 0
      %1476 = vmatmul.mubr.bf16.gmra.mxu0 %v1415
      %v1477 = vpop.f32.mrf.mxu0
      %v1478 = vadd.f32 %v1369, %v1477
      %v1479 = vpop.f32.mrf.mxu0
      %v1480 = vpop.f32.mrf.mxu0
      %v1481 = vadd.f32 %v1369, %v1480
      %v1482 = vpop.f32.mrf.mxu0
      %1483 = vmatprep.mubr.bf16.mxu0 0
      %1484 = vmatmul.mubr.bf16.gmra.mxu0 %v1418
      %v1485 = vpop.f32.mrf.mxu0
      %v1486 = vadd.f32 %v1369, %v1485
      %v1487 = vpop.f32.mrf.mxu0
      %v1488 = vpop.f32.mrf.mxu0
      %v1489 = vadd.f32 %v1369, %v1488
      %v1490 = vpop.f32.mrf.mxu0
      %1491 = vmatprep.mubr.bf16.mxu0 0
      %1492 = vmatmul.mubr.bf16.gmra.mxu0 %v1421
      %v1493 = vpop.f32.mrf.mxu0
      %v1494 = vadd.f32 %v1369, %v1493
      %v1495 = vpop.f32.mrf.mxu0
      %v1496 = vpop.f32.mrf.mxu0
      %v1497 = vadd.f32 %v1369, %v1496
      %v1498 = vpop.f32.mrf.mxu0
      %1499 = vmatprep.mubr.bf16.mxu0 0
      %1500 = vmatmul.mubr.bf16.gmra.mxu0 %v1424
      %v1501 = vpop.f32.mrf.mxu0
      %v1502 = vadd.f32 %v1369, %v1501
      %v1503 = vpop.f32.mrf.mxu0
      %v1504 = vpop.f32.mrf.mxu0
      %v1505 = vadd.f32 %v1369, %v1504
      %v1506 = vpop.f32.mrf.mxu0
      %1507 = vmatprep.mubr.bf16.mxu0 0
      %1508 = vmatmul.mubr.bf16.gmra.mxu0 %v1427
      %v1509 = vpop.f32.mrf.mxu0
      %v1510 = vadd.f32 %v1369, %v1509
      %v1511 = vpop.f32.mrf.mxu0
      %v1512 = vpop.f32.mrf.mxu0
      %v1513 = vadd.f32 %v1369, %v1512
      %v1514 = vpop.f32.mrf.mxu0
      %1515 = vmatprep.mubr.bf16.mxu0 0
      %1516 = vmatmul.mubr.bf16.gmra.mxu0 %v1430
      %v1517 = vpop.f32.mrf.mxu0
      %v1518 = vadd.f32 %v1369, %v1517
      %v1519 = vpop.f32.mrf.mxu0
      %v1520 = vpop.f32.mrf.mxu0
      %v1521 = vadd.f32 %v1369, %v1520
      %v1522 = vpop.f32.mrf.mxu0
      %1523 = vmatprep.mubr.bf16.mxu0 0
      %1524 = vmatmul.mubr.bf16.gmra.mxu0 %v1433
      %v1525 = vpop.f32.mrf.mxu0
      %v1526 = vadd.f32 %v1369, %v1525
      %v1527 = vpop.f32.mrf.mxu0
      %v1528 = vpop.f32.mrf.mxu0
      %v1529 = vadd.f32 %v1369, %v1528
      %v1530 = vpop.f32.mrf.mxu0
      %1531 = vdwg.mxu0
      %1532 = vst.msk [vmem:[%s224] sm:$0xff] %vm478, %v1470
      %1533 = vst.msk [vmem:[%s224 + $0x8] sm:$0xff] %vm478, %v1473
      %1534 = vst.msk [vmem:[%s224 + $0x10] sm:$0xff] %vm478, %v1478
      %1535 = vst.msk [vmem:[%s224 + $0x18] sm:$0xff] %vm478, %v1481
      %1536 = vst.msk [vmem:[%s224 + $0x20] sm:$0xff] %vm478, %v1486
      %1537 = vst.msk [vmem:[%s224 + $0x28] sm:$0xff] %vm478, %v1489
      %1538 = vst.msk [vmem:[%s224 + $0x30] sm:$0xff] %vm478, %v1494
      %1539 = vst.msk [vmem:[%s224 + $0x38] sm:$0xff] %vm478, %v1497
      %1540 = vst.msk [vmem:[%s224 + $0x40] sm:$0xff] %vm478, %v1502
      %1541 = vst.msk [vmem:[%s224 + $0x48] sm:$0xff] %vm478, %v1505
      %1542 = vst.msk [vmem:[%s224 + $0x50] sm:$0xff] %vm478, %v1510
      %1543 = vst.msk [vmem:[%s224 + $0x58] sm:$0xff] %vm478, %v1513
      %1544 = vst.msk [vmem:[%s224 + $0x60] sm:$0xff] %vm478, %v1518
      %1545 = vst.msk [vmem:[%s224 + $0x68] sm:$0xff] %vm478, %v1521
      %1546 = vst.msk [vmem:[%s224 + $0x70] sm:$0xff] %vm478, %v1526
      %1547 = vst.msk [vmem:[%s224 + $0x78] sm:$0xff] %vm478, %v1529
      %p1548 = scmp.lt.s32.totalorder %s16, 1
      %s1549 = scalar_select %p1548, %s16, 1
      %s1550 = smul.addr %s1549, 16
      %s1551 = smul.addr %s1550, 8
      %s1552 = scalar_lea.vmem %s5, %s1551
      // Predicated region
      $region48: #{tpu_custom_call.1} parent=39 // pred_check
        %p1553 = pneg %p144
      $region49: #{tpu_custom_call.1} parent=39 // pred_check_branch
        %1555 = sbr.rel (%p1553) target = $region51
      $region50: #{tpu_custom_call.1} parent=39 // pred_region
        _
      $region51: #{tpu_custom_call.1} parent=39 // pred_fallthru
        _
    $region40: #{tpu_custom_call.1} parent=5 // pred_fallthru
      _
    %p1556 = scmp.le.s32.totalorder 2, %s11
    // Predicated region
    $region52: #{tpu_custom_call.1} parent=5 // pred_check
      %p1557 = pneg %p1556
    $region53: #{tpu_custom_call.1} parent=5 // pred_check_branch
      %1559 = sbr.rel (%p1557) target = $region55
    $region54: #{tpu_custom_call.1} parent=5 // pred_region
      %s1560 = ssub.s32 %s11, 2
      // Predicated region
      $region56: #{tpu_custom_call.1} parent=54 // pred_check
        %p1561 = pneg %p150
      $region57: #{tpu_custom_call.1} parent=54 // pred_check_branch
        %1563 = sbr.rel (%p1561) target = $region59
      $region58: #{tpu_custom_call.1} parent=54 // pred_region
        %p1564 = scmp.lt.s32.totalorder %s17, 1
        %s1565 = scalar_select %p1564, %s17, 1
        %s1566 = smul.addr %s1565, 16
        %s1567 = smul.addr %s1566, 8
        %s1568 = scalar_lea.vmem %s5, %s1567
      $region59: #{tpu_custom_call.1} parent=54 // pred_fallthru
        _
    $region55: #{tpu_custom_call.1} parent=5 // pred_fallthru
      _
  $region6: #{tpu_custom_call.1} parent=0 // loop_footer
    %s15 = sadd.s32 1, %s11
  $region7: #{tpu_custom_call.1} parent=0 // loop_footer_branch
    %10 = sbr.rel target = $region3
  $region8: #{tpu_custom_call.1} parent=0 // loop_exit
    _

</llo_original>
